<compile_context>
chip_gen: v7x
topology: tpu7x:2x2x1
jax: 0.10.0
libtpu: 0.0.40
codegen_flags: <defaults>
</compile_context>

<pallas_src>
import jax
import jax.numpy as jnp
from jax import lax
from jax.experimental import pallas as pl
from jax.experimental.pallas import tpu as pltpu


def _round_up(n, m):
    return ((n + m - 1) // m) * m


# ----------------------------- in-kernel helpers -----------------------------

def _dropout(x, rate, seed_scalar, salt):
    """Inverted dropout (matches F.dropout train-mode) on the TPU PRNG.

    Keep decision = integer compare on raw uint32 bits (no convert/multiply);
    per-layer streams decorrelated with a multiplicative seed mix.
    """
    threshold = min(int(round(rate * 4294967296.0)), 4294967295)
    pltpu.prng_seed(seed_scalar * jnp.int32(668265261) + jnp.int32(salt))
    bits = pltpu.bitcast(pltpu.prng_random_bits(x.shape), jnp.uint32)
    keep = bits >= jnp.uint32(threshold)
    return jnp.where(keep, x * (1.0 / (1.0 - rate)), 0.0)


# -------------------- conv + ReLU + 2x2 maxpool + dropout --------------------
# One MXU matmul with the 4 pool positions folded into M, then 3 aligned max
# slices (the pool), then bias+ReLU once, then optional dropout.

def _make_conv_block_kernel(mp, rate, training, salt, transposed):
    def kernel(seed_ref, p_ref, w_ref, b_ref, o_ref):
        if transposed:
            # p_ref: (K, 4*mp)  w_ref: (C, K)  -> y: (C, 4*mp); lanes = q*mp+m
            y = jnp.dot(w_ref[...], p_ref[...],
                        preferred_element_type=jnp.float32)
            acc = y[:, 0:mp]
            for q in range(1, 4):                       # 2x2 max-pool
                acc = jnp.maximum(acc, y[:, q * mp:(q + 1) * mp])
        else:
            # p_ref: (4*mp, K)  w_ref: (K, C)  -> y: (4*mp, C); rows = q*mp+m
            y = jnp.dot(p_ref[...], w_ref[...],
                        preferred_element_type=jnp.float32)
            acc = y[0:mp, :]
            for q in range(1, 4):
                acc = jnp.maximum(acc, y[q * mp:(q + 1) * mp, :])
        # bias + ReLU hoisted after the max (exact: monotone, shared bias)
        acc = jnp.maximum(acc + b_ref[...], 0.0)
        if training:
            acc = _dropout(acc, rate, seed_ref[0, 0], salt)
        o_ref[...] = acc
    return kernel


def conv_block(patches, w, b, seed, *, mp, rate, training, salt, transposed):
    out_shape = (w.shape[0], mp) if transposed else (mp, w.shape[1])
    kernel = _make_conv_block_kernel(mp, rate, training, salt, transposed)
    vmem = pl.BlockSpec(memory_space=pltpu.MemorySpace.VMEM)
    smem = pl.BlockSpec(memory_space=pltpu.MemorySpace.SMEM)
    return pl.pallas_call(
        kernel,
        out_shape=jax.ShapeDtypeStruct(out_shape, jnp.float32),
        in_specs=[smem, vmem, vmem, vmem],
        out_specs=vmem,
    )(seed, patches, w, b)


# -------------------- fc1 + ReLU + dropout + fc2 + log_softmax ---------------

def _make_mlp_kernel(rate, training):
    def kernel(seed_ref, x_ref, w1_ref, b1_ref, w2_ref, b2_ref, o_ref):
        h = jnp.dot(x_ref[...], w1_ref[...],
                    preferred_element_type=jnp.float32) + b1_ref[...]
        h = jnp.maximum(h, 0.0)
        if training:
            h = _dropout(h, rate, seed_ref[0, 0], 1664525)
        logits = jnp.dot(h, w2_ref[...],
                         preferred_element_type=jnp.float32) + b2_ref[...]
        m = jnp.max(logits, axis=-1, keepdims=True)
        s = logits - m
        lse = jnp.log(jnp.sum(jnp.exp(s), axis=-1, keepdims=True))
        o_ref[...] = s - lse                     # log_softmax over dim=1
    return kernel


def mlp_logsoftmax(x, w1, b1, w2, b2, seed, *, rate, training):
    B = x.shape[0]
    N = w2.shape[1]
    kernel = _make_mlp_kernel(rate, training)
    vmem = pl.BlockSpec(memory_space=pltpu.MemorySpace.VMEM)
    smem = pl.BlockSpec(memory_space=pltpu.MemorySpace.SMEM)
    return pl.pallas_call(
        kernel,
        out_shape=jax.ShapeDtypeStruct((B, N), jnp.float32),
        in_specs=[smem, vmem, vmem, vmem, vmem, vmem],
        out_specs=vmem,
    )(seed, x, w1, b1, w2, b2)


# ------------------------------- plain-JAX glue -------------------------------

def _im2col_pool_patches(x_nhwc):
    """(B,H,W,C) -> (4, B*Hp*Wp, 9*C) patches for 3x3 SAME conv + 2x2 maxpool.

    q = 2*i + j indexes the conv-output position inside each pool window;
    m = b*Hp*Wp + hp*Wp + wp;  K index order = (dh, dw, cin) to match the
    packed weights from prepare_params.
    """
    B, H, W, C = x_nhwc.shape
    Hp, Wp = H // 2, W // 2
    xp = jnp.pad(x_nhwc, ((0, 0), (1, 1), (1, 1), (0, 0)))
    cols = [xp[:, dh:dh + H, dw:dw + W, :] for dh in range(3) for dw in range(3)]
    pat = jnp.concatenate(cols, axis=-1)             # (B, H, W, 9C)
    pat = pat.reshape(B, Hp, 2, Wp, 2, 9 * C)
    pat = pat.transpose(2, 4, 0, 1, 3, 5)            # (i, j, B, Hp, Wp, 9C)
    return pat.reshape(4, B * Hp * Wp, 9 * C)


def prepare_params(params):
    """One-time weight repacking (kept OFF the per-forward path)."""
    c1w, c1b, c2w, c2b, f1w, f1b, f2w, f2b = params
    C1, Cin = c1w.shape[0], c1w.shape[1]
    C2 = c2w.shape[0]
    hidden = f1w.shape[0]
    P = f1w.shape[1] // C2                            # pooled spatial positions
    # conv1 as (C1, K1) for the transposed block-1 matmul, K = (dh, dw, cin)
    w1t = c1w.transpose(0, 2, 3, 1).reshape(C1, 9 * Cin)
    b1 = c1b.reshape(C1, 1)
    # conv2 as (K2, C2) for the standard block-2 matmul
    w2m = c2w.transpose(0, 2, 3, 1).reshape(C2, 9 * C1).T
    b2 = c2b.reshape(1, C2)
    # fc1: transpose AND permute columns from torch flatten order (c*P + p)
    # to the kernel's flatten order (p*C2 + c) so no per-forward transpose of
    # the feature map is needed.
    wf1 = f1w.reshape(hidden, C2, P).transpose(2, 1, 0).reshape(P * C2, hidden)
    bf1 = f1b.reshape(1, hidden)
    wf2 = f2w.T
    bf2 = f2b.reshape(1, -1)
    return (w1t, b1, w2m, b2, wf1, bf1, wf2, bf2)


def mc_dropout_cnn_forward(x_nchw, packed, *, dropout_rate=0.5, training=False,
                           seed=0):
    (w1t, b1, w2m, b2, wf1, bf1, wf2, bf2) = packed
    seed_arr = jnp.array([[seed]], dtype=jnp.int32)

    x = jnp.transpose(x_nchw, (0, 2, 3, 1))           # NCHW -> NHWC
    B, H, W, Cin = x.shape
    Hp, Wp = H // 2, W // 2
    C1 = w1t.shape[0]

    # ---- block 1: conv1 + ReLU + pool + dropout (transposed, lane-dense) ----
    m1 = B * Hp * Wp
    mp1 = _round_up(m1, 128)                          # lane-aligned pool slices
    p1 = _im2col_pool_patches(x)                      # (4, m1, 9*Cin)
    p1 = jnp.pad(p1, ((0, 0), (0, mp1 - m1), (0, 0)))
    p1 = p1.transpose(2, 0, 1).reshape(9 * Cin, 4 * mp1)   # (K1, 4*mp1)
    y1 = conv_block(p1, w1t, b1, seed_arr, mp=mp1, rate=dropout_rate,
                    training=training, salt=1013904223, transposed=True)
    y1 = y1[:, :m1].reshape(C1, B, Hp, Wp).transpose(1, 2, 3, 0)  # (B,Hp,Wp,C1)

    # ---- block 2: conv2 + ReLU + pool + dropout (K2=288 is lane-friendly) ---
    Hq, Wq = Hp // 2, Wp // 2
    m2 = B * Hq * Wq
    mp2 = _round_up(m2, 8)                            # sublane-aligned slices
    p2 = _im2col_pool_patches(y1)                     # (4, m2, 9*C1)
    p2 = jnp.pad(p2, ((0, 0), (0, mp2 - m2), (0, 0)))
    p2 = p2.reshape(4 * mp2, 9 * C1)                  # (4*mp2, K2)
    y2 = conv_block(p2, w2m, b2, seed_arr, mp=mp2, rate=dropout_rate,
                    training=training, salt=1181783497, transposed=False)

    # ---- head: fc1 + ReLU + dropout + fc2 + log_softmax ---------------------
    # wf1 columns were permuted at setup -> this flatten is a pure reshape.
    flat = y2[:m2].reshape(B, -1)
    return mlp_logsoftmax(flat, wf1, bf1, wf2, bf2, seed_arr,
                          rate=dropout_rate, training=training)


# ---------------------------- params & reference ------------------------------

def init_params(key, input_channels=1, hidden_size=64, num_classes=10):
    ks = jax.random.split(key, 8)
    feature_size = 7 * 7 * 64
    c1w = 0.10 * jax.random.normal(ks[0], (32, input_channels, 3, 3), jnp.float32)
    c1b = 0.10 * jax.random.normal(ks[1], (32,), jnp.float32)
    c2w = 0.05 * jax.random.normal(ks[2], (64, 32, 3, 3), jnp.float32)
    c2b = 0.05 * jax.random.normal(ks[3], (64,), jnp.float32)
    f1w = 0.02 * jax.random.normal(ks[4], (hidden_size, feature_size), jnp.float32)
    f1b = 0.02 * jax.random.normal(ks[5], (hidden_size,), jnp.float32)
    f2w = 0.10 * jax.random.normal(ks[6], (num_classes, hidden_size), jnp.float32)
    f2b = 0.10 * jax.random.normal(ks[7], (num_classes,), jnp.float32)
    return (c1w, c1b, c2w, c2b, f1w, f1b, f2w, f2b)


def reference_forward_eval(x_nchw, params):
    """Pure-JAX reference of the eval-mode (dropout=identity) forward pass."""
    (c1w, c1b, c2w, c2b, f1w, f1b, f2w, f2b) = params

    def conv(x, w, b):
        y = lax.conv_general_dilated(x, w, (1, 1), "SAME",
                                     dimension_numbers=("NCHW", "OIHW", "NCHW"))
        return jnp.maximum(y + b[None, :, None, None], 0.0)

    def pool(y):
        B, C, H, W = y.shape
        return y.reshape(B, C, H // 2, 2, W // 2, 2).max(axis=(3, 5))

    y = pool(conv(x_nchw, c1w, c1b))
    y = pool(conv(y, c2w, c2b))
    flat = y.reshape(y.shape[0], -1)
    h = jnp.maximum(flat @ f1w.T + f1b, 0.0)
    logits = h @ f2w.T + f2b
    return jax.nn.log_softmax(logits, axis=1)


# ------------------------------------ main ------------------------------------

if __name__ == "__main__":
    key = jax.random.PRNGKey(0)
    pkey, xkey = jax.random.split(key)
    params = init_params(pkey)
    packed = prepare_params(params)         # one-time repack, not per-forward
    # 28x28 spatial is implied by feature_size = 7*7*64 in the module.
    x = jax.random.normal(xkey, (2, 1, 28, 28), jnp.float32)

    @jax.jit
    def fwd(x_in, packed_params):
        # Eval-mode forward (module.eval(); dropout = identity).
        # training=True enables in-kernel MC dropout; for
        # predict_with_uncertainty fold the T samples into the batch dim.
        return mc_dropout_cnn_forward(x_in, packed_params, dropout_rate=0.5,
                                      training=False, seed=0)

    out = jax.block_until_ready(fwd(x, packed))

    ref = reference_forward_eval(x, params)
    assert out.shape == (2, 10), out.shape
    assert jnp.allclose(out, ref, atol=1e-4, rtol=1e-4), \
        float(jnp.max(jnp.abs(out - ref)))
    assert jnp.allclose(jnp.exp(out).sum(axis=1), 1.0, atol=1e-4)

    print("KERNEL_OK")
</pallas_src>

<mosaic_0001>
module attributes {stable_mosaic.version = 11 : i64} {
  func.func @kernel(%arg0: memref<1x1xi32, #tpu.memory_space<smem>>, %arg1: memref<9x2048xf32, #tpu.memory_space<vmem>>, %arg2: memref<32x9xf32, #tpu.memory_space<vmem>>, %arg3: memref<32x1xf32, #tpu.memory_space<vmem>>, %arg4: memref<32x512xf32, #tpu.memory_space<vmem>>) attributes {dimension_semantics = [], scalar_prefetch = 0 : i64, scratch_operands = 0 : i64, tpu.core_type = #tpu.core_type<tc>} {
    %c0 = arith.constant 0 : index
    %c0_0 = arith.constant 0 : index
    %0 = vector.load %arg2[%c0, %c0_0] : memref<32x9xf32, #tpu.memory_space<vmem>>, vector<32x9xf32>
    %c0_1 = arith.constant 0 : index
    %c0_2 = arith.constant 0 : index
    %1 = vector.load %arg1[%c0_1, %c0_2] : memref<9x2048xf32, #tpu.memory_space<vmem>>, vector<9x2048xf32>
    %cst = arith.constant dense<0.000000e+00> : vector<32x2048xf32>
    %2 = tpu.matmul %0, %1, %cst {dimension_numbers = #tpu.dot_dimension_numbers<[1], [0], [0], [1], [0, 0, 1, 1], [], []>} : vector<32x9xf32>, vector<9x2048xf32>, vector<32x2048xf32> -> vector<32x2048xf32>
    %3 = vector.extract_strided_slice %2 {offsets = [0, 0], sizes = [32, 512], strides = [1, 1]} : vector<32x2048xf32> to vector<32x512xf32>
    %4 = vector.extract_strided_slice %2 {offsets = [0, 512], sizes = [32, 512], strides = [1, 1]} : vector<32x2048xf32> to vector<32x512xf32>
    %5 = arith.maximumf %3, %4 : vector<32x512xf32>
    %6 = vector.extract_strided_slice %2 {offsets = [0, 1024], sizes = [32, 512], strides = [1, 1]} : vector<32x2048xf32> to vector<32x512xf32>
    %7 = arith.maximumf %5, %6 : vector<32x512xf32>
    %8 = vector.extract_strided_slice %2 {offsets = [0, 1536], sizes = [32, 512], strides = [1, 1]} : vector<32x2048xf32> to vector<32x512xf32>
    %9 = arith.maximumf %7, %8 : vector<32x512xf32>
    %c0_3 = arith.constant 0 : index
    %c0_4 = arith.constant 0 : index
    %10 = vector.load %arg3[%c0_3, %c0_4] : memref<32x1xf32, #tpu.memory_space<vmem>>, vector<32x1xf32>
    %11 = vector.broadcast %10 : vector<32x1xf32> to vector<32x512xf32>
    %12 = arith.addf %9, %11 : vector<32x512xf32>
    %cst_5 = arith.constant 0.000000e+00 : f32
    %13 = vector.broadcast %cst_5 : f32 to vector<32x512xf32>
    %14 = arith.maximumf %12, %13 : vector<32x512xf32>
    %c0_6 = arith.constant 0 : index
    %c0_7 = arith.constant 0 : index
    %15 = vector.load %arg4[%c0_6, %c0_7] : memref<32x512xf32, #tpu.memory_space<vmem>>, vector<32x512xf32>
    tpu.vector_store %arg4[%c0_6, %c0_7], %14 {strides = array<i32>} : memref<32x512xf32, #tpu.memory_space<vmem>>, vector<32x512xf32>,
    return
  }
}

module attributes {stable_mosaic.version = 11 : i64} {
  func.func @kernel(%arg0: memref<1x1xi32, #tpu.memory_space<smem>>, %arg1: memref<416x288xf32, #tpu.memory_space<vmem>>, %arg2: memref<288x64xf32, #tpu.memory_space<vmem>>, %arg3: memref<1x64xf32, #tpu.memory_space<vmem>>, %arg4: memref<104x64xf32, #tpu.memory_space<vmem>>) attributes {dimension_semantics = [], scalar_prefetch = 0 : i64, scratch_operands = 0 : i64, tpu.core_type = #tpu.core_type<tc>} {
    %c0 = arith.constant 0 : index
    %c0_0 = arith.constant 0 : index
    %0 = vector.load %arg1[%c0, %c0_0] : memref<416x288xf32, #tpu.memory_space<vmem>>, vector<416x288xf32>
    %c0_1 = arith.constant 0 : index
    %c0_2 = arith.constant 0 : index
    %1 = vector.load %arg2[%c0_1, %c0_2] : memref<288x64xf32, #tpu.memory_space<vmem>>, vector<288x64xf32>
    %cst = arith.constant dense<0.000000e+00> : vector<416x64xf32>
    %2 = tpu.matmul %0, %1, %cst {dimension_numbers = #tpu.dot_dimension_numbers<[1], [0], [0], [1], [0, 0, 1, 1], [], []>} : vector<416x288xf32>, vector<288x64xf32>, vector<416x64xf32> -> vector<416x64xf32>
    %3 = vector.extract_strided_slice %2 {offsets = [0, 0], sizes = [104, 64], strides = [1, 1]} : vector<416x64xf32> to vector<104x64xf32>
    %4 = vector.extract_strided_slice %2 {offsets = [104, 0], sizes = [104, 64], strides = [1, 1]} : vector<416x64xf32> to vector<104x64xf32>
    %5 = arith.maximumf %3, %4 : vector<104x64xf32>
    %6 = vector.extract_strided_slice %2 {offsets = [208, 0], sizes = [104, 64], strides = [1, 1]} : vector<416x64xf32> to vector<104x64xf32>
    %7 = arith.maximumf %5, %6 : vector<104x64xf32>
    %8 = vector.extract_strided_slice %2 {offsets = [312, 0], sizes = [104, 64], strides = [1, 1]} : vector<416x64xf32> to vector<104x64xf32>
    %9 = arith.maximumf %7, %8 : vector<104x64xf32>
    %c0_3 = arith.constant 0 : index
    %c0_4 = arith.constant 0 : index
    %10 = vector.load %arg3[%c0_3, %c0_4] : memref<1x64xf32, #tpu.memory_space<vmem>>, vector<1x64xf32>
    %11 = vector.broadcast %10 : vector<1x64xf32> to vector<104x64xf32>
    %12 = arith.addf %9, %11 : vector<104x64xf32>
    %cst_5 = arith.constant 0.000000e+00 : f32
    %13 = vector.broadcast %cst_5 : f32 to vector<104x64xf32>
    %14 = arith.maximumf %12, %13 : vector<104x64xf32>
    %c0_6 = arith.constant 0 : index
    %c0_7 = arith.constant 0 : index
    %15 = vector.load %arg4[%c0_6, %c0_7] : memref<104x64xf32, #tpu.memory_space<vmem>>, vector<104x64xf32>
    tpu.vector_store %arg4[%c0_6, %c0_7], %14 {strides = array<i32>} : memref<104x64xf32, #tpu.memory_space<vmem>>, vector<104x64xf32>,
    return
  }
}

module attributes {stable_mosaic.version = 11 : i64} {
  func.func @kernel(%arg0: memref<1x1xi32, #tpu.memory_space<smem>>, %arg1: memref<2x3136xf32, #tpu.memory_space<vmem>>, %arg2: memref<3136x64xf32, #tpu.memory_space<vmem>>, %arg3: memref<1x64xf32, #tpu.memory_space<vmem>>, %arg4: memref<64x10xf32, #tpu.memory_space<vmem>>, %arg5: memref<1x10xf32, #tpu.memory_space<vmem>>, %arg6: memref<2x10xf32, #tpu.memory_space<vmem>>) attributes {dimension_semantics = [], scalar_prefetch = 0 : i64, scratch_operands = 0 : i64, tpu.core_type = #tpu.core_type<tc>} {
    %c0 = arith.constant 0 : index
    %c0_0 = arith.constant 0 : index
    %0 = vector.load %arg1[%c0, %c0_0] : memref<2x3136xf32, #tpu.memory_space<vmem>>, vector<2x3136xf32>
    %c0_1 = arith.constant 0 : index
    %c0_2 = arith.constant 0 : index
    %1 = vector.load %arg2[%c0_1, %c0_2] : memref<3136x64xf32, #tpu.memory_space<vmem>>, vector<3136x64xf32>
    %cst = arith.constant dense<0.000000e+00> : vector<2x64xf32>
    %2 = tpu.matmul %0, %1, %cst {dimension_numbers = #tpu.dot_dimension_numbers<[1], [0], [0], [1], [0, 0, 1, 1], [], []>} : vector<2x3136xf32>, vector<3136x64xf32>, vector<2x64xf32> -> vector<2x64xf32>
    %c0_3 = arith.constant 0 : index
    %c0_4 = arith.constant 0 : index
    %3 = vector.load %arg3[%c0_3, %c0_4] : memref<1x64xf32, #tpu.memory_space<vmem>>, vector<1x64xf32>
    %4 = vector.broadcast %3 : vector<1x64xf32> to vector<2x64xf32>
    %5 = arith.addf %2, %4 : vector<2x64xf32>
    %cst_5 = arith.constant 0.000000e+00 : f32
    %6 = vector.broadcast %cst_5 : f32 to vector<2x64xf32>
    %7 = arith.maximumf %5, %6 : vector<2x64xf32>
    %c0_6 = arith.constant 0 : index
    %c0_7 = arith.constant 0 : index
    %8 = vector.load %arg4[%c0_6, %c0_7] : memref<64x10xf32, #tpu.memory_space<vmem>>, vector<64x10xf32>
    %cst_8 = arith.constant dense<0.000000e+00> : vector<2x10xf32>
    %9 = tpu.matmul %7, %8, %cst_8 {dimension_numbers = #tpu.dot_dimension_numbers<[1], [0], [0], [1], [0, 0, 1, 1], [], []>} : vector<2x64xf32>, vector<64x10xf32>, vector<2x10xf32> -> vector<2x10xf32>
    %c0_9 = arith.constant 0 : index
    %c0_10 = arith.constant 0 : index
    %10 = vector.load %arg5[%c0_9, %c0_10] : memref<1x10xf32, #tpu.memory_space<vmem>>, vector<1x10xf32>
    %11 = vector.broadcast %10 : vector<1x10xf32> to vector<2x10xf32>
    %12 = arith.addf %9, %11 : vector<2x10xf32>
    %cst_11 = arith.constant dense<0xFF800000> : vector<2xf32>
    %13 = vector.multi_reduction <maximumf>, %12, %cst_11 [1] : vector<2x10xf32> to vector<2xf32>
    %14 = vector.shape_cast %13 : vector<2xf32> to vector<2x1xf32>
    %15 = vector.broadcast %14 : vector<2x1xf32> to vector<2x10xf32>
    %16 = arith.subf %12, %15 : vector<2x10xf32>
    %17 = math.exp %16 : vector<2x10xf32>
    %cst_12 = arith.constant dense<0.000000e+00> : vector<2xf32>
    %18 = vector.multi_reduction <add>, %17, %cst_12 [1] : vector<2x10xf32> to vector<2xf32>
    %19 = vector.shape_cast %18 : vector<2xf32> to vector<2x1xf32>
    %20 = math.log %19 : vector<2x1xf32>
    %21 = vector.broadcast %20 : vector<2x1xf32> to vector<2x10xf32>
    %22 = arith.subf %16, %21 : vector<2x10xf32>
    %c0_13 = arith.constant 0 : index
    %c0_14 = arith.constant 0 : index
    %23 = vector.load %arg6[%c0_13, %c0_14] : memref<2x10xf32, #tpu.memory_space<vmem>>, vector<2x10xf32>
    tpu.vector_store %arg6[%c0_13, %c0_14], %22 {strides = array<i32>} : memref<2x10xf32, #tpu.memory_space<vmem>>, vector<2x10xf32>,
    return
  }
}

</mosaic_0001>

<llo_original>
// kernel: fwd.3
$region0: #{fwd.3}
  #allocation0 [shape = 'u32[]', space=smem, size = 0x4, offset = 0x4, fixed_abs, tag = 'smem constant byte address 0x4 - core index']
  #allocation1 [shape = 'u32[144,128]{1,0:T(1,128)}', space=vmem, size = 0x12000, scoped, tag = 'internal scratch']
  #allocation2 [shape = 's32[1,1]{1,0:T(1,128)S(6)}', space=smem, size = 0x200, scoped, tag = 'scoped memory for fwd.3']
  %s0 = inlined_call_operand.<no memory space> [shape: s32[1,1], index: 0, kind: input, shape index: {}]
  %s1 = inlined_call_operand.vmem [shape: f32[9,2048], index: 1, kind: input, shape index: {}]
  %s2 = inlined_call_operand.vmem [shape: f32[32,9], index: 2, kind: input, shape index: {}]
  %s3 = inlined_call_operand.vmem [shape: f32[32,1], index: 3, kind: input, shape index: {}]
  %s4 = inlined_call_operand.vmem [shape: f32[32,512], index: 4, kind: output, shape index: {}]
  %s5 = sld [smem:[#allocation0]]
  $region26: #{fwd.3} parent=0
    _
  %s7 = ssub.s32 1, %s5
  %s8 = scalar_select 0, %s7, %s5
  %9 = sst [smem:[#allocation2]] %s0
  // Predicated region
  $region2: #{fwd.3} parent=0 // pred_check
    _
  $region3: #{fwd.3} parent=0 // pred_check_branch
    %11 = sbr.rel (0) target = $region5
  $region4: #{fwd.3} parent=0 // pred_region
    _
  $region5: #{fwd.3} parent=0 // pred_fallthru
    _
  // Predicated region
  $region6: #{fwd.3} parent=0 // pred_check
    _
  $region7: #{fwd.3} parent=0 // pred_check_branch
    %13 = sbr.rel (0) target = $region9
  $region8: #{fwd.3} parent=0 // pred_region
    _
  $region9: #{fwd.3} parent=0 // pred_fallthru
    _
  // Predicated region
  $region10: #{fwd.3} parent=0 // pred_check
    _
  $region11: #{fwd.3} parent=0 // pred_check_branch
    %15 = sbr.rel (0) target = $region13
  $region12: #{fwd.3} parent=0 // pred_region
    _
  $region13: #{fwd.3} parent=0 // pred_fallthru
    _
  // Predicated region
  $region14: #{fwd.3} parent=0 // pred_check
    _
  $region15: #{fwd.3} parent=0 // pred_check_branch
    %17 = sbr.rel (0) target = $region17
  $region16: #{fwd.3} parent=0 // pred_region
    _
  $region17: #{fwd.3} parent=0 // pred_fallthru
    _
  %v18 = vld [vmem:[%s2] sm:$0xff]
  %v19 = vld [vmem:[%s2 + $0x8] sm:$0xff]
  %v20 = vld [vmem:[%s2 + $0x10] sm:$0xff]
  %v21 = vld [vmem:[%s2 + $0x18] sm:$0xff]
  %v22 = vld [vmem:[%s1] sm:$0xff]
  %v23 = vld [vmem:[%s1 + $0x8] sm:$0xff]
  %v24 = vld [vmem:[%s1 + $0x10] sm:$0xff]
  %v25 = vld [vmem:[%s1 + $0x18] sm:$0xff]
  %v26 = vld [vmem:[%s1 + $0x20] sm:$0xff]
  %v27 = vld [vmem:[%s1 + $0x28] sm:$0xff]
  %v28 = vld [vmem:[%s1 + $0x30] sm:$0xff]
  %v29 = vld [vmem:[%s1 + $0x38] sm:$0xff]
  %v30 = vld [vmem:[%s1 + $0x40] sm:$0xff]
  %v31 = vld [vmem:[%s1 + $0x48] sm:$0xff]
  %v32 = vld [vmem:[%s1 + $0x50] sm:$0xff]
  %v33 = vld [vmem:[%s1 + $0x58] sm:$0xff]
  %v34 = vld [vmem:[%s1 + $0x60] sm:$0xff]
  %v35 = vld [vmem:[%s1 + $0x68] sm:$0xff]
  %v36 = vld [vmem:[%s1 + $0x70] sm:$0xff]
  %v37 = vld [vmem:[%s1 + $0x78] sm:$0xff]
  %v38 = vld [vmem:[%s1 + $0x80] sm:$0x1]
  %v39 = vld [vmem:[%s1 + $0x88] sm:$0x1]
  %v40 = vld [vmem:[%s1 + $0x90] sm:$0x1]
  %v41 = vld [vmem:[%s1 + $0x98] sm:$0x1]
  %v42 = vld [vmem:[%s1 + $0xa0] sm:$0x1]
  %v43 = vld [vmem:[%s1 + $0xa8] sm:$0x1]
  %v44 = vld [vmem:[%s1 + $0xb0] sm:$0x1]
  %v45 = vld [vmem:[%s1 + $0xb8] sm:$0x1]
  %v46 = vld [vmem:[%s1 + $0xc0] sm:$0x1]
  %v47 = vld [vmem:[%s1 + $0xc8] sm:$0x1]
  %v48 = vld [vmem:[%s1 + $0xd0] sm:$0x1]
  %v49 = vld [vmem:[%s1 + $0xd8] sm:$0x1]
  %v50 = vld [vmem:[%s1 + $0xe0] sm:$0x1]
  %v51 = vld [vmem:[%s1 + $0xe8] sm:$0x1]
  %v52 = vld [vmem:[%s1 + $0xf0] sm:$0x1]
  %v53 = vld [vmem:[%s1 + $0xf8] sm:$0x1]
  %vm54 = vcmask 72704
  %v56 = vsel %vm54, %v18, 0
  %v59 = vsel %vm54, %v19, 0
  %v62 = vsel %vm54, %v20, 0
  %v65 = vsel %vm54, %v21, 0
  %vm67 = vcmask 1040384
  %v69 = vsel %vm67, %v38, 0
  %v72 = vsel %vm67, %v39, 0
  %v75 = vsel %vm67, %v40, 0
  %v78 = vsel %vm67, %v41, 0
  %v81 = vsel %vm67, %v42, 0
  %v84 = vsel %vm67, %v43, 0
  %v87 = vsel %vm67, %v44, 0
  %v90 = vsel %vm67, %v45, 0
  %v93 = vsel %vm67, %v46, 0
  %v96 = vsel %vm67, %v47, 0
  %v99 = vsel %vm67, %v48, 0
  %v102 = vsel %vm67, %v49, 0
  %v105 = vsel %vm67, %v50, 0
  %v108 = vsel %vm67, %v51, 0
  %v111 = vsel %vm67, %v52, 0
  %v114 = vsel %vm67, %v53, 0
  %116 = vmatprep.subr.mxu0 %v23
  %117 = vmatpush1.msra.mxu0 %v22
  %118 = vmatprep.subr.mxu0 %v72
  %119 = vmatpush1.msra.mxu0 %v69
  %120 = vmatprep.subr.mxu0 0.0
  %121 = vmatpush1.msra.mxu0 0.0
  %122 = vmatprep.subr.mxu0 0.0
  %123 = vmatpush1.msra.mxu0 0.0
  %124 = vmatprep.subr.mxu0 0.0
  %125 = vmatpush1.msra.mxu0 0.0
  %126 = vmatprep.subr.mxu0 0.0
  %127 = vmatpush1.msra.mxu0 0.0
  %128 = vmatprep.subr.mxu0 0.0
  %129 = vmatpush1.msra.mxu0 0.0
  %130 = vmatprep.subr.mxu0 0.0
  %131 = vmatpush1.msra.mxu0 0.0
  %132 = vmatprep.subr.mxu0 0.0
  %133 = vmatpush1.msra.mxu0 0.0
  %134 = vmatprep.subr.mxu0 0.0
  %135 = vmatpush1.msra.mxu0 0.0
  %136 = vmatprep.subr.mxu0 0.0
  %137 = vmatpush1.msra.mxu0 0.0
  %138 = vmatprep.subr.mxu0 0.0
  %139 = vmatpush1.msra.mxu0 0.0
  %140 = vmatprep.subr.mxu0 0.0
  %141 = vmatpush1.msra.mxu0 0.0
  %142 = vmatprep.subr.mxu0 0.0
  %143 = vmatpush1.msra.mxu0 0.0
  %144 = vmatprep.subr.mxu0 0.0
  %145 = vmatpush1.msra.mxu0 0.0
  %146 = vmatprep.subr.mxu0 0.0
  %147 = vmatpush1.msra.mxu0 0.0
  %148 = vmatprep.subr.mxu0 0.0
  %149 = vmatpush1.msra.mxu0 0.0
  %150 = vmatprep.subr.mxu0 0.0
  %151 = vmatpush1.msra.mxu0 0.0
  %152 = vmatprep.subr.mxu0 0.0
  %153 = vmatpush1.msra.mxu0 0.0
  %154 = vmatprep.subr.mxu0 0.0
  %155 = vmatpush1.msra.mxu0 0.0
  %156 = vmatprep.subr.mxu0 0.0
  %157 = vmatpush1.msra.mxu0 0.0
  %158 = vmatprep.subr.mxu0 0.0
  %159 = vmatpush1.msra.mxu0 0.0
  %160 = vmatprep.subr.mxu0 0.0
  %161 = vmatpush1.msra.mxu0 0.0
  %162 = vmatprep.subr.mxu0 0.0
  %163 = vmatpush1.msra.mxu0 0.0
  %164 = vmatprep.subr.mxu0 0.0
  %165 = vmatpush1.msra.mxu0 0.0
  %166 = vmatprep.subr.mxu0 0.0
  %167 = vmatpush1.msra.mxu0 0.0
  %168 = vmatprep.subr.mxu0 0.0
  %169 = vmatpush1.msra.mxu0 0.0
  %170 = vmatprep.subr.mxu0 0.0
  %171 = vmatpush1.msra.mxu0 0.0
  %172 = vmatprep.subr.mxu0 0.0
  %173 = vmatpush1.msra.mxu0 0.0
  %174 = vmatprep.subr.mxu0 0.0
  %175 = vmatpush1.msra.mxu0 0.0
  %176 = vmatprep.subr.mxu0 0.0
  %177 = vmatpush1.msra.mxu0 0.0
  %178 = vmatprep.subr.mxu0 0.0
  %179 = vmatpush1.msra.mxu0 0.0
  %180 = vmatprep.mubr.f32.mxu0 0.0
  %181 = vmatmul.mubr.f32.gmra.mrb[0].mxu0 %v56
  %v182 = vpop.f32.mrb[0].mxu0
  %v183 = vadd.f32 0.0, %v182
  %v184 = vpop.f32.mrb[0].mxu0
  %v185 = vadd.f32 0.0, %v184
  %186 = vmatprep.mubr.f32.mxu0 0.0
  %187 = vmatmul.mubr.f32.gmra.mrb[0].mxu0 %v59
  %v188 = vpop.f32.mrb[0].mxu0
  %v189 = vadd.f32 0.0, %v188
  %v190 = vpop.f32.mrb[0].mxu0
  %v191 = vadd.f32 0.0, %v190
  %192 = vmatprep.mubr.f32.mxu0 0.0
  %193 = vmatmul.mubr.f32.gmra.mrb[0].mxu0 %v62
  %v194 = vpop.f32.mrb[0].mxu0
  %v195 = vadd.f32 0.0, %v194
  %v196 = vpop.f32.mrb[0].mxu0
  %v197 = vadd.f32 0.0, %v196
  %198 = vmatprep.mubr.f32.mxu0 0.0
  %199 = vmatmul.mubr.f32.gmra.mrb[0].mxu0 %v65
  %v200 = vpop.f32.mrb[0].mxu0
  %v201 = vadd.f32 0.0, %v200
  %v202 = vpop.f32.mrb[0].mxu0
  %v203 = vadd.f32 0.0, %v202
  %204 = vdwg.mxu0
  %205 = vmatprep.subr.mxu0 %v25
  %206 = vmatpush1.msra.mxu0 %v24
  %207 = vmatprep.subr.mxu0 %v78
  %208 = vmatpush1.msra.mxu0 %v75
  %209 = vmatprep.subr.mxu0 0.0
  %210 = vmatpush1.msra.mxu0 0.0
  %211 = vmatprep.subr.mxu0 0.0
  %212 = vmatpush1.msra.mxu0 0.0
  %213 = vmatprep.subr.mxu0 0.0
  %214 = vmatpush1.msra.mxu0 0.0
  %215 = vmatprep.subr.mxu0 0.0
  %216 = vmatpush1.msra.mxu0 0.0
  %217 = vmatprep.subr.mxu0 0.0
  %218 = vmatpush1.msra.mxu0 0.0
  %219 = vmatprep.subr.mxu0 0.0
  %220 = vmatpush1.msra.mxu0 0.0
  %221 = vmatprep.subr.mxu0 0.0
  %222 = vmatpush1.msra.mxu0 0.0
  %223 = vmatprep.subr.mxu0 0.0
  %224 = vmatpush1.msra.mxu0 0.0
  %225 = vmatprep.subr.mxu0 0.0
  %226 = vmatpush1.msra.mxu0 0.0
  %227 = vmatprep.subr.mxu0 0.0
  %228 = vmatpush1.msra.mxu0 0.0
  %229 = vmatprep.subr.mxu0 0.0
  %230 = vmatpush1.msra.mxu0 0.0
  %231 = vmatprep.subr.mxu0 0.0
  %232 = vmatpush1.msra.mxu0 0.0
  %233 = vmatprep.subr.mxu0 0.0
  %234 = vmatpush1.msra.mxu0 0.0
  %235 = vmatprep.subr.mxu0 0.0
  %236 = vmatpush1.msra.mxu0 0.0
  %237 = vmatprep.subr.mxu0 0.0
  %238 = vmatpush1.msra.mxu0 0.0
  %239 = vmatprep.subr.mxu0 0.0
  %240 = vmatpush1.msra.mxu0 0.0
  %241 = vmatprep.subr.mxu0 0.0
  %242 = vmatpush1.msra.mxu0 0.0
  %243 = vmatprep.subr.mxu0 0.0
  %244 = vmatpush1.msra.mxu0 0.0
  %245 = vmatprep.subr.mxu0 0.0
  %246 = vmatpush1.msra.mxu0 0.0
  %247 = vmatprep.subr.mxu0 0.0
  %248 = vmatpush1.msra.mxu0 0.0
  %249 = vmatprep.subr.mxu0 0.0
  %250 = vmatpush1.msra.mxu0 0.0
  %251 = vmatprep.subr.mxu0 0.0
  %252 = vmatpush1.msra.mxu0 0.0
  %253 = vmatprep.subr.mxu0 0.0
  %254 = vmatpush1.msra.mxu0 0.0
  %255 = vmatprep.subr.mxu0 0.0
  %256 = vmatpush1.msra.mxu0 0.0
  %257 = vmatprep.subr.mxu0 0.0
  %258 = vmatpush1.msra.mxu0 0.0
  %259 = vmatprep.subr.mxu0 0.0
  %260 = vmatpush1.msra.mxu0 0.0
  %261 = vmatprep.subr.mxu0 0.0
  %262 = vmatpush1.msra.mxu0 0.0
  %263 = vmatprep.subr.mxu0 0.0
  %264 = vmatpush1.msra.mxu0 0.0
  %265 = vmatprep.subr.mxu0 0.0
  %266 = vmatpush1.msra.mxu0 0.0
  %267 = vmatprep.subr.mxu0 0.0
  %268 = vmatpush1.msra.mxu0 0.0
  %269 = vmatprep.mubr.f32.mxu0 0.0
  %270 = vmatmul.mubr.f32.gmra.mrb[0].mxu0 %v56
  %v271 = vpop.f32.mrb[0].mxu0
  %v272 = vadd.f32 0.0, %v271
  %v273 = vpop.f32.mrb[0].mxu0
  %v274 = vadd.f32 0.0, %v273
  %275 = vmatprep.mubr.f32.mxu0 0.0
  %276 = vmatmul.mubr.f32.gmra.mrb[0].mxu0 %v59
  %v277 = vpop.f32.mrb[0].mxu0
  %v278 = vadd.f32 0.0, %v277
  %v279 = vpop.f32.mrb[0].mxu0
  %v280 = vadd.f32 0.0, %v279
  %281 = vmatprep.mubr.f32.mxu0 0.0
  %282 = vmatmul.mubr.f32.gmra.mrb[0].mxu0 %v62
  %v283 = vpop.f32.mrb[0].mxu0
  %v284 = vadd.f32 0.0, %v283
  %v285 = vpop.f32.mrb[0].mxu0
  %v286 = vadd.f32 0.0, %v285
  %287 = vmatprep.mubr.f32.mxu0 0.0
  %288 = vmatmul.mubr.f32.gmra.mrb[0].mxu0 %v65
  %v289 = vpop.f32.mrb[0].mxu0
  %v290 = vadd.f32 0.0, %v289
  %v291 = vpop.f32.mrb[0].mxu0
  %v292 = vadd.f32 0.0, %v291
  %293 = vdwg.mxu0
  %294 = vmatprep.subr.mxu0 %v27
  %295 = vmatpush1.msra.mxu0 %v26
  %296 = vmatprep.subr.mxu0 %v84
  %297 = vmatpush1.msra.mxu0 %v81
  %298 = vmatprep.subr.mxu0 0.0
  %299 = vmatpush1.msra.mxu0 0.0
  %300 = vmatprep.subr.mxu0 0.0
  %301 = vmatpush1.msra.mxu0 0.0
  %302 = vmatprep.subr.mxu0 0.0
  %303 = vmatpush1.msra.mxu0 0.0
  %304 = vmatprep.subr.mxu0 0.0
  %305 = vmatpush1.msra.mxu0 0.0
  %306 = vmatprep.subr.mxu0 0.0
  %307 = vmatpush1.msra.mxu0 0.0
  %308 = vmatprep.subr.mxu0 0.0
  %309 = vmatpush1.msra.mxu0 0.0
  %310 = vmatprep.subr.mxu0 0.0
  %311 = vmatpush1.msra.mxu0 0.0
  %312 = vmatprep.subr.mxu0 0.0
  %313 = vmatpush1.msra.mxu0 0.0
  %314 = vmatprep.subr.mxu0 0.0
  %315 = vmatpush1.msra.mxu0 0.0
  %316 = vmatprep.subr.mxu0 0.0
  %317 = vmatpush1.msra.mxu0 0.0
  %318 = vmatprep.subr.mxu0 0.0
  %319 = vmatpush1.msra.mxu0 0.0
  %320 = vmatprep.subr.mxu0 0.0
  %321 = vmatpush1.msra.mxu0 0.0
  %322 = vmatprep.subr.mxu0 0.0
  %323 = vmatpush1.msra.mxu0 0.0
  %324 = vmatprep.subr.mxu0 0.0
  %325 = vmatpush1.msra.mxu0 0.0
  %326 = vmatprep.subr.mxu0 0.0
  %327 = vmatpush1.msra.mxu0 0.0
  %328 = vmatprep.subr.mxu0 0.0
  %329 = vmatpush1.msra.mxu0 0.0
  %330 = vmatprep.subr.mxu0 0.0
  %331 = vmatpush1.msra.mxu0 0.0
  %332 = vmatprep.subr.mxu0 0.0
  %333 = vmatpush1.msra.mxu0 0.0
  %334 = vmatprep.subr.mxu0 0.0
  %335 = vmatpush1.msra.mxu0 0.0
  %336 = vmatprep.subr.mxu0 0.0
  %337 = vmatpush1.msra.mxu0 0.0
  %338 = vmatprep.subr.mxu0 0.0
  %339 = vmatpush1.msra.mxu0 0.0
  %340 = vmatprep.subr.mxu0 0.0
  %341 = vmatpush1.msra.mxu0 0.0
  %342 = vmatprep.subr.mxu0 0.0
  %343 = vmatpush1.msra.mxu0 0.0
  %344 = vmatprep.subr.mxu0 0.0
  %345 = vmatpush1.msra.mxu0 0.0
  %346 = vmatprep.subr.mxu0 0.0
  %347 = vmatpush1.msra.mxu0 0.0
  %348 = vmatprep.subr.mxu0 0.0
  %349 = vmatpush1.msra.mxu0 0.0
  %350 = vmatprep.subr.mxu0 0.0
  %351 = vmatpush1.msra.mxu0 0.0
  %352 = vmatprep.subr.mxu0 0.0
  %353 = vmatpush1.msra.mxu0 0.0
  %354 = vmatprep.subr.mxu0 0.0
  %355 = vmatpush1.msra.mxu0 0.0
  %356 = vmatprep.subr.mxu0 0.0
  %357 = vmatpush1.msra.mxu0 0.0
  %358 = vmatprep.mubr.f32.mxu0 0.0
  %359 = vmatmul.mubr.f32.gmra.mrb[0].mxu0 %v56
  %v360 = vpop.f32.mrb[0].mxu0
  %v361 = vadd.f32 0.0, %v360
  %v362 = vpop.f32.mrb[0].mxu0
  %v363 = vadd.f32 0.0, %v362
  %364 = vmatprep.mubr.f32.mxu0 0.0
  %365 = vmatmul.mubr.f32.gmra.mrb[0].mxu0 %v59
  %v366 = vpop.f32.mrb[0].mxu0
  %v367 = vadd.f32 0.0, %v366
  %v368 = vpop.f32.mrb[0].mxu0
  %v369 = vadd.f32 0.0, %v368
  %370 = vmatprep.mubr.f32.mxu0 0.0
  %371 = vmatmul.mubr.f32.gmra.mrb[0].mxu0 %v62
  %v372 = vpop.f32.mrb[0].mxu0
  %v373 = vadd.f32 0.0, %v372
  %v374 = vpop.f32.mrb[0].mxu0
  %v375 = vadd.f32 0.0, %v374
  %376 = vmatprep.mubr.f32.mxu0 0.0
  %377 = vmatmul.mubr.f32.gmra.mrb[0].mxu0 %v65
  %v378 = vpop.f32.mrb[0].mxu0
  %v379 = vadd.f32 0.0, %v378
  %v380 = vpop.f32.mrb[0].mxu0
  %v381 = vadd.f32 0.0, %v380
  %382 = vdwg.mxu0
  %383 = vmatprep.subr.mxu0 %v29
  %384 = vmatpush1.msra.mxu0 %v28
  %385 = vmatprep.subr.mxu0 %v90
  %386 = vmatpush1.msra.mxu0 %v87
  %387 = vmatprep.subr.mxu0 0.0
  %388 = vmatpush1.msra.mxu0 0.0
  %389 = vmatprep.subr.mxu0 0.0
  %390 = vmatpush1.msra.mxu0 0.0
  %391 = vmatprep.subr.mxu0 0.0
  %392 = vmatpush1.msra.mxu0 0.0
  %393 = vmatprep.subr.mxu0 0.0
  %394 = vmatpush1.msra.mxu0 0.0
  %395 = vmatprep.subr.mxu0 0.0
  %396 = vmatpush1.msra.mxu0 0.0
  %397 = vmatprep.subr.mxu0 0.0
  %398 = vmatpush1.msra.mxu0 0.0
  %399 = vmatprep.subr.mxu0 0.0
  %400 = vmatpush1.msra.mxu0 0.0
  %401 = vmatprep.subr.mxu0 0.0
  %402 = vmatpush1.msra.mxu0 0.0
  %403 = vmatprep.subr.mxu0 0.0
  %404 = vmatpush1.msra.mxu0 0.0
  %405 = vmatprep.subr.mxu0 0.0
  %406 = vmatpush1.msra.mxu0 0.0
  %407 = vmatprep.subr.mxu0 0.0
  %408 = vmatpush1.msra.mxu0 0.0
  %409 = vmatprep.subr.mxu0 0.0
  %410 = vmatpush1.msra.mxu0 0.0
  %411 = vmatprep.subr.mxu0 0.0
  %412 = vmatpush1.msra.mxu0 0.0
  %413 = vmatprep.subr.mxu0 0.0
  %414 = vmatpush1.msra.mxu0 0.0
  %415 = vmatprep.subr.mxu0 0.0
  %416 = vmatpush1.msra.mxu0 0.0
  %417 = vmatprep.subr.mxu0 0.0
  %418 = vmatpush1.msra.mxu0 0.0
  %419 = vmatprep.subr.mxu0 0.0
  %420 = vmatpush1.msra.mxu0 0.0
  %421 = vmatprep.subr.mxu0 0.0
  %422 = vmatpush1.msra.mxu0 0.0
  %423 = vmatprep.subr.mxu0 0.0
  %424 = vmatpush1.msra.mxu0 0.0
  %425 = vmatprep.subr.mxu0 0.0
  %426 = vmatpush1.msra.mxu0 0.0
  %427 = vmatprep.subr.mxu0 0.0
  %428 = vmatpush1.msra.mxu0 0.0
  %429 = vmatprep.subr.mxu0 0.0
  %430 = vmatpush1.msra.mxu0 0.0
  %431 = vmatprep.subr.mxu0 0.0
  %432 = vmatpush1.msra.mxu0 0.0
  %433 = vmatprep.subr.mxu0 0.0
  %434 = vmatpush1.msra.mxu0 0.0
  %435 = vmatprep.subr.mxu0 0.0
  %436 = vmatpush1.msra.mxu0 0.0
  %437 = vmatprep.subr.mxu0 0.0
  %438 = vmatpush1.msra.mxu0 0.0
  %439 = vmatprep.subr.mxu0 0.0
  %440 = vmatpush1.msra.mxu0 0.0
  %441 = vmatprep.subr.mxu0 0.0
  %442 = vmatpush1.msra.mxu0 0.0
  %443 = vmatprep.subr.mxu0 0.0
  %444 = vmatpush1.msra.mxu0 0.0
  %445 = vmatprep.subr.mxu0 0.0
  %446 = vmatpush1.msra.mxu0 0.0
  %447 = vmatprep.mubr.f32.mxu0 0.0
  %448 = vmatmul.mubr.f32.gmra.mrb[0].mxu0 %v56
  %v449 = vpop.f32.mrb[0].mxu0
  %v450 = vadd.f32 0.0, %v449
  %v451 = vpop.f32.mrb[0].mxu0
  %v452 = vadd.f32 0.0, %v451
  %453 = vmatprep.mubr.f32.mxu0 0.0
  %454 = vmatmul.mubr.f32.gmra.mrb[0].mxu0 %v59
  %v455 = vpop.f32.mrb[0].mxu0
  %v456 = vadd.f32 0.0, %v455
  %v457 = vpop.f32.mrb[0].mxu0
  %v458 = vadd.f32 0.0, %v457
  %459 = vmatprep.mubr.f32.mxu0 0.0
  %460 = vmatmul.mubr.f32.gmra.mrb[0].mxu0 %v62
  %v461 = vpop.f32.mrb[0].mxu0
  %v462 = vadd.f32 0.0, %v461
  %v463 = vpop.f32.mrb[0].mxu0
  %v464 = vadd.f32 0.0, %v463
  %465 = vmatprep.mubr.f32.mxu0 0.0
  %466 = vmatmul.mubr.f32.gmra.mrb[0].mxu0 %v65
  %v467 = vpop.f32.mrb[0].mxu0
  %v468 = vadd.f32 0.0, %v467
  %v469 = vpop.f32.mrb[0].mxu0
  %v470 = vadd.f32 0.0, %v469
  %471 = vdwg.mxu0
  %472 = vmatprep.subr.mxu0 %v31
  %473 = vmatpush1.msra.mxu0 %v30
  %474 = vmatprep.subr.mxu0 %v96
  %475 = vmatpush1.msra.mxu0 %v93
  %476 = vmatprep.subr.mxu0 0.0
  %477 = vmatpush1.msra.mxu0 0.0
  %478 = vmatprep.subr.mxu0 0.0
  %479 = vmatpush1.msra.mxu0 0.0
  %480 = vmatprep.subr.mxu0 0.0
  %481 = vmatpush1.msra.mxu0 0.0
  %482 = vmatprep.subr.mxu0 0.0
  %483 = vmatpush1.msra.mxu0 0.0
  %484 = vmatprep.subr.mxu0 0.0
  %485 = vmatpush1.msra.mxu0 0.0
  %486 = vmatprep.subr.mxu0 0.0
  %487 = vmatpush1.msra.mxu0 0.0
  %488 = vmatprep.subr.mxu0 0.0
  %489 = vmatpush1.msra.mxu0 0.0
  %490 = vmatprep.subr.mxu0 0.0
  %491 = vmatpush1.msra.mxu0 0.0
  %492 = vmatprep.subr.mxu0 0.0
  %493 = vmatpush1.msra.mxu0 0.0
  %494 = vmatprep.subr.mxu0 0.0
  %495 = vmatpush1.msra.mxu0 0.0
  %496 = vmatprep.subr.mxu0 0.0
  %497 = vmatpush1.msra.mxu0 0.0
  %498 = vmatprep.subr.mxu0 0.0
  %499 = vmatpush1.msra.mxu0 0.0
  %500 = vmatprep.subr.mxu0 0.0
  %501 = vmatpush1.msra.mxu0 0.0
  %502 = vmatprep.subr.mxu0 0.0
  %503 = vmatpush1.msra.mxu0 0.0
  %504 = vmatprep.subr.mxu0 0.0
  %505 = vmatpush1.msra.mxu0 0.0
  %506 = vmatprep.subr.mxu0 0.0
  %507 = vmatpush1.msra.mxu0 0.0
  %508 = vmatprep.subr.mxu0 0.0
  %509 = vmatpush1.msra.mxu0 0.0
  %510 = vmatprep.subr.mxu0 0.0
  %511 = vmatpush1.msra.mxu0 0.0
  %512 = vmatprep.subr.mxu0 0.0
  %513 = vmatpush1.msra.mxu0 0.0
  %514 = vmatprep.subr.mxu0 0.0
  %515 = vmatpush1.msra.mxu0 0.0
  %516 = vmatprep.subr.mxu0 0.0
  %517 = vmatpush1.msra.mxu0 0.0
  %518 = vmatprep.subr.mxu0 0.0
  %519 = vmatpush1.msra.mxu0 0.0
  %520 = vmatprep.subr.mxu0 0.0
  %521 = vmatpush1.msra.mxu0 0.0
  %522 = vmatprep.subr.mxu0 0.0
  %523 = vmatpush1.msra.mxu0 0.0
  %524 = vmatprep.subr.mxu0 0.0
  %525 = vmatpush1.msra.mxu0 0.0
  %526 = vmatprep.subr.mxu0 0.0
  %527 = vmatpush1.msra.mxu0 0.0
  %528 = vmatprep.subr.mxu0 0.0
  %529 = vmatpush1.msra.mxu0 0.0
  %530 = vmatprep.subr.mxu0 0.0
  %531 = vmatpush1.msra.mxu0 0.0
  %532 = vmatprep.subr.mxu0 0.0
  %533 = vmatpush1.msra.mxu0 0.0
  %534 = vmatprep.subr.mxu0 0.0
  %535 = vmatpush1.msra.mxu0 0.0
  %536 = vmatprep.mubr.f32.mxu0 0.0
  %537 = vmatmul.mubr.f32.gmra.mrb[0].mxu0 %v56
  %v538 = vpop.f32.mrb[0].mxu0
  %v539 = vadd.f32 0.0, %v538
  %v540 = vpop.f32.mrb[0].mxu0
  %v541 = vadd.f32 0.0, %v540
  %542 = vmatprep.mubr.f32.mxu0 0.0
  %543 = vmatmul.mubr.f32.gmra.mrb[0].mxu0 %v59
  %v544 = vpop.f32.mrb[0].mxu0
  %v545 = vadd.f32 0.0, %v544
  %v546 = vpop.f32.mrb[0].mxu0
  %v547 = vadd.f32 0.0, %v546
  %548 = vmatprep.mubr.f32.mxu0 0.0
  %549 = vmatmul.mubr.f32.gmra.mrb[0].mxu0 %v62
  %v550 = vpop.f32.mrb[0].mxu0
  %v551 = vadd.f32 0.0, %v550
  %v552 = vpop.f32.mrb[0].mxu0
  %v553 = vadd.f32 0.0, %v552
  %554 = vmatprep.mubr.f32.mxu0 0.0
  %555 = vmatmul.mubr.f32.gmra.mrb[0].mxu0 %v65
  %v556 = vpop.f32.mrb[0].mxu0
  %v557 = vadd.f32 0.0, %v556
  %v558 = vpop.f32.mrb[0].mxu0
  %v559 = vadd.f32 0.0, %v558
  %560 = vdwg.mxu0
  %561 = vmatprep.subr.mxu0 %v33
  %562 = vmatpush1.msra.mxu0 %v32
  %563 = vmatprep.subr.mxu0 %v102
  %564 = vmatpush1.msra.mxu0 %v99
  %565 = vmatprep.subr.mxu0 0.0
  %566 = vmatpush1.msra.mxu0 0.0
  %567 = vmatprep.subr.mxu0 0.0
  %568 = vmatpush1.msra.mxu0 0.0
  %569 = vmatprep.subr.mxu0 0.0
  %570 = vmatpush1.msra.mxu0 0.0
  %571 = vmatprep.subr.mxu0 0.0
  %572 = vmatpush1.msra.mxu0 0.0
  %573 = vmatprep.subr.mxu0 0.0
  %574 = vmatpush1.msra.mxu0 0.0
  %575 = vmatprep.subr.mxu0 0.0
  %576 = vmatpush1.msra.mxu0 0.0
  %577 = vmatprep.subr.mxu0 0.0
  %578 = vmatpush1.msra.mxu0 0.0
  %579 = vmatprep.subr.mxu0 0.0
  %580 = vmatpush1.msra.mxu0 0.0
  %581 = vmatprep.subr.mxu0 0.0
  %582 = vmatpush1.msra.mxu0 0.0
  %583 = vmatprep.subr.mxu0 0.0
  %584 = vmatpush1.msra.mxu0 0.0
  %585 = vmatprep.subr.mxu0 0.0
  %586 = vmatpush1.msra.mxu0 0.0
  %587 = vmatprep.subr.mxu0 0.0
  %588 = vmatpush1.msra.mxu0 0.0
  %589 = vmatprep.subr.mxu0 0.0
  %590 = vmatpush1.msra.mxu0 0.0
  %591 = vmatprep.subr.mxu0 0.0
  %592 = vmatpush1.msra.mxu0 0.0
  %593 = vmatprep.subr.mxu0 0.0
  %594 = vmatpush1.msra.mxu0 0.0
  %595 = vmatprep.subr.mxu0 0.0
  %596 = vmatpush1.msra.mxu0 0.0
  %597 = vmatprep.subr.mxu0 0.0
  %598 = vmatpush1.msra.mxu0 0.0
  %599 = vmatprep.subr.mxu0 0.0
  %600 = vmatpush1.msra.mxu0 0.0
  %601 = vmatprep.subr.mxu0 0.0
  %602 = vmatpush1.msra.mxu0 0.0
  %603 = vmatprep.subr.mxu0 0.0
  %604 = vmatpush1.msra.mxu0 0.0
  %605 = vmatprep.subr.mxu0 0.0
  %606 = vmatpush1.msra.mxu0 0.0
  %607 = vmatprep.subr.mxu0 0.0
  %608 = vmatpush1.msra.mxu0 0.0
  %609 = vmatprep.subr.mxu0 0.0
  %610 = vmatpush1.msra.mxu0 0.0
  %611 = vmatprep.subr.mxu0 0.0
  %612 = vmatpush1.msra.mxu0 0.0
  %613 = vmatprep.subr.mxu0 0.0
  %614 = vmatpush1.msra.mxu0 0.0
  %615 = vmatprep.subr.mxu0 0.0
  %616 = vmatpush1.msra.mxu0 0.0
  %617 = vmatprep.subr.mxu0 0.0
  %618 = vmatpush1.msra.mxu0 0.0
  %619 = vmatprep.subr.mxu0 0.0
  %620 = vmatpush1.msra.mxu0 0.0
  %621 = vmatprep.subr.mxu0 0.0
  %622 = vmatpush1.msra.mxu0 0.0
  %623 = vmatprep.subr.mxu0 0.0
  %624 = vmatpush1.msra.mxu0 0.0
  %625 = vmatprep.mubr.f32.mxu0 0.0
  %626 = vmatmul.mubr.f32.gmra.mrb[0].mxu0 %v56
  %v627 = vpop.f32.mrb[0].mxu0
  %v628 = vadd.f32 0.0, %v627
  %v629 = vpop.f32.mrb[0].mxu0
  %v630 = vadd.f32 0.0, %v629
  %631 = vmatprep.mubr.f32.mxu0 0.0
  %632 = vmatmul.mubr.f32.gmra.mrb[0].mxu0 %v59
  %v633 = vpop.f32.mrb[0].mxu0
  %v634 = vadd.f32 0.0, %v633
  %v635 = vpop.f32.mrb[0].mxu0
  %v636 = vadd.f32 0.0, %v635
  %637 = vmatprep.mubr.f32.mxu0 0.0
  %638 = vmatmul.mubr.f32.gmra.mrb[0].mxu0 %v62
  %v639 = vpop.f32.mrb[0].mxu0
  %v640 = vadd.f32 0.0, %v639
  %v641 = vpop.f32.mrb[0].mxu0
  %v642 = vadd.f32 0.0, %v641
  %643 = vmatprep.mubr.f32.mxu0 0.0
  %644 = vmatmul.mubr.f32.gmra.mrb[0].mxu0 %v65
  %v645 = vpop.f32.mrb[0].mxu0
  %v646 = vadd.f32 0.0, %v645
  %v647 = vpop.f32.mrb[0].mxu0
  %v648 = vadd.f32 0.0, %v647
  %649 = vdwg.mxu0
  %650 = vmatprep.subr.mxu0 %v35
  %651 = vmatpush1.msra.mxu0 %v34
  %652 = vmatprep.subr.mxu0 %v108
  %653 = vmatpush1.msra.mxu0 %v105
  %654 = vmatprep.subr.mxu0 0.0
  %655 = vmatpush1.msra.mxu0 0.0
  %656 = vmatprep.subr.mxu0 0.0
  %657 = vmatpush1.msra.mxu0 0.0
  %658 = vmatprep.subr.mxu0 0.0
  %659 = vmatpush1.msra.mxu0 0.0
  %660 = vmatprep.subr.mxu0 0.0
  %661 = vmatpush1.msra.mxu0 0.0
  %662 = vmatprep.subr.mxu0 0.0
  %663 = vmatpush1.msra.mxu0 0.0
  %664 = vmatprep.subr.mxu0 0.0
  %665 = vmatpush1.msra.mxu0 0.0
  %666 = vmatprep.subr.mxu0 0.0
  %667 = vmatpush1.msra.mxu0 0.0
  %668 = vmatprep.subr.mxu0 0.0
  %669 = vmatpush1.msra.mxu0 0.0
  %670 = vmatprep.subr.mxu0 0.0
  %671 = vmatpush1.msra.mxu0 0.0
  %672 = vmatprep.subr.mxu0 0.0
  %673 = vmatpush1.msra.mxu0 0.0
  %674 = vmatprep.subr.mxu0 0.0
  %675 = vmatpush1.msra.mxu0 0.0
  %676 = vmatprep.subr.mxu0 0.0
  %677 = vmatpush1.msra.mxu0 0.0
  %678 = vmatprep.subr.mxu0 0.0
  %679 = vmatpush1.msra.mxu0 0.0
  %680 = vmatprep.subr.mxu0 0.0
  %681 = vmatpush1.msra.mxu0 0.0
  %682 = vmatprep.subr.mxu0 0.0
  %683 = vmatpush1.msra.mxu0 0.0
  %684 = vmatprep.subr.mxu0 0.0
  %685 = vmatpush1.msra.mxu0 0.0
  %686 = vmatprep.subr.mxu0 0.0
  %687 = vmatpush1.msra.mxu0 0.0
  %688 = vmatprep.subr.mxu0 0.0
  %689 = vmatpush1.msra.mxu0 0.0
  %690 = vmatprep.subr.mxu0 0.0
  %691 = vmatpush1.msra.mxu0 0.0
  %692 = vmatprep.subr.mxu0 0.0
  %693 = vmatpush1.msra.mxu0 0.0
  %694 = vmatprep.subr.mxu0 0.0
  %695 = vmatpush1.msra.mxu0 0.0
  %696 = vmatprep.subr.mxu0 0.0
  %697 = vmatpush1.msra.mxu0 0.0
  %698 = vmatprep.subr.mxu0 0.0
  %699 = vmatpush1.msra.mxu0 0.0
  %700 = vmatprep.subr.mxu0 0.0
  %701 = vmatpush1.msra.mxu0 0.0
  %702 = vmatprep.subr.mxu0 0.0
  %703 = vmatpush1.msra.mxu0 0.0
  %704 = vmatprep.subr.mxu0 0.0
  %705 = vmatpush1.msra.mxu0 0.0
  %706 = vmatprep.subr.mxu0 0.0
  %707 = vmatpush1.msra.mxu0 0.0
  %708 = vmatprep.subr.mxu0 0.0
  %709 = vmatpush1.msra.mxu0 0.0
  %710 = vmatprep.subr.mxu0 0.0
  %711 = vmatpush1.msra.mxu0 0.0
  %712 = vmatprep.subr.mxu0 0.0
  %713 = vmatpush1.msra.mxu0 0.0
  %714 = vmatprep.mubr.f32.mxu0 0.0
  %715 = vmatmul.mubr.f32.gmra.mrb[0].mxu0 %v56
  %v716 = vpop.f32.mrb[0].mxu0
  %v717 = vadd.f32 0.0, %v716
  %v718 = vpop.f32.mrb[0].mxu0
  %v719 = vadd.f32 0.0, %v718
  %720 = vmatprep.mubr.f32.mxu0 0.0
  %721 = vmatmul.mubr.f32.gmra.mrb[0].mxu0 %v59
  %v722 = vpop.f32.mrb[0].mxu0
  %v723 = vadd.f32 0.0, %v722
  %v724 = vpop.f32.mrb[0].mxu0
  %v725 = vadd.f32 0.0, %v724
  %726 = vmatprep.mubr.f32.mxu0 0.0
  %727 = vmatmul.mubr.f32.gmra.mrb[0].mxu0 %v62
  %v728 = vpop.f32.mrb[0].mxu0
  %v729 = vadd.f32 0.0, %v728
  %v730 = vpop.f32.mrb[0].mxu0
  %v731 = vadd.f32 0.0, %v730
  %732 = vmatprep.mubr.f32.mxu0 0.0
  %733 = vmatmul.mubr.f32.gmra.mrb[0].mxu0 %v65
  %v734 = vpop.f32.mrb[0].mxu0
  %v735 = vadd.f32 0.0, %v734
  %v736 = vpop.f32.mrb[0].mxu0
  %v737 = vadd.f32 0.0, %v736
  %738 = vdwg.mxu0
  %739 = vmatprep.subr.mxu0 %v37
  %740 = vmatpush1.msra.mxu0 %v36
  %741 = vmatprep.subr.mxu0 %v114
  %742 = vmatpush1.msra.mxu0 %v111
  %743 = vmatprep.subr.mxu0 0.0
  %744 = vmatpush1.msra.mxu0 0.0
  %745 = vmatprep.subr.mxu0 0.0
  %746 = vmatpush1.msra.mxu0 0.0
  %747 = vmatprep.subr.mxu0 0.0
  %748 = vmatpush1.msra.mxu0 0.0
  %749 = vmatprep.subr.mxu0 0.0
  %750 = vmatpush1.msra.mxu0 0.0
  %751 = vmatprep.subr.mxu0 0.0
  %752 = vmatpush1.msra.mxu0 0.0
  %753 = vmatprep.subr.mxu0 0.0
  %754 = vmatpush1.msra.mxu0 0.0
  %755 = vmatprep.subr.mxu0 0.0
  %756 = vmatpush1.msra.mxu0 0.0
  %757 = vmatprep.subr.mxu0 0.0
  %758 = vmatpush1.msra.mxu0 0.0
  %759 = vmatprep.subr.mxu0 0.0
  %760 = vmatpush1.msra.mxu0 0.0
  %761 = vmatprep.subr.mxu0 0.0
  %762 = vmatpush1.msra.mxu0 0.0
  %763 = vmatprep.subr.mxu0 0.0
  %764 = vmatpush1.msra.mxu0 0.0
  %765 = vmatprep.subr.mxu0 0.0
  %766 = vmatpush1.msra.mxu0 0.0
  %767 = vmatprep.subr.mxu0 0.0
  %768 = vmatpush1.msra.mxu0 0.0
  %769 = vmatprep.subr.mxu0 0.0
  %770 = vmatpush1.msra.mxu0 0.0
  %771 = vmatprep.subr.mxu0 0.0
  %772 = vmatpush1.msra.mxu0 0.0
  %773 = vmatprep.subr.mxu0 0.0
  %774 = vmatpush1.msra.mxu0 0.0
  %775 = vmatprep.subr.mxu0 0.0
  %776 = vmatpush1.msra.mxu0 0.0
  %777 = vmatprep.subr.mxu0 0.0
  %778 = vmatpush1.msra.mxu0 0.0
  %779 = vmatprep.subr.mxu0 0.0
  %780 = vmatpush1.msra.mxu0 0.0
  %781 = vmatprep.subr.mxu0 0.0
  %782 = vmatpush1.msra.mxu0 0.0
  %783 = vmatprep.subr.mxu0 0.0
  %784 = vmatpush1.msra.mxu0 0.0
  %785 = vmatprep.subr.mxu0 0.0
  %786 = vmatpush1.msra.mxu0 0.0
  %787 = vmatprep.subr.mxu0 0.0
  %788 = vmatpush1.msra.mxu0 0.0
  %789 = vmatprep.subr.mxu0 0.0
  %790 = vmatpush1.msra.mxu0 0.0
  %791 = vmatprep.subr.mxu0 0.0
  %792 = vmatpush1.msra.mxu0 0.0
  %793 = vmatprep.subr.mxu0 0.0
  %794 = vmatpush1.msra.mxu0 0.0
  %795 = vmatprep.subr.mxu0 0.0
  %796 = vmatpush1.msra.mxu0 0.0
  %797 = vmatprep.subr.mxu0 0.0
  %798 = vmatpush1.msra.mxu0 0.0
  %799 = vmatprep.subr.mxu0 0.0
  %800 = vmatpush1.msra.mxu0 0.0
  %801 = vmatprep.subr.mxu0 0.0
  %802 = vmatpush1.msra.mxu0 0.0
  %803 = vmatprep.mubr.f32.mxu0 0.0
  %804 = vmatmul.mubr.f32.gmra.mrb[0].mxu0 %v56
  %v805 = vpop.f32.mrb[0].mxu0
  %v806 = vadd.f32 0.0, %v805
  %v807 = vpop.f32.mrb[0].mxu0
  %v808 = vadd.f32 0.0, %v807
  %809 = vmatprep.mubr.f32.mxu0 0.0
  %810 = vmatmul.mubr.f32.gmra.mrb[0].mxu0 %v59
  %v811 = vpop.f32.mrb[0].mxu0
  %v812 = vadd.f32 0.0, %v811
  %v813 = vpop.f32.mrb[0].mxu0
  %v814 = vadd.f32 0.0, %v813
  %815 = vmatprep.mubr.f32.mxu0 0.0
  %816 = vmatmul.mubr.f32.gmra.mrb[0].mxu0 %v62
  %v817 = vpop.f32.mrb[0].mxu0
  %v818 = vadd.f32 0.0, %v817
  %v819 = vpop.f32.mrb[0].mxu0
  %v820 = vadd.f32 0.0, %v819
  %821 = vmatprep.mubr.f32.mxu0 0.0
  %822 = vmatmul.mubr.f32.gmra.mrb[0].mxu0 %v65
  %v823 = vpop.f32.mrb[0].mxu0
  %v824 = vadd.f32 0.0, %v823
  %v825 = vpop.f32.mrb[0].mxu0
  %v826 = vadd.f32 0.0, %v825
  %827 = vdwg.mxu0
  %v828 = vmax.f32 %v183, %v361
  %v829 = vmax.f32 %v185, %v363
  %v830 = vmax.f32 %v272, %v450
  %v831 = vmax.f32 %v274, %v452
  %v832 = vmax.f32 %v189, %v367
  %v833 = vmax.f32 %v191, %v369
  %v834 = vmax.f32 %v278, %v456
  %v835 = vmax.f32 %v280, %v458
  %v836 = vmax.f32 %v195, %v373
  %v837 = vmax.f32 %v197, %v375
  %v838 = vmax.f32 %v284, %v462
  %v839 = vmax.f32 %v286, %v464
  %v840 = vmax.f32 %v201, %v379
  %v841 = vmax.f32 %v203, %v381
  %v842 = vmax.f32 %v290, %v468
  %v843 = vmax.f32 %v292, %v470
  %v844 = vmax.f32 %v828, %v539
  %v845 = vmax.f32 %v829, %v541
  %v846 = vmax.f32 %v830, %v628
  %v847 = vmax.f32 %v831, %v630
  %v848 = vmax.f32 %v832, %v545
  %v849 = vmax.f32 %v833, %v547
  %v850 = vmax.f32 %v834, %v634
  %v851 = vmax.f32 %v835, %v636
  %v852 = vmax.f32 %v836, %v551
  %v853 = vmax.f32 %v837, %v553
  %v854 = vmax.f32 %v838, %v640
  %v855 = vmax.f32 %v839, %v642
  %v856 = vmax.f32 %v840, %v557
  %v857 = vmax.f32 %v841, %v559
  %v858 = vmax.f32 %v842, %v646
  %v859 = vmax.f32 %v843, %v648
  %v860 = vmax.f32 %v844, %v717
  %v861 = vmax.f32 %v845, %v719
  %v862 = vmax.f32 %v846, %v806
  %v863 = vmax.f32 %v847, %v808
  %v864 = vmax.f32 %v848, %v723
  %v865 = vmax.f32 %v849, %v725
  %v866 = vmax.f32 %v850, %v812
  %v867 = vmax.f32 %v851, %v814
  %v868 = vmax.f32 %v852, %v729
  %v869 = vmax.f32 %v853, %v731
  %v870 = vmax.f32 %v854, %v818
  %v871 = vmax.f32 %v855, %v820
  %v872 = vmax.f32 %v856, %v735
  %v873 = vmax.f32 %v857, %v737
  %v874 = vmax.f32 %v858, %v824
  %v875 = vmax.f32 %v859, %v826
  %v876 = vld [vmem:[%s3] sm:$0xff]
  %v877 = vld [vmem:[%s3 + $0x8] sm:$0xff]
  %v878 = vld [vmem:[%s3 + $0x10] sm:$0xff]
  %v879 = vld [vmem:[%s3 + $0x18] sm:$0xff]
  %881 = vset.pattern.permute.xlu0 0
  %882 = vperm.xlu0 %881, %v876
  %v883 = vpop.permute.xlu0 %882
  %886 = vset.pattern.permute.xlu0 0
  %887 = vperm.xlu0 %886, %v877
  %v888 = vpop.permute.xlu0 %887
  %891 = vset.pattern.permute.xlu0 0
  %892 = vperm.xlu0 %891, %v878
  %v893 = vpop.permute.xlu0 %892
  %896 = vset.pattern.permute.xlu0 0
  %897 = vperm.xlu0 %896, %v879
  %v898 = vpop.permute.xlu0 %897
  %v900 = vadd.f32 %v860, %v883
  %v901 = vadd.f32 %v861, %v883
  %v902 = vadd.f32 %v862, %v883
  %v903 = vadd.f32 %v863, %v883
  %v904 = vadd.f32 %v864, %v888
  %v905 = vadd.f32 %v865, %v888
  %v906 = vadd.f32 %v866, %v888
  %v907 = vadd.f32 %v867, %v888
  %v908 = vadd.f32 %v868, %v893
  %v909 = vadd.f32 %v869, %v893
  %v910 = vadd.f32 %v870, %v893
  %v911 = vadd.f32 %v871, %v893
  %v912 = vadd.f32 %v872, %v898
  %v913 = vadd.f32 %v873, %v898
  %v914 = vadd.f32 %v874, %v898
  %v915 = vadd.f32 %v875, %v898
  %v916 = vmax.f32 %v900, 0.0
  %v917 = vmax.f32 %v901, 0.0
  %v918 = vmax.f32 %v902, 0.0
  %v919 = vmax.f32 %v903, 0.0
  %v920 = vmax.f32 %v904, 0.0
  %v921 = vmax.f32 %v905, 0.0
  %v922 = vmax.f32 %v906, 0.0
  %v923 = vmax.f32 %v907, 0.0
  %v924 = vmax.f32 %v908, 0.0
  %v925 = vmax.f32 %v909, 0.0
  %v926 = vmax.f32 %v910, 0.0
  %v927 = vmax.f32 %v911, 0.0
  %v928 = vmax.f32 %v912, 0.0
  %v929 = vmax.f32 %v913, 0.0
  %v930 = vmax.f32 %v914, 0.0
  %v931 = vmax.f32 %v915, 0.0
  %932 = vst [vmem:[%s4] sm:$0xff] %v916
  %933 = vst [vmem:[%s4 + $0x8] sm:$0xff] %v917
  %934 = vst [vmem:[%s4 + $0x10] sm:$0xff] %v918
  %935 = vst [vmem:[%s4 + $0x18] sm:$0xff] %v919
  %936 = vst [vmem:[%s4 + $0x20] sm:$0xff] %v920
  %937 = vst [vmem:[%s4 + $0x28] sm:$0xff] %v921
  %938 = vst [vmem:[%s4 + $0x30] sm:$0xff] %v922
  %939 = vst [vmem:[%s4 + $0x38] sm:$0xff] %v923
  %940 = vst [vmem:[%s4 + $0x40] sm:$0xff] %v924
  %941 = vst [vmem:[%s4 + $0x48] sm:$0xff] %v925
  %942 = vst [vmem:[%s4 + $0x50] sm:$0xff] %v926
  %943 = vst [vmem:[%s4 + $0x58] sm:$0xff] %v927
  %944 = vst [vmem:[%s4 + $0x60] sm:$0xff] %v928
  %945 = vst [vmem:[%s4 + $0x68] sm:$0xff] %v929
  %946 = vst [vmem:[%s4 + $0x70] sm:$0xff] %v930
  %947 = vst [vmem:[%s4 + $0x78] sm:$0xff] %v931
  // Predicated region
  $region18: #{fwd.3} parent=0 // pred_check
    _
  $region19: #{fwd.3} parent=0 // pred_check_branch
    %949 = sbr.rel (0) target = $region21
  $region20: #{fwd.3} parent=0 // pred_region
    _
  $region21: #{fwd.3} parent=0 // pred_fallthru
    _
  // Predicated region
  $region22: #{fwd.3} parent=0 // pred_check
    _
  $region23: #{fwd.3} parent=0 // pred_check_branch
    %951 = sbr.rel (0) target = $region25
  $region24: #{fwd.3} parent=0 // pred_region
    _
  $region25: #{fwd.3} parent=0 // pred_fallthru
    _

// kernel: fwd.4
$region0: #{fwd.4}
  #allocation0 [shape = 'u32[]', space=smem, size = 0x4, offset = 0x4, fixed_abs, tag = 'smem constant byte address 0x4 - core index']
  #allocation1 [shape = 'u32[144,128]{1,0:T(1,128)}', space=vmem, size = 0x12000, scoped, tag = 'internal scratch']
  #allocation2 [shape = 's32[1,1]{1,0:T(1,128)S(6)}', space=smem, size = 0x200, scoped, tag = 'scoped memory for fwd.4']
  %s0 = inlined_call_operand.<no memory space> [shape: s32[1,1], index: 0, kind: input, shape index: {}]
  %s1 = inlined_call_operand.vmem [shape: f32[416,288], index: 1, kind: input, shape index: {}]
  %s2 = inlined_call_operand.vmem [shape: f32[288,64], index: 2, kind: input, shape index: {}]
  %s3 = inlined_call_operand.vmem [shape: f32[1,64], index: 3, kind: input, shape index: {}]
  %s4 = inlined_call_operand.vmem [shape: f32[104,64], index: 4, kind: output, shape index: {}]
  %s5 = sld [smem:[#allocation0]]
  $region26: #{fwd.4} parent=0
    _
  %s7 = ssub.s32 1, %s5
  %s8 = scalar_select 0, %s7, %s5
  %9 = sst [smem:[#allocation2]] %s0
  // Predicated region
  $region2: #{fwd.4} parent=0 // pred_check
    _
  $region3: #{fwd.4} parent=0 // pred_check_branch
    %11 = sbr.rel (0) target = $region5
  $region4: #{fwd.4} parent=0 // pred_region
    _
  $region5: #{fwd.4} parent=0 // pred_fallthru
    _
  // Predicated region
  $region6: #{fwd.4} parent=0 // pred_check
    _
  $region7: #{fwd.4} parent=0 // pred_check_branch
    %13 = sbr.rel (0) target = $region9
  $region8: #{fwd.4} parent=0 // pred_region
    _
  $region9: #{fwd.4} parent=0 // pred_fallthru
    _
  // Predicated region
  $region10: #{fwd.4} parent=0 // pred_check
    _
  $region11: #{fwd.4} parent=0 // pred_check_branch
    %15 = sbr.rel (0) target = $region13
  $region12: #{fwd.4} parent=0 // pred_region
    _
  $region13: #{fwd.4} parent=0 // pred_fallthru
    _
  // Predicated region
  $region14: #{fwd.4} parent=0 // pred_check
    _
  $region15: #{fwd.4} parent=0 // pred_check_branch
    %17 = sbr.rel (0) target = $region17
  $region16: #{fwd.4} parent=0 // pred_region
    _
  $region17: #{fwd.4} parent=0 // pred_fallthru
    _
  %v18 = vld [vmem:[%s1] sm:$0xff]
  %v19 = vld [vmem:[%s1 + $0x8] sm:$0xff]
  %v20 = vld [vmem:[%s1 + $0x10] sm:$0xff]
  %v21 = vld [vmem:[%s1 + $0x18] sm:$0xff]
  %v22 = vld [vmem:[%s1 + $0x20] sm:$0xff]
  %v23 = vld [vmem:[%s1 + $0x28] sm:$0xff]
  %v24 = vld [vmem:[%s1 + $0x30] sm:$0xff]
  %v25 = vld [vmem:[%s1 + $0x38] sm:$0xff]
  %v26 = vld [vmem:[%s1 + $0x40] sm:$0xff]
  %v27 = vld [vmem:[%s1 + $0x48] sm:$0xff]
  %v28 = vld [vmem:[%s1 + $0x50] sm:$0xff]
  %v29 = vld [vmem:[%s1 + $0x58] sm:$0xff]
  %v30 = vld [vmem:[%s1 + $0x60] sm:$0xff]
  %v31 = vld [vmem:[%s1 + $0x68] sm:$0xff]
  %v32 = vld [vmem:[%s1 + $0x70] sm:$0xff]
  %v33 = vld [vmem:[%s1 + $0x78] sm:$0xff]
  %v34 = vld [vmem:[%s1 + $0x80] sm:$0xff]
  %v35 = vld [vmem:[%s1 + $0x88] sm:$0xff]
  %v36 = vld [vmem:[%s1 + $0x90] sm:$0xff]
  %v37 = vld [vmem:[%s1 + $0x98] sm:$0xff]
  %v38 = vld [vmem:[%s1 + $0xa0] sm:$0xff]
  %v39 = vld [vmem:[%s1 + $0xa8] sm:$0xff]
  %v40 = vld [vmem:[%s1 + $0xb0] sm:$0xff]
  %v41 = vld [vmem:[%s1 + $0xb8] sm:$0xff]
  %v42 = vld [vmem:[%s1 + $0xc0] sm:$0xff]
  %v43 = vld [vmem:[%s1 + $0xc8] sm:$0xff]
  %v44 = vld [vmem:[%s1 + $0xd0] sm:$0xff]
  %v45 = vld [vmem:[%s1 + $0xd8] sm:$0xff]
  %v46 = vld [vmem:[%s1 + $0xe0] sm:$0xff]
  %v47 = vld [vmem:[%s1 + $0xe8] sm:$0xff]
  %v48 = vld [vmem:[%s1 + $0xf0] sm:$0xff]
  %v49 = vld [vmem:[%s1 + $0xf8] sm:$0xff]
  %v50 = vld [vmem:[%s1 + $0x100] sm:$0xff]
  %v51 = vld [vmem:[%s1 + $0x108] sm:$0xff]
  %v52 = vld [vmem:[%s1 + $0x110] sm:$0xff]
  %v53 = vld [vmem:[%s1 + $0x118] sm:$0xff]
  %v54 = vld [vmem:[%s1 + $0x120] sm:$0xff]
  %v55 = vld [vmem:[%s1 + $0x128] sm:$0xff]
  %v56 = vld [vmem:[%s1 + $0x130] sm:$0xff]
  %v57 = vld [vmem:[%s1 + $0x138] sm:$0xff]
  %v58 = vld [vmem:[%s1 + $0x140] sm:$0xff]
  %v59 = vld [vmem:[%s1 + $0x148] sm:$0xff]
  %v60 = vld [vmem:[%s1 + $0x150] sm:$0xff]
  %v61 = vld [vmem:[%s1 + $0x158] sm:$0xff]
  %v62 = vld [vmem:[%s1 + $0x160] sm:$0xff]
  %v63 = vld [vmem:[%s1 + $0x168] sm:$0xff]
  %v64 = vld [vmem:[%s1 + $0x170] sm:$0xff]
  %v65 = vld [vmem:[%s1 + $0x178] sm:$0xff]
  %v66 = vld [vmem:[%s1 + $0x180] sm:$0xff]
  %v67 = vld [vmem:[%s1 + $0x188] sm:$0xff]
  %v68 = vld [vmem:[%s1 + $0x190] sm:$0xff]
  %v69 = vld [vmem:[%s1 + $0x198] sm:$0xff]
  %v70 = vld [vmem:[%s1 + $0x1a0] sm:$0xff]
  %v71 = vld [vmem:[%s1 + $0x1a8] sm:$0xff]
  %v72 = vld [vmem:[%s1 + $0x1b0] sm:$0xff]
  %v73 = vld [vmem:[%s1 + $0x1b8] sm:$0xff]
  %v74 = vld [vmem:[%s1 + $0x1c0] sm:$0xff]
  %v75 = vld [vmem:[%s1 + $0x1c8] sm:$0xff]
  %v76 = vld [vmem:[%s1 + $0x1d0] sm:$0xff]
  %v77 = vld [vmem:[%s1 + $0x1d8] sm:$0xff]
  %v78 = vld [vmem:[%s1 + $0x1e0] sm:$0xff]
  %v79 = vld [vmem:[%s1 + $0x1e8] sm:$0xff]
  %v80 = vld [vmem:[%s1 + $0x1f0] sm:$0xff]
  %v81 = vld [vmem:[%s1 + $0x1f8] sm:$0xff]
  %v82 = vld [vmem:[%s1 + $0x200] sm:$0xff]
  %v83 = vld [vmem:[%s1 + $0x208] sm:$0xff]
  %v84 = vld [vmem:[%s1 + $0x210] sm:$0xff]
  %v85 = vld [vmem:[%s1 + $0x218] sm:$0xff]
  %v86 = vld [vmem:[%s1 + $0x220] sm:$0xff]
  %v87 = vld [vmem:[%s1 + $0x228] sm:$0xff]
  %v88 = vld [vmem:[%s1 + $0x230] sm:$0xff]
  %v89 = vld [vmem:[%s1 + $0x238] sm:$0xff]
  %v90 = vld [vmem:[%s1 + $0x240] sm:$0xff]
  %v91 = vld [vmem:[%s1 + $0x248] sm:$0xff]
  %v92 = vld [vmem:[%s1 + $0x250] sm:$0xff]
  %v93 = vld [vmem:[%s1 + $0x258] sm:$0xff]
  %v94 = vld [vmem:[%s1 + $0x260] sm:$0xff]
  %v95 = vld [vmem:[%s1 + $0x268] sm:$0xff]
  %v96 = vld [vmem:[%s1 + $0x270] sm:$0xff]
  %v97 = vld [vmem:[%s1 + $0x278] sm:$0xff]
  %v98 = vld [vmem:[%s1 + $0x280] sm:$0xff]
  %v99 = vld [vmem:[%s1 + $0x288] sm:$0xff]
  %v100 = vld [vmem:[%s1 + $0x290] sm:$0xff]
  %v101 = vld [vmem:[%s1 + $0x298] sm:$0xff]
  %v102 = vld [vmem:[%s1 + $0x2a0] sm:$0xff]
  %v103 = vld [vmem:[%s1 + $0x2a8] sm:$0xff]
  %v104 = vld [vmem:[%s1 + $0x2b0] sm:$0xff]
  %v105 = vld [vmem:[%s1 + $0x2b8] sm:$0xff]
  %v106 = vld [vmem:[%s1 + $0x2c0] sm:$0xff]
  %v107 = vld [vmem:[%s1 + $0x2c8] sm:$0xff]
  %v108 = vld [vmem:[%s1 + $0x2d0] sm:$0xff]
  %v109 = vld [vmem:[%s1 + $0x2d8] sm:$0xff]
  %v110 = vld [vmem:[%s1 + $0x2e0] sm:$0xff]
  %v111 = vld [vmem:[%s1 + $0x2e8] sm:$0xff]
  %v112 = vld [vmem:[%s1 + $0x2f0] sm:$0xff]
  %v113 = vld [vmem:[%s1 + $0x2f8] sm:$0xff]
  %v114 = vld [vmem:[%s1 + $0x300] sm:$0xff]
  %v115 = vld [vmem:[%s1 + $0x308] sm:$0xff]
  %v116 = vld [vmem:[%s1 + $0x310] sm:$0xff]
  %v117 = vld [vmem:[%s1 + $0x318] sm:$0xff]
  %v118 = vld [vmem:[%s1 + $0x320] sm:$0xff]
  %v119 = vld [vmem:[%s1 + $0x328] sm:$0xff]
  %v120 = vld [vmem:[%s1 + $0x330] sm:$0xff]
  %v121 = vld [vmem:[%s1 + $0x338] sm:$0xff]
  %v122 = vld [vmem:[%s1 + $0x340] sm:$0xff]
  %v123 = vld [vmem:[%s1 + $0x348] sm:$0xff]
  %v124 = vld [vmem:[%s1 + $0x350] sm:$0xff]
  %v125 = vld [vmem:[%s1 + $0x358] sm:$0xff]
  %v126 = vld [vmem:[%s1 + $0x360] sm:$0xff]
  %v127 = vld [vmem:[%s1 + $0x368] sm:$0xff]
  %v128 = vld [vmem:[%s1 + $0x370] sm:$0xff]
  %v129 = vld [vmem:[%s1 + $0x378] sm:$0xff]
  %v130 = vld [vmem:[%s1 + $0x380] sm:$0xff]
  %v131 = vld [vmem:[%s1 + $0x388] sm:$0xff]
  %v132 = vld [vmem:[%s1 + $0x390] sm:$0xff]
  %v133 = vld [vmem:[%s1 + $0x398] sm:$0xff]
  %v134 = vld [vmem:[%s1 + $0x3a0] sm:$0xff]
  %v135 = vld [vmem:[%s1 + $0x3a8] sm:$0xff]
  %v136 = vld [vmem:[%s1 + $0x3b0] sm:$0xff]
  %v137 = vld [vmem:[%s1 + $0x3b8] sm:$0xff]
  %v138 = vld [vmem:[%s1 + $0x3c0] sm:$0xff]
  %v139 = vld [vmem:[%s1 + $0x3c8] sm:$0xff]
  %v140 = vld [vmem:[%s1 + $0x3d0] sm:$0xff]
  %v141 = vld [vmem:[%s1 + $0x3d8] sm:$0xff]
  %v142 = vld [vmem:[%s1 + $0x3e0] sm:$0xff]
  %v143 = vld [vmem:[%s1 + $0x3e8] sm:$0xff]
  %v144 = vld [vmem:[%s1 + $0x3f0] sm:$0xff]
  %v145 = vld [vmem:[%s1 + $0x3f8] sm:$0xff]
  %v146 = vld [vmem:[%s1 + $0x400] sm:$0xff]
  %v147 = vld [vmem:[%s1 + $0x408] sm:$0xff]
  %v148 = vld [vmem:[%s1 + $0x410] sm:$0xff]
  %v149 = vld [vmem:[%s1 + $0x418] sm:$0xff]
  %v150 = vld [vmem:[%s1 + $0x420] sm:$0xff]
  %v151 = vld [vmem:[%s1 + $0x428] sm:$0xff]
  %v152 = vld [vmem:[%s1 + $0x430] sm:$0xff]
  %v153 = vld [vmem:[%s1 + $0x438] sm:$0xff]
  %v154 = vld [vmem:[%s1 + $0x440] sm:$0xff]
  %v155 = vld [vmem:[%s1 + $0x448] sm:$0xff]
  %v156 = vld [vmem:[%s1 + $0x450] sm:$0xff]
  %v157 = vld [vmem:[%s1 + $0x458] sm:$0xff]
  %v158 = vld [vmem:[%s1 + $0x460] sm:$0xff]
  %v159 = vld [vmem:[%s1 + $0x468] sm:$0xff]
  %v160 = vld [vmem:[%s1 + $0x470] sm:$0xff]
  %v161 = vld [vmem:[%s1 + $0x478] sm:$0xff]
  %v162 = vld [vmem:[%s1 + $0x480] sm:$0xff]
  %v163 = vld [vmem:[%s1 + $0x488] sm:$0xff]
  %v164 = vld [vmem:[%s1 + $0x490] sm:$0xff]
  %v165 = vld [vmem:[%s1 + $0x498] sm:$0xff]
  %v166 = vld [vmem:[%s1 + $0x4a0] sm:$0xff]
  %v167 = vld [vmem:[%s1 + $0x4a8] sm:$0xff]
  %v168 = vld [vmem:[%s1 + $0x4b0] sm:$0xff]
  %v169 = vld [vmem:[%s1 + $0x4b8] sm:$0xff]
  %v170 = vld [vmem:[%s1 + $0x4c0] sm:$0xff]
  %v171 = vld [vmem:[%s1 + $0x4c8] sm:$0xff]
  %v172 = vld [vmem:[%s1 + $0x4d0] sm:$0xff]
  %v173 = vld [vmem:[%s1 + $0x4d8] sm:$0xff]
  %v174 = vld [vmem:[%s2] sm:$0xff]
  %v175 = vld [vmem:[%s2 + $0x8] sm:$0xff]
  %v176 = vld [vmem:[%s2 + $0x10] sm:$0xff]
  %v177 = vld [vmem:[%s2 + $0x18] sm:$0xff]
  %v178 = vld [vmem:[%s2 + $0x20] sm:$0xff]
  %v179 = vld [vmem:[%s2 + $0x28] sm:$0xff]
  %v180 = vld [vmem:[%s2 + $0x30] sm:$0xff]
  %v181 = vld [vmem:[%s2 + $0x38] sm:$0xff]
  %v182 = vld [vmem:[%s2 + $0x40] sm:$0xff]
  %v183 = vld [vmem:[%s2 + $0x48] sm:$0xff]
  %v184 = vld [vmem:[%s2 + $0x50] sm:$0xff]
  %v185 = vld [vmem:[%s2 + $0x58] sm:$0xff]
  %v186 = vld [vmem:[%s2 + $0x60] sm:$0xff]
  %v187 = vld [vmem:[%s2 + $0x68] sm:$0xff]
  %v188 = vld [vmem:[%s2 + $0x70] sm:$0xff]
  %v189 = vld [vmem:[%s2 + $0x78] sm:$0xff]
  %v190 = vld [vmem:[%s2 + $0x80] sm:$0xff]
  %v191 = vld [vmem:[%s2 + $0x88] sm:$0xff]
  %v192 = vld [vmem:[%s2 + $0x90] sm:$0xff]
  %v193 = vld [vmem:[%s2 + $0x98] sm:$0xff]
  %v194 = vld [vmem:[%s2 + $0xa0] sm:$0xff]
  %v195 = vld [vmem:[%s2 + $0xa8] sm:$0xff]
  %v196 = vld [vmem:[%s2 + $0xb0] sm:$0xff]
  %v197 = vld [vmem:[%s2 + $0xb8] sm:$0xff]
  %v198 = vld [vmem:[%s2 + $0xc0] sm:$0xff]
  %v199 = vld [vmem:[%s2 + $0xc8] sm:$0xff]
  %v200 = vld [vmem:[%s2 + $0xd0] sm:$0xff]
  %v201 = vld [vmem:[%s2 + $0xd8] sm:$0xff]
  %v202 = vld [vmem:[%s2 + $0xe0] sm:$0xff]
  %v203 = vld [vmem:[%s2 + $0xe8] sm:$0xff]
  %v204 = vld [vmem:[%s2 + $0xf0] sm:$0xff]
  %v205 = vld [vmem:[%s2 + $0xf8] sm:$0xff]
  %v206 = vld [vmem:[%s2 + $0x100] sm:$0xff]
  %v207 = vld [vmem:[%s2 + $0x108] sm:$0xff]
  %v208 = vld [vmem:[%s2 + $0x110] sm:$0xff]
  %v209 = vld [vmem:[%s2 + $0x118] sm:$0xff]
  %vm210 = vcmask 261120
  %v212 = vsel %vm210, %v20, 0
  %v215 = vsel %vm210, %v23, 0
  %v218 = vsel %vm210, %v26, 0
  %v221 = vsel %vm210, %v29, 0
  %v224 = vsel %vm210, %v32, 0
  %v227 = vsel %vm210, %v35, 0
  %v230 = vsel %vm210, %v38, 0
  %v233 = vsel %vm210, %v41, 0
  %v236 = vsel %vm210, %v44, 0
  %v239 = vsel %vm210, %v47, 0
  %v242 = vsel %vm210, %v50, 0
  %v245 = vsel %vm210, %v53, 0
  %v248 = vsel %vm210, %v56, 0
  %v251 = vsel %vm210, %v59, 0
  %v254 = vsel %vm210, %v62, 0
  %v257 = vsel %vm210, %v65, 0
  %v260 = vsel %vm210, %v68, 0
  %v263 = vsel %vm210, %v71, 0
  %v266 = vsel %vm210, %v74, 0
  %v269 = vsel %vm210, %v77, 0
  %v272 = vsel %vm210, %v80, 0
  %v275 = vsel %vm210, %v83, 0
  %v278 = vsel %vm210, %v86, 0
  %v281 = vsel %vm210, %v89, 0
  %v284 = vsel %vm210, %v92, 0
  %v287 = vsel %vm210, %v95, 0
  %v290 = vsel %vm210, %v98, 0
  %v293 = vsel %vm210, %v101, 0
  %v296 = vsel %vm210, %v104, 0
  %v299 = vsel %vm210, %v107, 0
  %v302 = vsel %vm210, %v110, 0
  %v305 = vsel %vm210, %v113, 0
  %v308 = vsel %vm210, %v116, 0
  %v311 = vsel %vm210, %v119, 0
  %v314 = vsel %vm210, %v122, 0
  %v317 = vsel %vm210, %v125, 0
  %v320 = vsel %vm210, %v128, 0
  %v323 = vsel %vm210, %v131, 0
  %v326 = vsel %vm210, %v134, 0
  %v329 = vsel %vm210, %v137, 0
  %v332 = vsel %vm210, %v140, 0
  %v335 = vsel %vm210, %v143, 0
  %v338 = vsel %vm210, %v146, 0
  %v341 = vsel %vm210, %v149, 0
  %v344 = vsel %vm210, %v152, 0
  %v347 = vsel %vm210, %v155, 0
  %v350 = vsel %vm210, %v158, 0
  %v353 = vsel %vm210, %v161, 0
  %v356 = vsel %vm210, %v164, 0
  %v359 = vsel %vm210, %v167, 0
  %v362 = vsel %vm210, %v170, 0
  %v365 = vsel %vm210, %v173, 0
  %367 = vmatprep.subr.mxu0 0.0
  %368 = vmatpush1.msra.mxu0 %v174
  %369 = vmatprep.subr.mxu0 0.0
  %370 = vmatpush1.msra.mxu0 %v175
  %371 = vmatprep.subr.mxu0 0.0
  %372 = vmatpush1.msra.mxu0 %v176
  %373 = vmatprep.subr.mxu0 0.0
  %374 = vmatpush1.msra.mxu0 %v177
  %375 = vmatprep.subr.mxu0 0.0
  %376 = vmatpush1.msra.mxu0 %v178
  %377 = vmatprep.subr.mxu0 0.0
  %378 = vmatpush1.msra.mxu0 %v179
  %379 = vmatprep.subr.mxu0 0.0
  %380 = vmatpush1.msra.mxu0 %v180
  %381 = vmatprep.subr.mxu0 0.0
  %382 = vmatpush1.msra.mxu0 %v181
  %383 = vmatprep.subr.mxu0 0.0
  %384 = vmatpush1.msra.mxu0 %v182
  %385 = vmatprep.subr.mxu0 0.0
  %386 = vmatpush1.msra.mxu0 %v183
  %387 = vmatprep.subr.mxu0 0.0
  %388 = vmatpush1.msra.mxu0 %v184
  %389 = vmatprep.subr.mxu0 0.0
  %390 = vmatpush1.msra.mxu0 %v185
  %391 = vmatprep.subr.mxu0 0.0
  %392 = vmatpush1.msra.mxu0 %v186
  %393 = vmatprep.subr.mxu0 0.0
  %394 = vmatpush1.msra.mxu0 %v187
  %395 = vmatprep.subr.mxu0 0.0
  %396 = vmatpush1.msra.mxu0 %v188
  %397 = vmatprep.subr.mxu0 0.0
  %398 = vmatpush1.msra.mxu0 %v189
  %399 = vmatprep.subr.mxu0 0.0
  %400 = vmatpush1.msra.mxu0 %v190
  %401 = vmatprep.subr.mxu0 0.0
  %402 = vmatpush1.msra.mxu0 %v191
  %403 = vmatprep.subr.mxu0 0.0
  %404 = vmatpush1.msra.mxu0 %v192
  %405 = vmatprep.subr.mxu0 0.0
  %406 = vmatpush1.msra.mxu0 %v193
  %407 = vmatprep.subr.mxu0 0.0
  %408 = vmatpush1.msra.mxu0 %v194
  %409 = vmatprep.subr.mxu0 0.0
  %410 = vmatpush1.msra.mxu0 %v195
  %411 = vmatprep.subr.mxu0 0.0
  %412 = vmatpush1.msra.mxu0 %v196
  %413 = vmatprep.subr.mxu0 0.0
  %414 = vmatpush1.msra.mxu0 %v197
  %415 = vmatprep.subr.mxu0 0.0
  %416 = vmatpush1.msra.mxu0 %v198
  %417 = vmatprep.subr.mxu0 0.0
  %418 = vmatpush1.msra.mxu0 %v199
  %419 = vmatprep.subr.mxu0 0.0
  %420 = vmatpush1.msra.mxu0 %v200
  %421 = vmatprep.subr.mxu0 0.0
  %422 = vmatpush1.msra.mxu0 %v201
  %423 = vmatprep.subr.mxu0 0.0
  %424 = vmatpush1.msra.mxu0 %v202
  %425 = vmatprep.subr.mxu0 0.0
  %426 = vmatpush1.msra.mxu0 %v203
  %427 = vmatprep.subr.mxu0 0.0
  %428 = vmatpush1.msra.mxu0 %v204
  %429 = vmatprep.subr.mxu0 0.0
  %430 = vmatpush1.msra.mxu0 %v205
  %431 = vmatprep.mubr.f32.mxu0 %v19
  %432 = vmatmul.mubr.f32.gmra.mrb[0].mxu0 %v18
  %v433 = vpop.f32.mrb[0].mxu0
  %v434 = vadd.f32 0.0, %v433
  %v435 = vpop.f32.mrb[0].mxu0
  %436 = vmatprep.mubr.f32.mxu0 %v22
  %437 = vmatmul.mubr.f32.gmra.mrb[0].mxu0 %v21
  %v438 = vpop.f32.mrb[0].mxu0
  %v439 = vadd.f32 0.0, %v438
  %v440 = vpop.f32.mrb[0].mxu0
  %441 = vmatprep.mubr.f32.mxu0 %v25
  %442 = vmatmul.mubr.f32.gmra.mrb[0].mxu0 %v24
  %v443 = vpop.f32.mrb[0].mxu0
  %v444 = vadd.f32 0.0, %v443
  %v445 = vpop.f32.mrb[0].mxu0
  %446 = vmatprep.mubr.f32.mxu0 %v28
  %447 = vmatmul.mubr.f32.gmra.mrb[0].mxu0 %v27
  %v448 = vpop.f32.mrb[0].mxu0
  %v449 = vadd.f32 0.0, %v448
  %v450 = vpop.f32.mrb[0].mxu0
  %451 = vmatprep.mubr.f32.mxu0 %v31
  %452 = vmatmul.mubr.f32.gmra.mrb[0].mxu0 %v30
  %v453 = vpop.f32.mrb[0].mxu0
  %v454 = vadd.f32 0.0, %v453
  %v455 = vpop.f32.mrb[0].mxu0
  %456 = vmatprep.mubr.f32.mxu0 %v34
  %457 = vmatmul.mubr.f32.gmra.mrb[0].mxu0 %v33
  %v458 = vpop.f32.mrb[0].mxu0
  %v459 = vadd.f32 0.0, %v458
  %v460 = vpop.f32.mrb[0].mxu0
  %461 = vmatprep.mubr.f32.mxu0 %v37
  %462 = vmatmul.mubr.f32.gmra.mrb[0].mxu0 %v36
  %v463 = vpop.f32.mrb[0].mxu0
  %v464 = vadd.f32 0.0, %v463
  %v465 = vpop.f32.mrb[0].mxu0
  %466 = vmatprep.mubr.f32.mxu0 %v40
  %467 = vmatmul.mubr.f32.gmra.mrb[0].mxu0 %v39
  %v468 = vpop.f32.mrb[0].mxu0
  %v469 = vadd.f32 0.0, %v468
  %v470 = vpop.f32.mrb[0].mxu0
  %471 = vmatprep.mubr.f32.mxu0 %v43
  %472 = vmatmul.mubr.f32.gmra.mrb[0].mxu0 %v42
  %v473 = vpop.f32.mrb[0].mxu0
  %v474 = vadd.f32 0.0, %v473
  %v475 = vpop.f32.mrb[0].mxu0
  %476 = vmatprep.mubr.f32.mxu0 %v46
  %477 = vmatmul.mubr.f32.gmra.mrb[0].mxu0 %v45
  %v478 = vpop.f32.mrb[0].mxu0
  %v479 = vadd.f32 0.0, %v478
  %v480 = vpop.f32.mrb[0].mxu0
  %481 = vmatprep.mubr.f32.mxu0 %v49
  %482 = vmatmul.mubr.f32.gmra.mrb[0].mxu0 %v48
  %v483 = vpop.f32.mrb[0].mxu0
  %v484 = vadd.f32 0.0, %v483
  %v485 = vpop.f32.mrb[0].mxu0
  %486 = vmatprep.mubr.f32.mxu0 %v52
  %487 = vmatmul.mubr.f32.gmra.mrb[0].mxu0 %v51
  %v488 = vpop.f32.mrb[0].mxu0
  %v489 = vadd.f32 0.0, %v488
  %v490 = vpop.f32.mrb[0].mxu0
  %491 = vmatprep.mubr.f32.mxu0 %v55
  %492 = vmatmul.mubr.f32.gmra.mrb[0].mxu0 %v54
  %v493 = vpop.f32.mrb[0].mxu0
  %v494 = vadd.f32 0.0, %v493
  %v495 = vpop.f32.mrb[0].mxu0
  %496 = vmatprep.mubr.f32.mxu0 %v58
  %497 = vmatmul.mubr.f32.gmra.mrb[0].mxu0 %v57
  %v498 = vpop.f32.mrb[0].mxu0
  %v499 = vadd.f32 0.0, %v498
  %v500 = vpop.f32.mrb[0].mxu0
  %501 = vmatprep.mubr.f32.mxu0 %v61
  %502 = vmatmul.mubr.f32.gmra.mrb[0].mxu0 %v60
  %v503 = vpop.f32.mrb[0].mxu0
  %v504 = vadd.f32 0.0, %v503
  %v505 = vpop.f32.mrb[0].mxu0
  %506 = vmatprep.mubr.f32.mxu0 %v64
  %507 = vmatmul.mubr.f32.gmra.mrb[0].mxu0 %v63
  %v508 = vpop.f32.mrb[0].mxu0
  %v509 = vadd.f32 0.0, %v508
  %v510 = vpop.f32.mrb[0].mxu0
  %511 = vmatprep.mubr.f32.mxu0 %v67
  %512 = vmatmul.mubr.f32.gmra.mrb[0].mxu0 %v66
  %v513 = vpop.f32.mrb[0].mxu0
  %v514 = vadd.f32 0.0, %v513
  %v515 = vpop.f32.mrb[0].mxu0
  %516 = vmatprep.mubr.f32.mxu0 %v70
  %517 = vmatmul.mubr.f32.gmra.mrb[0].mxu0 %v69
  %v518 = vpop.f32.mrb[0].mxu0
  %v519 = vadd.f32 0.0, %v518
  %v520 = vpop.f32.mrb[0].mxu0
  %521 = vmatprep.mubr.f32.mxu0 %v73
  %522 = vmatmul.mubr.f32.gmra.mrb[0].mxu0 %v72
  %v523 = vpop.f32.mrb[0].mxu0
  %v524 = vadd.f32 0.0, %v523
  %v525 = vpop.f32.mrb[0].mxu0
  %526 = vmatprep.mubr.f32.mxu0 %v76
  %527 = vmatmul.mubr.f32.gmra.mrb[0].mxu0 %v75
  %v528 = vpop.f32.mrb[0].mxu0
  %v529 = vadd.f32 0.0, %v528
  %v530 = vpop.f32.mrb[0].mxu0
  %531 = vmatprep.mubr.f32.mxu0 %v79
  %532 = vmatmul.mubr.f32.gmra.mrb[0].mxu0 %v78
  %v533 = vpop.f32.mrb[0].mxu0
  %v534 = vadd.f32 0.0, %v533
  %v535 = vpop.f32.mrb[0].mxu0
  %536 = vmatprep.mubr.f32.mxu0 %v82
  %537 = vmatmul.mubr.f32.gmra.mrb[0].mxu0 %v81
  %v538 = vpop.f32.mrb[0].mxu0
  %v539 = vadd.f32 0.0, %v538
  %v540 = vpop.f32.mrb[0].mxu0
  %541 = vmatprep.mubr.f32.mxu0 %v85
  %542 = vmatmul.mubr.f32.gmra.mrb[0].mxu0 %v84
  %v543 = vpop.f32.mrb[0].mxu0
  %v544 = vadd.f32 0.0, %v543
  %v545 = vpop.f32.mrb[0].mxu0
  %546 = vmatprep.mubr.f32.mxu0 %v88
  %547 = vmatmul.mubr.f32.gmra.mrb[0].mxu0 %v87
  %v548 = vpop.f32.mrb[0].mxu0
  %v549 = vadd.f32 0.0, %v548
  %v550 = vpop.f32.mrb[0].mxu0
  %551 = vmatprep.mubr.f32.mxu0 %v91
  %552 = vmatmul.mubr.f32.gmra.mrb[0].mxu0 %v90
  %v553 = vpop.f32.mrb[0].mxu0
  %v554 = vadd.f32 0.0, %v553
  %v555 = vpop.f32.mrb[0].mxu0
  %556 = vmatprep.mubr.f32.mxu0 %v94
  %557 = vmatmul.mubr.f32.gmra.mrb[0].mxu0 %v93
  %v558 = vpop.f32.mrb[0].mxu0
  %v559 = vadd.f32 0.0, %v558
  %v560 = vpop.f32.mrb[0].mxu0
  %561 = vmatprep.mubr.f32.mxu0 %v97
  %562 = vmatmul.mubr.f32.gmra.mrb[0].mxu0 %v96
  %v563 = vpop.f32.mrb[0].mxu0
  %v564 = vadd.f32 0.0, %v563
  %v565 = vpop.f32.mrb[0].mxu0
  %566 = vmatprep.mubr.f32.mxu0 %v100
  %567 = vmatmul.mubr.f32.gmra.mrb[0].mxu0 %v99
  %v568 = vpop.f32.mrb[0].mxu0
  %v569 = vadd.f32 0.0, %v568
  %v570 = vpop.f32.mrb[0].mxu0
  %571 = vmatprep.mubr.f32.mxu0 %v103
  %572 = vmatmul.mubr.f32.gmra.mrb[0].mxu0 %v102
  %v573 = vpop.f32.mrb[0].mxu0
  %v574 = vadd.f32 0.0, %v573
  %v575 = vpop.f32.mrb[0].mxu0
  %576 = vmatprep.mubr.f32.mxu0 %v106
  %577 = vmatmul.mubr.f32.gmra.mrb[0].mxu0 %v105
  %v578 = vpop.f32.mrb[0].mxu0
  %v579 = vadd.f32 0.0, %v578
  %v580 = vpop.f32.mrb[0].mxu0
  %581 = vmatprep.mubr.f32.mxu0 %v109
  %582 = vmatmul.mubr.f32.gmra.mrb[0].mxu0 %v108
  %v583 = vpop.f32.mrb[0].mxu0
  %v584 = vadd.f32 0.0, %v583
  %v585 = vpop.f32.mrb[0].mxu0
  %586 = vmatprep.mubr.f32.mxu0 %v112
  %587 = vmatmul.mubr.f32.gmra.mrb[0].mxu0 %v111
  %v588 = vpop.f32.mrb[0].mxu0
  %v589 = vadd.f32 0.0, %v588
  %v590 = vpop.f32.mrb[0].mxu0
  %591 = vmatprep.mubr.f32.mxu0 %v115
  %592 = vmatmul.mubr.f32.gmra.mrb[0].mxu0 %v114
  %v593 = vpop.f32.mrb[0].mxu0
  %v594 = vadd.f32 0.0, %v593
  %v595 = vpop.f32.mrb[0].mxu0
  %596 = vmatprep.mubr.f32.mxu0 %v118
  %597 = vmatmul.mubr.f32.gmra.mrb[0].mxu0 %v117
  %v598 = vpop.f32.mrb[0].mxu0
  %v599 = vadd.f32 0.0, %v598
  %v600 = vpop.f32.mrb[0].mxu0
  %601 = vmatprep.mubr.f32.mxu0 %v121
  %602 = vmatmul.mubr.f32.gmra.mrb[0].mxu0 %v120
  %v603 = vpop.f32.mrb[0].mxu0
  %v604 = vadd.f32 0.0, %v603
  %v605 = vpop.f32.mrb[0].mxu0
  %606 = vmatprep.mubr.f32.mxu0 %v124
  %607 = vmatmul.mubr.f32.gmra.mrb[0].mxu0 %v123
  %v608 = vpop.f32.mrb[0].mxu0
  %v609 = vadd.f32 0.0, %v608
  %v610 = vpop.f32.mrb[0].mxu0
  %611 = vmatprep.mubr.f32.mxu0 %v127
  %612 = vmatmul.mubr.f32.gmra.mrb[0].mxu0 %v126
  %v613 = vpop.f32.mrb[0].mxu0
  %v614 = vadd.f32 0.0, %v613
  %v615 = vpop.f32.mrb[0].mxu0
  %616 = vmatprep.mubr.f32.mxu0 %v130
  %617 = vmatmul.mubr.f32.gmra.mrb[0].mxu0 %v129
  %v618 = vpop.f32.mrb[0].mxu0
  %v619 = vadd.f32 0.0, %v618
  %v620 = vpop.f32.mrb[0].mxu0
  %621 = vmatprep.mubr.f32.mxu0 %v133
  %622 = vmatmul.mubr.f32.gmra.mrb[0].mxu0 %v132
  %v623 = vpop.f32.mrb[0].mxu0
  %v624 = vadd.f32 0.0, %v623
  %v625 = vpop.f32.mrb[0].mxu0
  %626 = vmatprep.mubr.f32.mxu0 %v136
  %627 = vmatmul.mubr.f32.gmra.mrb[0].mxu0 %v135
  %v628 = vpop.f32.mrb[0].mxu0
  %v629 = vadd.f32 0.0, %v628
  %v630 = vpop.f32.mrb[0].mxu0
  %631 = vmatprep.mubr.f32.mxu0 %v139
  %632 = vmatmul.mubr.f32.gmra.mrb[0].mxu0 %v138
  %v633 = vpop.f32.mrb[0].mxu0
  %v634 = vadd.f32 0.0, %v633
  %v635 = vpop.f32.mrb[0].mxu0
  %636 = vmatprep.mubr.f32.mxu0 %v142
  %637 = vmatmul.mubr.f32.gmra.mrb[0].mxu0 %v141
  %v638 = vpop.f32.mrb[0].mxu0
  %v639 = vadd.f32 0.0, %v638
  %v640 = vpop.f32.mrb[0].mxu0
  %641 = vmatprep.mubr.f32.mxu0 %v145
  %642 = vmatmul.mubr.f32.gmra.mrb[0].mxu0 %v144
  %v643 = vpop.f32.mrb[0].mxu0
  %v644 = vadd.f32 0.0, %v643
  %v645 = vpop.f32.mrb[0].mxu0
  %646 = vmatprep.mubr.f32.mxu0 %v148
  %647 = vmatmul.mubr.f32.gmra.mrb[0].mxu0 %v147
  %v648 = vpop.f32.mrb[0].mxu0
  %v649 = vadd.f32 0.0, %v648
  %v650 = vpop.f32.mrb[0].mxu0
  %651 = vmatprep.mubr.f32.mxu0 %v151
  %652 = vmatmul.mubr.f32.gmra.mrb[0].mxu0 %v150
  %v653 = vpop.f32.mrb[0].mxu0
  %v654 = vadd.f32 0.0, %v653
  %v655 = vpop.f32.mrb[0].mxu0
  %656 = vmatprep.mubr.f32.mxu0 %v154
  %657 = vmatmul.mubr.f32.gmra.mrb[0].mxu0 %v153
  %v658 = vpop.f32.mrb[0].mxu0
  %v659 = vadd.f32 0.0, %v658
  %v660 = vpop.f32.mrb[0].mxu0
  %661 = vmatprep.mubr.f32.mxu0 %v157
  %662 = vmatmul.mubr.f32.gmra.mrb[0].mxu0 %v156
  %v663 = vpop.f32.mrb[0].mxu0
  %v664 = vadd.f32 0.0, %v663
  %v665 = vpop.f32.mrb[0].mxu0
  %666 = vmatprep.mubr.f32.mxu0 %v160
  %667 = vmatmul.mubr.f32.gmra.mrb[0].mxu0 %v159
  %v668 = vpop.f32.mrb[0].mxu0
  %v669 = vadd.f32 0.0, %v668
  %v670 = vpop.f32.mrb[0].mxu0
  %671 = vmatprep.mubr.f32.mxu0 %v163
  %672 = vmatmul.mubr.f32.gmra.mrb[0].mxu0 %v162
  %v673 = vpop.f32.mrb[0].mxu0
  %v674 = vadd.f32 0.0, %v673
  %v675 = vpop.f32.mrb[0].mxu0
  %676 = vmatprep.mubr.f32.mxu0 %v166
  %677 = vmatmul.mubr.f32.gmra.mrb[0].mxu0 %v165
  %v678 = vpop.f32.mrb[0].mxu0
  %v679 = vadd.f32 0.0, %v678
  %v680 = vpop.f32.mrb[0].mxu0
  %681 = vmatprep.mubr.f32.mxu0 %v169
  %682 = vmatmul.mubr.f32.gmra.mrb[0].mxu0 %v168
  %v683 = vpop.f32.mrb[0].mxu0
  %v684 = vadd.f32 0.0, %v683
  %v685 = vpop.f32.mrb[0].mxu0
  %686 = vmatprep.mubr.f32.mxu0 %v172
  %687 = vmatmul.mubr.f32.gmra.mrb[0].mxu0 %v171
  %v688 = vpop.f32.mrb[0].mxu0
  %v689 = vadd.f32 0.0, %v688
  %v690 = vpop.f32.mrb[0].mxu0
  %691 = vdwg.mxu0
  %692 = vmatprep.subr.mxu0 0.0
  %693 = vmatpush1.msra.mxu0 %v206
  %694 = vmatprep.subr.mxu0 0.0
  %695 = vmatpush1.msra.mxu0 %v207
  %696 = vmatprep.subr.mxu0 0.0
  %697 = vmatpush1.msra.mxu0 %v208
  %698 = vmatprep.subr.mxu0 0.0
  %699 = vmatpush1.msra.mxu0 %v209
  %700 = vmatprep.subr.mxu0 0.0
  %701 = vmatpush1.msra.mxu0 0.0
  %702 = vmatprep.subr.mxu0 0.0
  %703 = vmatpush1.msra.mxu0 0.0
  %704 = vmatprep.subr.mxu0 0.0
  %705 = vmatpush1.msra.mxu0 0.0
  %706 = vmatprep.subr.mxu0 0.0
  %707 = vmatpush1.msra.mxu0 0.0
  %708 = vmatprep.subr.mxu0 0.0
  %709 = vmatpush1.msra.mxu0 0.0
  %710 = vmatprep.subr.mxu0 0.0
  %711 = vmatpush1.msra.mxu0 0.0
  %712 = vmatprep.subr.mxu0 0.0
  %713 = vmatpush1.msra.mxu0 0.0
  %714 = vmatprep.subr.mxu0 0.0
  %715 = vmatpush1.msra.mxu0 0.0
  %716 = vmatprep.subr.mxu0 0.0
  %717 = vmatpush1.msra.mxu0 0.0
  %718 = vmatprep.subr.mxu0 0.0
  %719 = vmatpush1.msra.mxu0 0.0
  %720 = vmatprep.subr.mxu0 0.0
  %721 = vmatpush1.msra.mxu0 0.0
  %722 = vmatprep.subr.mxu0 0.0
  %723 = vmatpush1.msra.mxu0 0.0
  %724 = vmatprep.subr.mxu0 0.0
  %725 = vmatpush1.msra.mxu0 0.0
  %726 = vmatprep.subr.mxu0 0.0
  %727 = vmatpush1.msra.mxu0 0.0
  %728 = vmatprep.subr.mxu0 0.0
  %729 = vmatpush1.msra.mxu0 0.0
  %730 = vmatprep.subr.mxu0 0.0
  %731 = vmatpush1.msra.mxu0 0.0
  %732 = vmatprep.subr.mxu0 0.0
  %733 = vmatpush1.msra.mxu0 0.0
  %734 = vmatprep.subr.mxu0 0.0
  %735 = vmatpush1.msra.mxu0 0.0
  %736 = vmatprep.subr.mxu0 0.0
  %737 = vmatpush1.msra.mxu0 0.0
  %738 = vmatprep.subr.mxu0 0.0
  %739 = vmatpush1.msra.mxu0 0.0
  %740 = vmatprep.subr.mxu0 0.0
  %741 = vmatpush1.msra.mxu0 0.0
  %742 = vmatprep.subr.mxu0 0.0
  %743 = vmatpush1.msra.mxu0 0.0
  %744 = vmatprep.subr.mxu0 0.0
  %745 = vmatpush1.msra.mxu0 0.0
  %746 = vmatprep.subr.mxu0 0.0
  %747 = vmatpush1.msra.mxu0 0.0
  %748 = vmatprep.subr.mxu0 0.0
  %749 = vmatpush1.msra.mxu0 0.0
  %750 = vmatprep.subr.mxu0 0.0
  %751 = vmatpush1.msra.mxu0 0.0
  %752 = vmatprep.subr.mxu0 0.0
  %753 = vmatpush1.msra.mxu0 0.0
  %754 = vmatprep.subr.mxu0 0.0
  %755 = vmatpush1.msra.mxu0 0.0
  %756 = vmatprep.mubr.f32.mxu0 0.0
  %757 = vmatmul.mubr.f32.gmra.mrb[0].mxu0 %v212
  %v758 = vpop.f32.mrb[0].mxu0
  %v759 = vadd.f32 %v434, %v758
  %v760 = vpop.f32.mrb[0].mxu0
  %761 = vmatprep.mubr.f32.mxu0 0.0
  %762 = vmatmul.mubr.f32.gmra.mrb[0].mxu0 %v215
  %v763 = vpop.f32.mrb[0].mxu0
  %v764 = vadd.f32 %v439, %v763
  %v765 = vpop.f32.mrb[0].mxu0
  %766 = vmatprep.mubr.f32.mxu0 0.0
  %767 = vmatmul.mubr.f32.gmra.mrb[0].mxu0 %v218
  %v768 = vpop.f32.mrb[0].mxu0
  %v769 = vadd.f32 %v444, %v768
  %v770 = vpop.f32.mrb[0].mxu0
  %771 = vmatprep.mubr.f32.mxu0 0.0
  %772 = vmatmul.mubr.f32.gmra.mrb[0].mxu0 %v221
  %v773 = vpop.f32.mrb[0].mxu0
  %v774 = vadd.f32 %v449, %v773
  %v775 = vpop.f32.mrb[0].mxu0
  %776 = vmatprep.mubr.f32.mxu0 0.0
  %777 = vmatmul.mubr.f32.gmra.mrb[0].mxu0 %v224
  %v778 = vpop.f32.mrb[0].mxu0
  %v779 = vadd.f32 %v454, %v778
  %v780 = vpop.f32.mrb[0].mxu0
  %781 = vmatprep.mubr.f32.mxu0 0.0
  %782 = vmatmul.mubr.f32.gmra.mrb[0].mxu0 %v227
  %v783 = vpop.f32.mrb[0].mxu0
  %v784 = vadd.f32 %v459, %v783
  %v785 = vpop.f32.mrb[0].mxu0
  %786 = vmatprep.mubr.f32.mxu0 0.0
  %787 = vmatmul.mubr.f32.gmra.mrb[0].mxu0 %v230
  %v788 = vpop.f32.mrb[0].mxu0
  %v789 = vadd.f32 %v464, %v788
  %v790 = vpop.f32.mrb[0].mxu0
  %791 = vmatprep.mubr.f32.mxu0 0.0
  %792 = vmatmul.mubr.f32.gmra.mrb[0].mxu0 %v233
  %v793 = vpop.f32.mrb[0].mxu0
  %v794 = vadd.f32 %v469, %v793
  %v795 = vpop.f32.mrb[0].mxu0
  %796 = vmatprep.mubr.f32.mxu0 0.0
  %797 = vmatmul.mubr.f32.gmra.mrb[0].mxu0 %v236
  %v798 = vpop.f32.mrb[0].mxu0
  %v799 = vadd.f32 %v474, %v798
  %v800 = vpop.f32.mrb[0].mxu0
  %801 = vmatprep.mubr.f32.mxu0 0.0
  %802 = vmatmul.mubr.f32.gmra.mrb[0].mxu0 %v239
  %v803 = vpop.f32.mrb[0].mxu0
  %v804 = vadd.f32 %v479, %v803
  %v805 = vpop.f32.mrb[0].mxu0
  %806 = vmatprep.mubr.f32.mxu0 0.0
  %807 = vmatmul.mubr.f32.gmra.mrb[0].mxu0 %v242
  %v808 = vpop.f32.mrb[0].mxu0
  %v809 = vadd.f32 %v484, %v808
  %v810 = vpop.f32.mrb[0].mxu0
  %811 = vmatprep.mubr.f32.mxu0 0.0
  %812 = vmatmul.mubr.f32.gmra.mrb[0].mxu0 %v245
  %v813 = vpop.f32.mrb[0].mxu0
  %v814 = vadd.f32 %v489, %v813
  %v815 = vpop.f32.mrb[0].mxu0
  %816 = vmatprep.mubr.f32.mxu0 0.0
  %817 = vmatmul.mubr.f32.gmra.mrb[0].mxu0 %v248
  %v818 = vpop.f32.mrb[0].mxu0
  %v819 = vadd.f32 %v494, %v818
  %v820 = vpop.f32.mrb[0].mxu0
  %821 = vmatprep.mubr.f32.mxu0 0.0
  %822 = vmatmul.mubr.f32.gmra.mrb[0].mxu0 %v251
  %v823 = vpop.f32.mrb[0].mxu0
  %v824 = vadd.f32 %v499, %v823
  %v825 = vpop.f32.mrb[0].mxu0
  %826 = vmatprep.mubr.f32.mxu0 0.0
  %827 = vmatmul.mubr.f32.gmra.mrb[0].mxu0 %v254
  %v828 = vpop.f32.mrb[0].mxu0
  %v829 = vadd.f32 %v504, %v828
  %v830 = vpop.f32.mrb[0].mxu0
  %831 = vmatprep.mubr.f32.mxu0 0.0
  %832 = vmatmul.mubr.f32.gmra.mrb[0].mxu0 %v257
  %v833 = vpop.f32.mrb[0].mxu0
  %v834 = vadd.f32 %v509, %v833
  %v835 = vpop.f32.mrb[0].mxu0
  %836 = vmatprep.mubr.f32.mxu0 0.0
  %837 = vmatmul.mubr.f32.gmra.mrb[0].mxu0 %v260
  %v838 = vpop.f32.mrb[0].mxu0
  %v839 = vadd.f32 %v514, %v838
  %v840 = vpop.f32.mrb[0].mxu0
  %841 = vmatprep.mubr.f32.mxu0 0.0
  %842 = vmatmul.mubr.f32.gmra.mrb[0].mxu0 %v263
  %v843 = vpop.f32.mrb[0].mxu0
  %v844 = vadd.f32 %v519, %v843
  %v845 = vpop.f32.mrb[0].mxu0
  %846 = vmatprep.mubr.f32.mxu0 0.0
  %847 = vmatmul.mubr.f32.gmra.mrb[0].mxu0 %v266
  %v848 = vpop.f32.mrb[0].mxu0
  %v849 = vadd.f32 %v524, %v848
  %v850 = vpop.f32.mrb[0].mxu0
  %851 = vmatprep.mubr.f32.mxu0 0.0
  %852 = vmatmul.mubr.f32.gmra.mrb[0].mxu0 %v269
  %v853 = vpop.f32.mrb[0].mxu0
  %v854 = vadd.f32 %v529, %v853
  %v855 = vpop.f32.mrb[0].mxu0
  %856 = vmatprep.mubr.f32.mxu0 0.0
  %857 = vmatmul.mubr.f32.gmra.mrb[0].mxu0 %v272
  %v858 = vpop.f32.mrb[0].mxu0
  %v859 = vadd.f32 %v534, %v858
  %v860 = vpop.f32.mrb[0].mxu0
  %861 = vmatprep.mubr.f32.mxu0 0.0
  %862 = vmatmul.mubr.f32.gmra.mrb[0].mxu0 %v275
  %v863 = vpop.f32.mrb[0].mxu0
  %v864 = vadd.f32 %v539, %v863
  %v865 = vpop.f32.mrb[0].mxu0
  %866 = vmatprep.mubr.f32.mxu0 0.0
  %867 = vmatmul.mubr.f32.gmra.mrb[0].mxu0 %v278
  %v868 = vpop.f32.mrb[0].mxu0
  %v869 = vadd.f32 %v544, %v868
  %v870 = vpop.f32.mrb[0].mxu0
  %871 = vmatprep.mubr.f32.mxu0 0.0
  %872 = vmatmul.mubr.f32.gmra.mrb[0].mxu0 %v281
  %v873 = vpop.f32.mrb[0].mxu0
  %v874 = vadd.f32 %v549, %v873
  %v875 = vpop.f32.mrb[0].mxu0
  %876 = vmatprep.mubr.f32.mxu0 0.0
  %877 = vmatmul.mubr.f32.gmra.mrb[0].mxu0 %v284
  %v878 = vpop.f32.mrb[0].mxu0
  %v879 = vadd.f32 %v554, %v878
  %v880 = vpop.f32.mrb[0].mxu0
  %881 = vmatprep.mubr.f32.mxu0 0.0
  %882 = vmatmul.mubr.f32.gmra.mrb[0].mxu0 %v287
  %v883 = vpop.f32.mrb[0].mxu0
  %v884 = vadd.f32 %v559, %v883
  %v885 = vpop.f32.mrb[0].mxu0
  %886 = vmatprep.mubr.f32.mxu0 0.0
  %887 = vmatmul.mubr.f32.gmra.mrb[0].mxu0 %v290
  %v888 = vpop.f32.mrb[0].mxu0
  %v889 = vadd.f32 %v564, %v888
  %v890 = vpop.f32.mrb[0].mxu0
  %891 = vmatprep.mubr.f32.mxu0 0.0
  %892 = vmatmul.mubr.f32.gmra.mrb[0].mxu0 %v293
  %v893 = vpop.f32.mrb[0].mxu0
  %v894 = vadd.f32 %v569, %v893
  %v895 = vpop.f32.mrb[0].mxu0
  %896 = vmatprep.mubr.f32.mxu0 0.0
  %897 = vmatmul.mubr.f32.gmra.mrb[0].mxu0 %v296
  %v898 = vpop.f32.mrb[0].mxu0
  %v899 = vadd.f32 %v574, %v898
  %v900 = vpop.f32.mrb[0].mxu0
  %901 = vmatprep.mubr.f32.mxu0 0.0
  %902 = vmatmul.mubr.f32.gmra.mrb[0].mxu0 %v299
  %v903 = vpop.f32.mrb[0].mxu0
  %v904 = vadd.f32 %v579, %v903
  %v905 = vpop.f32.mrb[0].mxu0
  %906 = vmatprep.mubr.f32.mxu0 0.0
  %907 = vmatmul.mubr.f32.gmra.mrb[0].mxu0 %v302
  %v908 = vpop.f32.mrb[0].mxu0
  %v909 = vadd.f32 %v584, %v908
  %v910 = vpop.f32.mrb[0].mxu0
  %911 = vmatprep.mubr.f32.mxu0 0.0
  %912 = vmatmul.mubr.f32.gmra.mrb[0].mxu0 %v305
  %v913 = vpop.f32.mrb[0].mxu0
  %v914 = vadd.f32 %v589, %v913
  %v915 = vpop.f32.mrb[0].mxu0
  %916 = vmatprep.mubr.f32.mxu0 0.0
  %917 = vmatmul.mubr.f32.gmra.mrb[0].mxu0 %v308
  %v918 = vpop.f32.mrb[0].mxu0
  %v919 = vadd.f32 %v594, %v918
  %v920 = vpop.f32.mrb[0].mxu0
  %921 = vmatprep.mubr.f32.mxu0 0.0
  %922 = vmatmul.mubr.f32.gmra.mrb[0].mxu0 %v311
  %v923 = vpop.f32.mrb[0].mxu0
  %v924 = vadd.f32 %v599, %v923
  %v925 = vpop.f32.mrb[0].mxu0
  %926 = vmatprep.mubr.f32.mxu0 0.0
  %927 = vmatmul.mubr.f32.gmra.mrb[0].mxu0 %v314
  %v928 = vpop.f32.mrb[0].mxu0
  %v929 = vadd.f32 %v604, %v928
  %v930 = vpop.f32.mrb[0].mxu0
  %931 = vmatprep.mubr.f32.mxu0 0.0
  %932 = vmatmul.mubr.f32.gmra.mrb[0].mxu0 %v317
  %v933 = vpop.f32.mrb[0].mxu0
  %v934 = vadd.f32 %v609, %v933
  %v935 = vpop.f32.mrb[0].mxu0
  %936 = vmatprep.mubr.f32.mxu0 0.0
  %937 = vmatmul.mubr.f32.gmra.mrb[0].mxu0 %v320
  %v938 = vpop.f32.mrb[0].mxu0
  %v939 = vadd.f32 %v614, %v938
  %v940 = vpop.f32.mrb[0].mxu0
  %941 = vmatprep.mubr.f32.mxu0 0.0
  %942 = vmatmul.mubr.f32.gmra.mrb[0].mxu0 %v323
  %v943 = vpop.f32.mrb[0].mxu0
  %v944 = vadd.f32 %v619, %v943
  %v945 = vpop.f32.mrb[0].mxu0
  %946 = vmatprep.mubr.f32.mxu0 0.0
  %947 = vmatmul.mubr.f32.gmra.mrb[0].mxu0 %v326
  %v948 = vpop.f32.mrb[0].mxu0
  %v949 = vadd.f32 %v624, %v948
  %v950 = vpop.f32.mrb[0].mxu0
  %951 = vmatprep.mubr.f32.mxu0 0.0
  %952 = vmatmul.mubr.f32.gmra.mrb[0].mxu0 %v329
  %v953 = vpop.f32.mrb[0].mxu0
  %v954 = vadd.f32 %v629, %v953
  %v955 = vpop.f32.mrb[0].mxu0
  %956 = vmatprep.mubr.f32.mxu0 0.0
  %957 = vmatmul.mubr.f32.gmra.mrb[0].mxu0 %v332
  %v958 = vpop.f32.mrb[0].mxu0
  %v959 = vadd.f32 %v634, %v958
  %v960 = vpop.f32.mrb[0].mxu0
  %961 = vmatprep.mubr.f32.mxu0 0.0
  %962 = vmatmul.mubr.f32.gmra.mrb[0].mxu0 %v335
  %v963 = vpop.f32.mrb[0].mxu0
  %v964 = vadd.f32 %v639, %v963
  %v965 = vpop.f32.mrb[0].mxu0
  %966 = vmatprep.mubr.f32.mxu0 0.0
  %967 = vmatmul.mubr.f32.gmra.mrb[0].mxu0 %v338
  %v968 = vpop.f32.mrb[0].mxu0
  %v969 = vadd.f32 %v644, %v968
  %v970 = vpop.f32.mrb[0].mxu0
  %971 = vmatprep.mubr.f32.mxu0 0.0
  %972 = vmatmul.mubr.f32.gmra.mrb[0].mxu0 %v341
  %v973 = vpop.f32.mrb[0].mxu0
  %v974 = vadd.f32 %v649, %v973
  %v975 = vpop.f32.mrb[0].mxu0
  %976 = vmatprep.mubr.f32.mxu0 0.0
  %977 = vmatmul.mubr.f32.gmra.mrb[0].mxu0 %v344
  %v978 = vpop.f32.mrb[0].mxu0
  %v979 = vadd.f32 %v654, %v978
  %v980 = vpop.f32.mrb[0].mxu0
  %981 = vmatprep.mubr.f32.mxu0 0.0
  %982 = vmatmul.mubr.f32.gmra.mrb[0].mxu0 %v347
  %v983 = vpop.f32.mrb[0].mxu0
  %v984 = vadd.f32 %v659, %v983
  %v985 = vpop.f32.mrb[0].mxu0
  %986 = vmatprep.mubr.f32.mxu0 0.0
  %987 = vmatmul.mubr.f32.gmra.mrb[0].mxu0 %v350
  %v988 = vpop.f32.mrb[0].mxu0
  %v989 = vadd.f32 %v664, %v988
  %v990 = vpop.f32.mrb[0].mxu0
  %991 = vmatprep.mubr.f32.mxu0 0.0
  %992 = vmatmul.mubr.f32.gmra.mrb[0].mxu0 %v353
  %v993 = vpop.f32.mrb[0].mxu0
  %v994 = vadd.f32 %v669, %v993
  %v995 = vpop.f32.mrb[0].mxu0
  %996 = vmatprep.mubr.f32.mxu0 0.0
  %997 = vmatmul.mubr.f32.gmra.mrb[0].mxu0 %v356
  %v998 = vpop.f32.mrb[0].mxu0
  %v999 = vadd.f32 %v674, %v998
  %v1000 = vpop.f32.mrb[0].mxu0
  %1001 = vmatprep.mubr.f32.mxu0 0.0
  %1002 = vmatmul.mubr.f32.gmra.mrb[0].mxu0 %v359
  %v1003 = vpop.f32.mrb[0].mxu0
  %v1004 = vadd.f32 %v679, %v1003
  %v1005 = vpop.f32.mrb[0].mxu0
  %1006 = vmatprep.mubr.f32.mxu0 0.0
  %1007 = vmatmul.mubr.f32.gmra.mrb[0].mxu0 %v362
  %v1008 = vpop.f32.mrb[0].mxu0
  %v1009 = vadd.f32 %v684, %v1008
  %v1010 = vpop.f32.mrb[0].mxu0
  %1011 = vmatprep.mubr.f32.mxu0 0.0
  %1012 = vmatmul.mubr.f32.gmra.mrb[0].mxu0 %v365
  %v1013 = vpop.f32.mrb[0].mxu0
  %v1014 = vadd.f32 %v689, %v1013
  %v1015 = vpop.f32.mrb[0].mxu0
  %1016 = vdwg.mxu0
  %v1017 = vmax.f32 %v759, %v824
  %v1018 = vmax.f32 %v764, %v829
  %v1019 = vmax.f32 %v769, %v834
  %v1020 = vmax.f32 %v774, %v839
  %v1021 = vmax.f32 %v779, %v844
  %v1022 = vmax.f32 %v784, %v849
  %v1023 = vmax.f32 %v789, %v854
  %v1024 = vmax.f32 %v794, %v859
  %v1025 = vmax.f32 %v799, %v864
  %v1026 = vmax.f32 %v804, %v869
  %v1027 = vmax.f32 %v809, %v874
  %v1028 = vmax.f32 %v814, %v879
  %v1029 = vmax.f32 %v819, %v884
  %v1030 = vmax.f32 %v1017, %v889
  %v1031 = vmax.f32 %v1018, %v894
  %v1032 = vmax.f32 %v1019, %v899
  %v1033 = vmax.f32 %v1020, %v904
  %v1034 = vmax.f32 %v1021, %v909
  %v1035 = vmax.f32 %v1022, %v914
  %v1036 = vmax.f32 %v1023, %v919
  %v1037 = vmax.f32 %v1024, %v924
  %v1038 = vmax.f32 %v1025, %v929
  %v1039 = vmax.f32 %v1026, %v934
  %v1040 = vmax.f32 %v1027, %v939
  %v1041 = vmax.f32 %v1028, %v944
  %v1042 = vmax.f32 %v1029, %v949
  %v1043 = vmax.f32 %v1030, %v954
  %v1044 = vmax.f32 %v1031, %v959
  %v1045 = vmax.f32 %v1032, %v964
  %v1046 = vmax.f32 %v1033, %v969
  %v1047 = vmax.f32 %v1034, %v974
  %v1048 = vmax.f32 %v1035, %v979
  %v1049 = vmax.f32 %v1036, %v984
  %v1050 = vmax.f32 %v1037, %v989
  %v1051 = vmax.f32 %v1038, %v994
  %v1052 = vmax.f32 %v1039, %v999
  %v1053 = vmax.f32 %v1040, %v1004
  %v1054 = vmax.f32 %v1041, %v1009
  %v1055 = vmax.f32 %v1042, %v1014
  %v1056 = vld [vmem:[%s3] sm:$0x1]
  %v1058 = vlaneseq
  %v1059 = vshrl.u32 %v1058, 7
  %v1060 = vsub.s32 0, %v1059
  %v1061 = vrot.slane %v1056, %v1060
  %v1063 = vadd.f32 %v1043, %v1061
  %v1064 = vadd.f32 %v1044, %v1061
  %v1065 = vadd.f32 %v1045, %v1061
  %v1066 = vadd.f32 %v1046, %v1061
  %v1067 = vadd.f32 %v1047, %v1061
  %v1068 = vadd.f32 %v1048, %v1061
  %v1069 = vadd.f32 %v1049, %v1061
  %v1070 = vadd.f32 %v1050, %v1061
  %v1071 = vadd.f32 %v1051, %v1061
  %v1072 = vadd.f32 %v1052, %v1061
  %v1073 = vadd.f32 %v1053, %v1061
  %v1074 = vadd.f32 %v1054, %v1061
  %v1075 = vadd.f32 %v1055, %v1061
  %v1076 = vmax.f32 %v1063, 0.0
  %v1077 = vmax.f32 %v1064, 0.0
  %v1078 = vmax.f32 %v1065, 0.0
  %v1079 = vmax.f32 %v1066, 0.0
  %v1080 = vmax.f32 %v1067, 0.0
  %v1081 = vmax.f32 %v1068, 0.0
  %v1082 = vmax.f32 %v1069, 0.0
  %v1083 = vmax.f32 %v1070, 0.0
  %v1084 = vmax.f32 %v1071, 0.0
  %v1085 = vmax.f32 %v1072, 0.0
  %v1086 = vmax.f32 %v1073, 0.0
  %v1087 = vmax.f32 %v1074, 0.0
  %v1088 = vmax.f32 %v1075, 0.0
  %vm1089 = vcmask 523264
  %1090 = vst.msk [vmem:[%s4] sm:$0xff] %vm1089, %v1076
  %1091 = vst.msk [vmem:[%s4 + $0x8] sm:$0xff] %vm1089, %v1077
  %1092 = vst.msk [vmem:[%s4 + $0x10] sm:$0xff] %vm1089, %v1078
  %1093 = vst.msk [vmem:[%s4 + $0x18] sm:$0xff] %vm1089, %v1079
  %1094 = vst.msk [vmem:[%s4 + $0x20] sm:$0xff] %vm1089, %v1080
  %1095 = vst.msk [vmem:[%s4 + $0x28] sm:$0xff] %vm1089, %v1081
  %1096 = vst.msk [vmem:[%s4 + $0x30] sm:$0xff] %vm1089, %v1082
  %1097 = vst.msk [vmem:[%s4 + $0x38] sm:$0xff] %vm1089, %v1083
  %1098 = vst.msk [vmem:[%s4 + $0x40] sm:$0xff] %vm1089, %v1084
  %1099 = vst.msk [vmem:[%s4 + $0x48] sm:$0xff] %vm1089, %v1085
  %1100 = vst.msk [vmem:[%s4 + $0x50] sm:$0xff] %vm1089, %v1086
  %1101 = vst.msk [vmem:[%s4 + $0x58] sm:$0xff] %vm1089, %v1087
  %1102 = vst.msk [vmem:[%s4 + $0x60] sm:$0xff] %vm1089, %v1088
  // Predicated region
  $region18: #{fwd.4} parent=0 // pred_check
    _
  $region19: #{fwd.4} parent=0 // pred_check_branch
    %1104 = sbr.rel (0) target = $region21
  $region20: #{fwd.4} parent=0 // pred_region
    _
  $region21: #{fwd.4} parent=0 // pred_fallthru
    _
  // Predicated region
  $region22: #{fwd.4} parent=0 // pred_check
    _
  $region23: #{fwd.4} parent=0 // pred_check_branch
    %1106 = sbr.rel (0) target = $region25
  $region24: #{fwd.4} parent=0 // pred_region
    _
  $region25: #{fwd.4} parent=0 // pred_fallthru
    _

// kernel: fwd.5
$region0: #{fwd.5}
  #allocation0 [shape = 'u32[]', space=smem, size = 0x4, offset = 0x4, fixed_abs, tag = 'smem constant byte address 0x4 - core index']
  #allocation1 [shape = 'u32[144,128]{1,0:T(1,128)}', space=vmem, size = 0x12000, scoped, tag = 'internal scratch']
  #allocation2 [shape = 's32[1,1]{1,0:T(1,128)S(6)}', space=smem, size = 0x200, scoped, tag = 'scoped memory for fwd.5']
  %s0 = inlined_call_operand.<no memory space> [shape: s32[1,1], index: 0, kind: input, shape index: {}]
  %s1 = inlined_call_operand.vmem [shape: f32[2,3136], index: 1, kind: input, shape index: {}]
  %s2 = inlined_call_operand.vmem [shape: f32[3136,64], index: 2, kind: input, shape index: {}]
  %s3 = inlined_call_operand.vmem [shape: f32[1,64], index: 3, kind: input, shape index: {}]
  %s4 = inlined_call_operand.vmem [shape: f32[64,10], index: 4, kind: input, shape index: {}]
  %s5 = inlined_call_operand.vmem [shape: f32[1,10], index: 5, kind: input, shape index: {}]
  %s6 = inlined_call_operand.hbm [shape: f32[2,10], index: 6, kind: output, shape index: {}]
  %s7 = sld [smem:[#allocation0]]
  $region34: #{fwd.5} parent=0
    _
  %s9 = ssub.s32 1, %s7
  %s10 = scalar_select 0, %s9, %s7
  %11 = sst [smem:[#allocation2]] %s0
  $region1: #{fwd.5} parent=0
    #allocation3 [shape = 'u8[1024]{0}', space=vmem, size = 0x400, scoped, tag = 'output window, operand 0, single buffered']
    #allocation4 [shape = 's32[1]{0}', space=sflag, size = 0x4, scoped, tag = 'scoped memory for fwd.5']
    %12 = vsyncpa [#allocation4], 0
    // Predicated region
    $region2: #{fwd.5} parent=1 // pred_check
      _
    $region3: #{fwd.5} parent=1 // pred_check_branch
      %14 = sbr.rel (0) target = $region5
    $region4: #{fwd.5} parent=1 // pred_region
      _
    $region5: #{fwd.5} parent=1 // pred_fallthru
      _
    // Predicated region
    $region6: #{fwd.5} parent=1 // pred_check
      _
    $region7: #{fwd.5} parent=1 // pred_check_branch
      %16 = sbr.rel (0) target = $region9
    $region8: #{fwd.5} parent=1 // pred_region
      _
    $region9: #{fwd.5} parent=1 // pred_fallthru
      _
    // Predicated region
    $region10: #{fwd.5} parent=1 // pred_check
      _
    $region11: #{fwd.5} parent=1 // pred_check_branch
      %18 = sbr.rel (0) target = $region13
    $region12: #{fwd.5} parent=1 // pred_region
      _
    $region13: #{fwd.5} parent=1 // pred_fallthru
      _
    // Predicated region
    $region14: #{fwd.5} parent=1 // pred_check
      _
    $region15: #{fwd.5} parent=1 // pred_check_branch
      %20 = sbr.rel (0) target = $region17
    $region16: #{fwd.5} parent=1 // pred_region
      _
    $region17: #{fwd.5} parent=1 // pred_fallthru
      _
    // Predicated region
    $region18: #{fwd.5} parent=1 // pred_check
      _
    $region19: #{fwd.5} parent=1 // pred_check_branch
      %22 = sbr.rel (0) target = $region21
    $region20: #{fwd.5} parent=1 // pred_region
      _
    $region21: #{fwd.5} parent=1 // pred_fallthru
      _
    // Predicated region
    $region22: #{fwd.5} parent=1 // pred_check
      _
    $region23: #{fwd.5} parent=1 // pred_check_branch
      %24 = sbr.rel (0) target = $region25
    $region24: #{fwd.5} parent=1 // pred_region
      _
    $region25: #{fwd.5} parent=1 // pred_fallthru
      _
    %v25 = vld [vmem:[%s1] sm:$0xff]
    %v26 = vld [vmem:[%s1 + $0x8] sm:$0xff]
    %v27 = vld [vmem:[%s1 + $0x10] sm:$0xff]
    %v28 = vld [vmem:[%s1 + $0x18] sm:$0xff]
    %v29 = vld [vmem:[%s1 + $0x20] sm:$0xff]
    %v30 = vld [vmem:[%s1 + $0x28] sm:$0xff]
    %v31 = vld [vmem:[%s1 + $0x30] sm:$0x3]
    %v32 = vld [vmem:[%s2] sm:$0xff]
    %v33 = vld [vmem:[%s2 + $0x8] sm:$0xff]
    %v34 = vld [vmem:[%s2 + $0x10] sm:$0xff]
    %v35 = vld [vmem:[%s2 + $0x18] sm:$0xff]
    %v36 = vld [vmem:[%s2 + $0x20] sm:$0xff]
    %v37 = vld [vmem:[%s2 + $0x28] sm:$0xff]
    %v38 = vld [vmem:[%s2 + $0x30] sm:$0xff]
    %v39 = vld [vmem:[%s2 + $0x38] sm:$0xff]
    %v40 = vld [vmem:[%s2 + $0x40] sm:$0xff]
    %v41 = vld [vmem:[%s2 + $0x48] sm:$0xff]
    %v42 = vld [vmem:[%s2 + $0x50] sm:$0xff]
    %v43 = vld [vmem:[%s2 + $0x58] sm:$0xff]
    %v44 = vld [vmem:[%s2 + $0x60] sm:$0xff]
    %v45 = vld [vmem:[%s2 + $0x68] sm:$0xff]
    %v46 = vld [vmem:[%s2 + $0x70] sm:$0xff]
    %v47 = vld [vmem:[%s2 + $0x78] sm:$0xff]
    %v48 = vld [vmem:[%s2 + $0x80] sm:$0xff]
    %v49 = vld [vmem:[%s2 + $0x88] sm:$0xff]
    %v50 = vld [vmem:[%s2 + $0x90] sm:$0xff]
    %v51 = vld [vmem:[%s2 + $0x98] sm:$0xff]
    %v52 = vld [vmem:[%s2 + $0xa0] sm:$0xff]
    %v53 = vld [vmem:[%s2 + $0xa8] sm:$0xff]
    %v54 = vld [vmem:[%s2 + $0xb0] sm:$0xff]
    %v55 = vld [vmem:[%s2 + $0xb8] sm:$0xff]
    %v56 = vld [vmem:[%s2 + $0xc0] sm:$0xff]
    %v57 = vld [vmem:[%s2 + $0xc8] sm:$0xff]
    %v58 = vld [vmem:[%s2 + $0xd0] sm:$0xff]
    %v59 = vld [vmem:[%s2 + $0xd8] sm:$0xff]
    %v60 = vld [vmem:[%s2 + $0xe0] sm:$0xff]
    %v61 = vld [vmem:[%s2 + $0xe8] sm:$0xff]
    %v62 = vld [vmem:[%s2 + $0xf0] sm:$0xff]
    %v63 = vld [vmem:[%s2 + $0xf8] sm:$0xff]
    %v64 = vld [vmem:[%s2 + $0x100] sm:$0xff]
    %v65 = vld [vmem:[%s2 + $0x108] sm:$0xff]
    %v66 = vld [vmem:[%s2 + $0x110] sm:$0xff]
    %v67 = vld [vmem:[%s2 + $0x118] sm:$0xff]
    %v68 = vld [vmem:[%s2 + $0x120] sm:$0xff]
    %v69 = vld [vmem:[%s2 + $0x128] sm:$0xff]
    %v70 = vld [vmem:[%s2 + $0x130] sm:$0xff]
    %v71 = vld [vmem:[%s2 + $0x138] sm:$0xff]
    %v72 = vld [vmem:[%s2 + $0x140] sm:$0xff]
    %v73 = vld [vmem:[%s2 + $0x148] sm:$0xff]
    %v74 = vld [vmem:[%s2 + $0x150] sm:$0xff]
    %v75 = vld [vmem:[%s2 + $0x158] sm:$0xff]
    %v76 = vld [vmem:[%s2 + $0x160] sm:$0xff]
    %v77 = vld [vmem:[%s2 + $0x168] sm:$0xff]
    %v78 = vld [vmem:[%s2 + $0x170] sm:$0xff]
    %v79 = vld [vmem:[%s2 + $0x178] sm:$0xff]
    %v80 = vld [vmem:[%s2 + $0x180] sm:$0xff]
    %v81 = vld [vmem:[%s2 + $0x188] sm:$0xff]
    %v82 = vld [vmem:[%s2 + $0x190] sm:$0xff]
    %v83 = vld [vmem:[%s2 + $0x198] sm:$0xff]
    %v84 = vld [vmem:[%s2 + $0x1a0] sm:$0xff]
    %v85 = vld [vmem:[%s2 + $0x1a8] sm:$0xff]
    %v86 = vld [vmem:[%s2 + $0x1b0] sm:$0xff]
    %v87 = vld [vmem:[%s2 + $0x1b8] sm:$0xff]
    %v88 = vld [vmem:[%s2 + $0x1c0] sm:$0xff]
    %v89 = vld [vmem:[%s2 + $0x1c8] sm:$0xff]
    %v90 = vld [vmem:[%s2 + $0x1d0] sm:$0xff]
    %v91 = vld [vmem:[%s2 + $0x1d8] sm:$0xff]
    %v92 = vld [vmem:[%s2 + $0x1e0] sm:$0xff]
    %v93 = vld [vmem:[%s2 + $0x1e8] sm:$0xff]
    %v94 = vld [vmem:[%s2 + $0x1f0] sm:$0xff]
    %v95 = vld [vmem:[%s2 + $0x1f8] sm:$0xff]
    %v96 = vld [vmem:[%s2 + $0x200] sm:$0xff]
    %v97 = vld [vmem:[%s2 + $0x208] sm:$0xff]
    %v98 = vld [vmem:[%s2 + $0x210] sm:$0xff]
    %v99 = vld [vmem:[%s2 + $0x218] sm:$0xff]
    %v100 = vld [vmem:[%s2 + $0x220] sm:$0xff]
    %v101 = vld [vmem:[%s2 + $0x228] sm:$0xff]
    %v102 = vld [vmem:[%s2 + $0x230] sm:$0xff]
    %v103 = vld [vmem:[%s2 + $0x238] sm:$0xff]
    %v104 = vld [vmem:[%s2 + $0x240] sm:$0xff]
    %v105 = vld [vmem:[%s2 + $0x248] sm:$0xff]
    %v106 = vld [vmem:[%s2 + $0x250] sm:$0xff]
    %v107 = vld [vmem:[%s2 + $0x258] sm:$0xff]
    %v108 = vld [vmem:[%s2 + $0x260] sm:$0xff]
    %v109 = vld [vmem:[%s2 + $0x268] sm:$0xff]
    %v110 = vld [vmem:[%s2 + $0x270] sm:$0xff]
    %v111 = vld [vmem:[%s2 + $0x278] sm:$0xff]
    %v112 = vld [vmem:[%s2 + $0x280] sm:$0xff]
    %v113 = vld [vmem:[%s2 + $0x288] sm:$0xff]
    %v114 = vld [vmem:[%s2 + $0x290] sm:$0xff]
    %v115 = vld [vmem:[%s2 + $0x298] sm:$0xff]
    %v116 = vld [vmem:[%s2 + $0x2a0] sm:$0xff]
    %v117 = vld [vmem:[%s2 + $0x2a8] sm:$0xff]
    %v118 = vld [vmem:[%s2 + $0x2b0] sm:$0xff]
    %v119 = vld [vmem:[%s2 + $0x2b8] sm:$0xff]
    %v120 = vld [vmem:[%s2 + $0x2c0] sm:$0xff]
    %v121 = vld [vmem:[%s2 + $0x2c8] sm:$0xff]
    %v122 = vld [vmem:[%s2 + $0x2d0] sm:$0xff]
    %v123 = vld [vmem:[%s2 + $0x2d8] sm:$0xff]
    %v124 = vld [vmem:[%s2 + $0x2e0] sm:$0xff]
    %v125 = vld [vmem:[%s2 + $0x2e8] sm:$0xff]
    %v126 = vld [vmem:[%s2 + $0x2f0] sm:$0xff]
    %v127 = vld [vmem:[%s2 + $0x2f8] sm:$0xff]
    %v128 = vld [vmem:[%s2 + $0x300] sm:$0xff]
    %v129 = vld [vmem:[%s2 + $0x308] sm:$0xff]
    %v130 = vld [vmem:[%s2 + $0x310] sm:$0xff]
    %v131 = vld [vmem:[%s2 + $0x318] sm:$0xff]
    %v132 = vld [vmem:[%s2 + $0x320] sm:$0xff]
    %v133 = vld [vmem:[%s2 + $0x328] sm:$0xff]
    %v134 = vld [vmem:[%s2 + $0x330] sm:$0xff]
    %v135 = vld [vmem:[%s2 + $0x338] sm:$0xff]
    %v136 = vld [vmem:[%s2 + $0x340] sm:$0xff]
    %v137 = vld [vmem:[%s2 + $0x348] sm:$0xff]
    %v138 = vld [vmem:[%s2 + $0x350] sm:$0xff]
    %v139 = vld [vmem:[%s2 + $0x358] sm:$0xff]
    %v140 = vld [vmem:[%s2 + $0x360] sm:$0xff]
    %v141 = vld [vmem:[%s2 + $0x368] sm:$0xff]
    %v142 = vld [vmem:[%s2 + $0x370] sm:$0xff]
    %v143 = vld [vmem:[%s2 + $0x378] sm:$0xff]
    %v144 = vld [vmem:[%s2 + $0x380] sm:$0xff]
    %v145 = vld [vmem:[%s2 + $0x388] sm:$0xff]
    %v146 = vld [vmem:[%s2 + $0x390] sm:$0xff]
    %v147 = vld [vmem:[%s2 + $0x398] sm:$0xff]
    %v148 = vld [vmem:[%s2 + $0x3a0] sm:$0xff]
    %v149 = vld [vmem:[%s2 + $0x3a8] sm:$0xff]
    %v150 = vld [vmem:[%s2 + $0x3b0] sm:$0xff]
    %v151 = vld [vmem:[%s2 + $0x3b8] sm:$0xff]
    %v152 = vld [vmem:[%s2 + $0x3c0] sm:$0xff]
    %v153 = vld [vmem:[%s2 + $0x3c8] sm:$0xff]
    %v154 = vld [vmem:[%s2 + $0x3d0] sm:$0xff]
    %v155 = vld [vmem:[%s2 + $0x3d8] sm:$0xff]
    %v156 = vld [vmem:[%s2 + $0x3e0] sm:$0xff]
    %v157 = vld [vmem:[%s2 + $0x3e8] sm:$0xff]
    %v158 = vld [vmem:[%s2 + $0x3f0] sm:$0xff]
    %v159 = vld [vmem:[%s2 + $0x3f8] sm:$0xff]
    %v160 = vld [vmem:[%s2 + $0x400] sm:$0xff]
    %v161 = vld [vmem:[%s2 + $0x408] sm:$0xff]
    %v162 = vld [vmem:[%s2 + $0x410] sm:$0xff]
    %v163 = vld [vmem:[%s2 + $0x418] sm:$0xff]
    %v164 = vld [vmem:[%s2 + $0x420] sm:$0xff]
    %v165 = vld [vmem:[%s2 + $0x428] sm:$0xff]
    %v166 = vld [vmem:[%s2 + $0x430] sm:$0xff]
    %v167 = vld [vmem:[%s2 + $0x438] sm:$0xff]
    %v168 = vld [vmem:[%s2 + $0x440] sm:$0xff]
    %v169 = vld [vmem:[%s2 + $0x448] sm:$0xff]
    %v170 = vld [vmem:[%s2 + $0x450] sm:$0xff]
    %v171 = vld [vmem:[%s2 + $0x458] sm:$0xff]
    %v172 = vld [vmem:[%s2 + $0x460] sm:$0xff]
    %v173 = vld [vmem:[%s2 + $0x468] sm:$0xff]
    %v174 = vld [vmem:[%s2 + $0x470] sm:$0xff]
    %v175 = vld [vmem:[%s2 + $0x478] sm:$0xff]
    %v176 = vld [vmem:[%s2 + $0x480] sm:$0xff]
    %v177 = vld [vmem:[%s2 + $0x488] sm:$0xff]
    %v178 = vld [vmem:[%s2 + $0x490] sm:$0xff]
    %v179 = vld [vmem:[%s2 + $0x498] sm:$0xff]
    %v180 = vld [vmem:[%s2 + $0x4a0] sm:$0xff]
    %v181 = vld [vmem:[%s2 + $0x4a8] sm:$0xff]
    %v182 = vld [vmem:[%s2 + $0x4b0] sm:$0xff]
    %v183 = vld [vmem:[%s2 + $0x4b8] sm:$0xff]
    %v184 = vld [vmem:[%s2 + $0x4c0] sm:$0xff]
    %v185 = vld [vmem:[%s2 + $0x4c8] sm:$0xff]
    %v186 = vld [vmem:[%s2 + $0x4d0] sm:$0xff]
    %v187 = vld [vmem:[%s2 + $0x4d8] sm:$0xff]
    %v188 = vld [vmem:[%s2 + $0x4e0] sm:$0xff]
    %v189 = vld [vmem:[%s2 + $0x4e8] sm:$0xff]
    %v190 = vld [vmem:[%s2 + $0x4f0] sm:$0xff]
    %v191 = vld [vmem:[%s2 + $0x4f8] sm:$0xff]
    %v192 = vld [vmem:[%s2 + $0x500] sm:$0xff]
    %v193 = vld [vmem:[%s2 + $0x508] sm:$0xff]
    %v194 = vld [vmem:[%s2 + $0x510] sm:$0xff]
    %v195 = vld [vmem:[%s2 + $0x518] sm:$0xff]
    %v196 = vld [vmem:[%s2 + $0x520] sm:$0xff]
    %v197 = vld [vmem:[%s2 + $0x528] sm:$0xff]
    %v198 = vld [vmem:[%s2 + $0x530] sm:$0xff]
    %v199 = vld [vmem:[%s2 + $0x538] sm:$0xff]
    %v200 = vld [vmem:[%s2 + $0x540] sm:$0xff]
    %v201 = vld [vmem:[%s2 + $0x548] sm:$0xff]
    %v202 = vld [vmem:[%s2 + $0x550] sm:$0xff]
    %v203 = vld [vmem:[%s2 + $0x558] sm:$0xff]
    %v204 = vld [vmem:[%s2 + $0x560] sm:$0xff]
    %v205 = vld [vmem:[%s2 + $0x568] sm:$0xff]
    %v206 = vld [vmem:[%s2 + $0x570] sm:$0xff]
    %v207 = vld [vmem:[%s2 + $0x578] sm:$0xff]
    %v208 = vld [vmem:[%s2 + $0x580] sm:$0xff]
    %v209 = vld [vmem:[%s2 + $0x588] sm:$0xff]
    %v210 = vld [vmem:[%s2 + $0x590] sm:$0xff]
    %v211 = vld [vmem:[%s2 + $0x598] sm:$0xff]
    %v212 = vld [vmem:[%s2 + $0x5a0] sm:$0xff]
    %v213 = vld [vmem:[%s2 + $0x5a8] sm:$0xff]
    %v214 = vld [vmem:[%s2 + $0x5b0] sm:$0xff]
    %v215 = vld [vmem:[%s2 + $0x5b8] sm:$0xff]
    %v216 = vld [vmem:[%s2 + $0x5c0] sm:$0xff]
    %v217 = vld [vmem:[%s2 + $0x5c8] sm:$0xff]
    %v218 = vld [vmem:[%s2 + $0x5d0] sm:$0xff]
    %v219 = vld [vmem:[%s2 + $0x5d8] sm:$0xff]
    %v220 = vld [vmem:[%s2 + $0x5e0] sm:$0xff]
    %v221 = vld [vmem:[%s2 + $0x5e8] sm:$0xff]
    %v222 = vld [vmem:[%s2 + $0x5f0] sm:$0xff]
    %v223 = vld [vmem:[%s2 + $0x5f8] sm:$0xff]
    %v224 = vld [vmem:[%s2 + $0x600] sm:$0xff]
    %v225 = vld [vmem:[%s2 + $0x608] sm:$0xff]
    %v226 = vld [vmem:[%s2 + $0x610] sm:$0xff]
    %v227 = vld [vmem:[%s2 + $0x618] sm:$0xff]
    %v228 = vld [vmem:[%s2 + $0x620] sm:$0xff]
    %v229 = vld [vmem:[%s2 + $0x628] sm:$0xff]
    %v230 = vld [vmem:[%s2 + $0x630] sm:$0xff]
    %v231 = vld [vmem:[%s2 + $0x638] sm:$0xff]
    %v232 = vld [vmem:[%s2 + $0x640] sm:$0xff]
    %v233 = vld [vmem:[%s2 + $0x648] sm:$0xff]
    %v234 = vld [vmem:[%s2 + $0x650] sm:$0xff]
    %v235 = vld [vmem:[%s2 + $0x658] sm:$0xff]
    %v236 = vld [vmem:[%s2 + $0x660] sm:$0xff]
    %v237 = vld [vmem:[%s2 + $0x668] sm:$0xff]
    %v238 = vld [vmem:[%s2 + $0x670] sm:$0xff]
    %v239 = vld [vmem:[%s2 + $0x678] sm:$0xff]
    %v240 = vld [vmem:[%s2 + $0x680] sm:$0xff]
    %v241 = vld [vmem:[%s2 + $0x688] sm:$0xff]
    %v242 = vld [vmem:[%s2 + $0x690] sm:$0xff]
    %v243 = vld [vmem:[%s2 + $0x698] sm:$0xff]
    %v244 = vld [vmem:[%s2 + $0x6a0] sm:$0xff]
    %v245 = vld [vmem:[%s2 + $0x6a8] sm:$0xff]
    %v246 = vld [vmem:[%s2 + $0x6b0] sm:$0xff]
    %v247 = vld [vmem:[%s2 + $0x6b8] sm:$0xff]
    %v248 = vld [vmem:[%s2 + $0x6c0] sm:$0xff]
    %v249 = vld [vmem:[%s2 + $0x6c8] sm:$0xff]
    %v250 = vld [vmem:[%s2 + $0x6d0] sm:$0xff]
    %v251 = vld [vmem:[%s2 + $0x6d8] sm:$0xff]
    %v252 = vld [vmem:[%s2 + $0x6e0] sm:$0xff]
    %v253 = vld [vmem:[%s2 + $0x6e8] sm:$0xff]
    %v254 = vld [vmem:[%s2 + $0x6f0] sm:$0xff]
    %v255 = vld [vmem:[%s2 + $0x6f8] sm:$0xff]
    %v256 = vld [vmem:[%s2 + $0x700] sm:$0xff]
    %v257 = vld [vmem:[%s2 + $0x708] sm:$0xff]
    %v258 = vld [vmem:[%s2 + $0x710] sm:$0xff]
    %v259 = vld [vmem:[%s2 + $0x718] sm:$0xff]
    %v260 = vld [vmem:[%s2 + $0x720] sm:$0xff]
    %v261 = vld [vmem:[%s2 + $0x728] sm:$0xff]
    %v262 = vld [vmem:[%s2 + $0x730] sm:$0xff]
    %v263 = vld [vmem:[%s2 + $0x738] sm:$0xff]
    %v264 = vld [vmem:[%s2 + $0x740] sm:$0xff]
    %v265 = vld [vmem:[%s2 + $0x748] sm:$0xff]
    %v266 = vld [vmem:[%s2 + $0x750] sm:$0xff]
    %v267 = vld [vmem:[%s2 + $0x758] sm:$0xff]
    %v268 = vld [vmem:[%s2 + $0x760] sm:$0xff]
    %v269 = vld [vmem:[%s2 + $0x768] sm:$0xff]
    %v270 = vld [vmem:[%s2 + $0x770] sm:$0xff]
    %v271 = vld [vmem:[%s2 + $0x778] sm:$0xff]
    %v272 = vld [vmem:[%s2 + $0x780] sm:$0xff]
    %v273 = vld [vmem:[%s2 + $0x788] sm:$0xff]
    %v274 = vld [vmem:[%s2 + $0x790] sm:$0xff]
    %v275 = vld [vmem:[%s2 + $0x798] sm:$0xff]
    %v276 = vld [vmem:[%s2 + $0x7a0] sm:$0xff]
    %v277 = vld [vmem:[%s2 + $0x7a8] sm:$0xff]
    %v278 = vld [vmem:[%s2 + $0x7b0] sm:$0xff]
    %v279 = vld [vmem:[%s2 + $0x7b8] sm:$0xff]
    %v280 = vld [vmem:[%s2 + $0x7c0] sm:$0xff]
    %v281 = vld [vmem:[%s2 + $0x7c8] sm:$0xff]
    %v282 = vld [vmem:[%s2 + $0x7d0] sm:$0xff]
    %v283 = vld [vmem:[%s2 + $0x7d8] sm:$0xff]
    %v284 = vld [vmem:[%s2 + $0x7e0] sm:$0xff]
    %v285 = vld [vmem:[%s2 + $0x7e8] sm:$0xff]
    %v286 = vld [vmem:[%s2 + $0x7f0] sm:$0xff]
    %v287 = vld [vmem:[%s2 + $0x7f8] sm:$0xff]
    %v288 = vld [vmem:[%s2 + $0x800] sm:$0xff]
    %v289 = vld [vmem:[%s2 + $0x808] sm:$0xff]
    %v290 = vld [vmem:[%s2 + $0x810] sm:$0xff]
    %v291 = vld [vmem:[%s2 + $0x818] sm:$0xff]
    %v292 = vld [vmem:[%s2 + $0x820] sm:$0xff]
    %v293 = vld [vmem:[%s2 + $0x828] sm:$0xff]
    %v294 = vld [vmem:[%s2 + $0x830] sm:$0xff]
    %v295 = vld [vmem:[%s2 + $0x838] sm:$0xff]
    %v296 = vld [vmem:[%s2 + $0x840] sm:$0xff]
    %v297 = vld [vmem:[%s2 + $0x848] sm:$0xff]
    %v298 = vld [vmem:[%s2 + $0x850] sm:$0xff]
    %v299 = vld [vmem:[%s2 + $0x858] sm:$0xff]
    %v300 = vld [vmem:[%s2 + $0x860] sm:$0xff]
    %v301 = vld [vmem:[%s2 + $0x868] sm:$0xff]
    %v302 = vld [vmem:[%s2 + $0x870] sm:$0xff]
    %v303 = vld [vmem:[%s2 + $0x878] sm:$0xff]
    %v304 = vld [vmem:[%s2 + $0x880] sm:$0xff]
    %v305 = vld [vmem:[%s2 + $0x888] sm:$0xff]
    %v306 = vld [vmem:[%s2 + $0x890] sm:$0xff]
    %v307 = vld [vmem:[%s2 + $0x898] sm:$0xff]
    %v308 = vld [vmem:[%s2 + $0x8a0] sm:$0xff]
    %v309 = vld [vmem:[%s2 + $0x8a8] sm:$0xff]
    %v310 = vld [vmem:[%s2 + $0x8b0] sm:$0xff]
    %v311 = vld [vmem:[%s2 + $0x8b8] sm:$0xff]
    %v312 = vld [vmem:[%s2 + $0x8c0] sm:$0xff]
    %v313 = vld [vmem:[%s2 + $0x8c8] sm:$0xff]
    %v314 = vld [vmem:[%s2 + $0x8d0] sm:$0xff]
    %v315 = vld [vmem:[%s2 + $0x8d8] sm:$0xff]
    %v316 = vld [vmem:[%s2 + $0x8e0] sm:$0xff]
    %v317 = vld [vmem:[%s2 + $0x8e8] sm:$0xff]
    %v318 = vld [vmem:[%s2 + $0x8f0] sm:$0xff]
    %v319 = vld [vmem:[%s2 + $0x8f8] sm:$0xff]
    %v320 = vld [vmem:[%s2 + $0x900] sm:$0xff]
    %v321 = vld [vmem:[%s2 + $0x908] sm:$0xff]
    %v322 = vld [vmem:[%s2 + $0x910] sm:$0xff]
    %v323 = vld [vmem:[%s2 + $0x918] sm:$0xff]
    %v324 = vld [vmem:[%s2 + $0x920] sm:$0xff]
    %v325 = vld [vmem:[%s2 + $0x928] sm:$0xff]
    %v326 = vld [vmem:[%s2 + $0x930] sm:$0xff]
    %v327 = vld [vmem:[%s2 + $0x938] sm:$0xff]
    %v328 = vld [vmem:[%s2 + $0x940] sm:$0xff]
    %v329 = vld [vmem:[%s2 + $0x948] sm:$0xff]
    %v330 = vld [vmem:[%s2 + $0x950] sm:$0xff]
    %v331 = vld [vmem:[%s2 + $0x958] sm:$0xff]
    %v332 = vld [vmem:[%s2 + $0x960] sm:$0xff]
    %v333 = vld [vmem:[%s2 + $0x968] sm:$0xff]
    %v334 = vld [vmem:[%s2 + $0x970] sm:$0xff]
    %v335 = vld [vmem:[%s2 + $0x978] sm:$0xff]
    %v336 = vld [vmem:[%s2 + $0x980] sm:$0xff]
    %v337 = vld [vmem:[%s2 + $0x988] sm:$0xff]
    %v338 = vld [vmem:[%s2 + $0x990] sm:$0xff]
    %v339 = vld [vmem:[%s2 + $0x998] sm:$0xff]
    %v340 = vld [vmem:[%s2 + $0x9a0] sm:$0xff]
    %v341 = vld [vmem:[%s2 + $0x9a8] sm:$0xff]
    %v342 = vld [vmem:[%s2 + $0x9b0] sm:$0xff]
    %v343 = vld [vmem:[%s2 + $0x9b8] sm:$0xff]
    %v344 = vld [vmem:[%s2 + $0x9c0] sm:$0xff]
    %v345 = vld [vmem:[%s2 + $0x9c8] sm:$0xff]
    %v346 = vld [vmem:[%s2 + $0x9d0] sm:$0xff]
    %v347 = vld [vmem:[%s2 + $0x9d8] sm:$0xff]
    %v348 = vld [vmem:[%s2 + $0x9e0] sm:$0xff]
    %v349 = vld [vmem:[%s2 + $0x9e8] sm:$0xff]
    %v350 = vld [vmem:[%s2 + $0x9f0] sm:$0xff]
    %v351 = vld [vmem:[%s2 + $0x9f8] sm:$0xff]
    %v352 = vld [vmem:[%s2 + $0xa00] sm:$0xff]
    %v353 = vld [vmem:[%s2 + $0xa08] sm:$0xff]
    %v354 = vld [vmem:[%s2 + $0xa10] sm:$0xff]
    %v355 = vld [vmem:[%s2 + $0xa18] sm:$0xff]
    %v356 = vld [vmem:[%s2 + $0xa20] sm:$0xff]
    %v357 = vld [vmem:[%s2 + $0xa28] sm:$0xff]
    %v358 = vld [vmem:[%s2 + $0xa30] sm:$0xff]
    %v359 = vld [vmem:[%s2 + $0xa38] sm:$0xff]
    %v360 = vld [vmem:[%s2 + $0xa40] sm:$0xff]
    %v361 = vld [vmem:[%s2 + $0xa48] sm:$0xff]
    %v362 = vld [vmem:[%s2 + $0xa50] sm:$0xff]
    %v363 = vld [vmem:[%s2 + $0xa58] sm:$0xff]
    %v364 = vld [vmem:[%s2 + $0xa60] sm:$0xff]
    %v365 = vld [vmem:[%s2 + $0xa68] sm:$0xff]
    %v366 = vld [vmem:[%s2 + $0xa70] sm:$0xff]
    %v367 = vld [vmem:[%s2 + $0xa78] sm:$0xff]
    %v368 = vld [vmem:[%s2 + $0xa80] sm:$0xff]
    %v369 = vld [vmem:[%s2 + $0xa88] sm:$0xff]
    %v370 = vld [vmem:[%s2 + $0xa90] sm:$0xff]
    %v371 = vld [vmem:[%s2 + $0xa98] sm:$0xff]
    %v372 = vld [vmem:[%s2 + $0xaa0] sm:$0xff]
    %v373 = vld [vmem:[%s2 + $0xaa8] sm:$0xff]
    %v374 = vld [vmem:[%s2 + $0xab0] sm:$0xff]
    %v375 = vld [vmem:[%s2 + $0xab8] sm:$0xff]
    %v376 = vld [vmem:[%s2 + $0xac0] sm:$0xff]
    %v377 = vld [vmem:[%s2 + $0xac8] sm:$0xff]
    %v378 = vld [vmem:[%s2 + $0xad0] sm:$0xff]
    %v379 = vld [vmem:[%s2 + $0xad8] sm:$0xff]
    %v380 = vld [vmem:[%s2 + $0xae0] sm:$0xff]
    %v381 = vld [vmem:[%s2 + $0xae8] sm:$0xff]
    %v382 = vld [vmem:[%s2 + $0xaf0] sm:$0xff]
    %v383 = vld [vmem:[%s2 + $0xaf8] sm:$0xff]
    %v384 = vld [vmem:[%s2 + $0xb00] sm:$0xff]
    %v385 = vld [vmem:[%s2 + $0xb08] sm:$0xff]
    %v386 = vld [vmem:[%s2 + $0xb10] sm:$0xff]
    %v387 = vld [vmem:[%s2 + $0xb18] sm:$0xff]
    %v388 = vld [vmem:[%s2 + $0xb20] sm:$0xff]
    %v389 = vld [vmem:[%s2 + $0xb28] sm:$0xff]
    %v390 = vld [vmem:[%s2 + $0xb30] sm:$0xff]
    %v391 = vld [vmem:[%s2 + $0xb38] sm:$0xff]
    %v392 = vld [vmem:[%s2 + $0xb40] sm:$0xff]
    %v393 = vld [vmem:[%s2 + $0xb48] sm:$0xff]
    %v394 = vld [vmem:[%s2 + $0xb50] sm:$0xff]
    %v395 = vld [vmem:[%s2 + $0xb58] sm:$0xff]
    %v396 = vld [vmem:[%s2 + $0xb60] sm:$0xff]
    %v397 = vld [vmem:[%s2 + $0xb68] sm:$0xff]
    %v398 = vld [vmem:[%s2 + $0xb70] sm:$0xff]
    %v399 = vld [vmem:[%s2 + $0xb78] sm:$0xff]
    %v400 = vld [vmem:[%s2 + $0xb80] sm:$0xff]
    %v401 = vld [vmem:[%s2 + $0xb88] sm:$0xff]
    %v402 = vld [vmem:[%s2 + $0xb90] sm:$0xff]
    %v403 = vld [vmem:[%s2 + $0xb98] sm:$0xff]
    %v404 = vld [vmem:[%s2 + $0xba0] sm:$0xff]
    %v405 = vld [vmem:[%s2 + $0xba8] sm:$0xff]
    %v406 = vld [vmem:[%s2 + $0xbb0] sm:$0xff]
    %v407 = vld [vmem:[%s2 + $0xbb8] sm:$0xff]
    %v408 = vld [vmem:[%s2 + $0xbc0] sm:$0xff]
    %v409 = vld [vmem:[%s2 + $0xbc8] sm:$0xff]
    %v410 = vld [vmem:[%s2 + $0xbd0] sm:$0xff]
    %v411 = vld [vmem:[%s2 + $0xbd8] sm:$0xff]
    %v412 = vld [vmem:[%s2 + $0xbe0] sm:$0xff]
    %v413 = vld [vmem:[%s2 + $0xbe8] sm:$0xff]
    %v414 = vld [vmem:[%s2 + $0xbf0] sm:$0xff]
    %v415 = vld [vmem:[%s2 + $0xbf8] sm:$0xff]
    %v416 = vld [vmem:[%s2 + $0xc00] sm:$0xff]
    %v417 = vld [vmem:[%s2 + $0xc08] sm:$0xff]
    %v418 = vld [vmem:[%s2 + $0xc10] sm:$0xff]
    %v419 = vld [vmem:[%s2 + $0xc18] sm:$0xff]
    %v420 = vld [vmem:[%s2 + $0xc20] sm:$0xff]
    %v421 = vld [vmem:[%s2 + $0xc28] sm:$0xff]
    %v422 = vld [vmem:[%s2 + $0xc30] sm:$0xff]
    %v423 = vld [vmem:[%s2 + $0xc38] sm:$0xff]
    %v424 = vld [vmem:[%s3] sm:$0x1]
    %v426 = vlaneseq
    %v427 = vshrl.u32 %v426, 7
    %v428 = vsub.s32 0, %v427
    %v429 = vrot.slane %v424, %v428
    %v438 = vcombine.high %v25, %v25
    %v440 = vunpack.c.l.s4 1983009808
    %v441 = vunpack.c.0.s8 %v440
    %v442 = vlaneseq
    %v443 = vshrl.u32 %v442, 7
    %v444 = vsub.s32 %v441, %v443
    %v445 = vrot.slane %v25, %v444
    %v447 = vunpack.c.l.s4 1983009808
    %v448 = vunpack.c.0.s8 %v447
    %v449 = vlaneseq
    %v450 = vshrl.u32 %v449, 7
    %v451 = vsub.s32 %v448, %v450
    %v452 = vrot.slane %v438, %v451
    %v453 = vcombine.high %v445, %v445
    %v454 = vcombine.high %v452, %v452
    %v455 = vcombine.high %v26, %v26
    %v457 = vunpack.c.l.s4 1983009808
    %v458 = vunpack.c.0.s8 %v457
    %v459 = vlaneseq
    %v460 = vshrl.u32 %v459, 7
    %v461 = vsub.s32 %v458, %v460
    %v462 = vrot.slane %v26, %v461
    %v464 = vunpack.c.l.s4 1983009808
    %v465 = vunpack.c.0.s8 %v464
    %v466 = vlaneseq
    %v467 = vshrl.u32 %v466, 7
    %v468 = vsub.s32 %v465, %v467
    %v469 = vrot.slane %v455, %v468
    %v470 = vcombine.high %v462, %v462
    %v471 = vcombine.high %v469, %v469
    %v472 = vcombine.high %v27, %v27
    %v474 = vunpack.c.l.s4 1983009808
    %v475 = vunpack.c.0.s8 %v474
    %v476 = vlaneseq
    %v477 = vshrl.u32 %v476, 7
    %v478 = vsub.s32 %v475, %v477
    %v479 = vrot.slane %v27, %v478
    %v481 = vunpack.c.l.s4 1983009808
    %v482 = vunpack.c.0.s8 %v481
    %v483 = vlaneseq
    %v484 = vshrl.u32 %v483, 7
    %v485 = vsub.s32 %v482, %v484
    %v486 = vrot.slane %v472, %v485
    %v487 = vcombine.high %v479, %v479
    %v488 = vcombine.high %v486, %v486
    %v489 = vcombine.high %v28, %v28
    %v491 = vunpack.c.l.s4 1983009808
    %v492 = vunpack.c.0.s8 %v491
    %v493 = vlaneseq
    %v494 = vshrl.u32 %v493, 7
    %v495 = vsub.s32 %v492, %v494
    %v496 = vrot.slane %v28, %v495
    %v498 = vunpack.c.l.s4 1983009808
    %v499 = vunpack.c.0.s8 %v498
    %v500 = vlaneseq
    %v501 = vshrl.u32 %v500, 7
    %v502 = vsub.s32 %v499, %v501
    %v503 = vrot.slane %v489, %v502
    %v504 = vcombine.high %v496, %v496
    %v505 = vcombine.high %v503, %v503
    %v506 = vcombine.high %v29, %v29
    %v508 = vunpack.c.l.s4 1983009808
    %v509 = vunpack.c.0.s8 %v508
    %v510 = vlaneseq
    %v511 = vshrl.u32 %v510, 7
    %v512 = vsub.s32 %v509, %v511
    %v513 = vrot.slane %v29, %v512
    %v515 = vunpack.c.l.s4 1983009808
    %v516 = vunpack.c.0.s8 %v515
    %v517 = vlaneseq
    %v518 = vshrl.u32 %v517, 7
    %v519 = vsub.s32 %v516, %v518
    %v520 = vrot.slane %v506, %v519
    %v521 = vcombine.high %v513, %v513
    %v522 = vcombine.high %v520, %v520
    %v523 = vcombine.high %v30, %v30
    %v525 = vunpack.c.l.s4 1983009808
    %v526 = vunpack.c.0.s8 %v525
    %v527 = vlaneseq
    %v528 = vshrl.u32 %v527, 7
    %v529 = vsub.s32 %v526, %v528
    %v530 = vrot.slane %v30, %v529
    %v532 = vunpack.c.l.s4 1983009808
    %v533 = vunpack.c.0.s8 %v532
    %v534 = vlaneseq
    %v535 = vshrl.u32 %v534, 7
    %v536 = vsub.s32 %v533, %v535
    %v537 = vrot.slane %v523, %v536
    %v538 = vcombine.high %v530, %v530
    %v539 = vcombine.high %v537, %v537
    %v541 = vunpack.c.l.s4 1983009808
    %v542 = vunpack.c.0.s8 %v541
    %v543 = vlaneseq
    %v544 = vshrl.u32 %v543, 7
    %v545 = vsub.s32 %v542, %v544
    %v546 = vrot.slane %v31, %v545
    %vm571 = vcmask 523264
    %v572 = vsel %vm571, %v546, 0
    %574 = vmatprep.subr.mxu0 0.0
    %575 = vmatpush1.msra.mxu0 %v32
    %576 = vmatprep.subr.mxu0 0.0
    %577 = vmatpush1.msra.mxu0 %v33
    %578 = vmatprep.subr.mxu0 0.0
    %579 = vmatpush1.msra.mxu0 %v34
    %580 = vmatprep.subr.mxu0 0.0
    %581 = vmatpush1.msra.mxu0 %v35
    %582 = vmatprep.subr.mxu0 0.0
    %583 = vmatpush1.msra.mxu0 %v36
    %584 = vmatprep.subr.mxu0 0.0
    %585 = vmatpush1.msra.mxu0 %v37
    %586 = vmatprep.subr.mxu0 0.0
    %587 = vmatpush1.msra.mxu0 %v38
    %588 = vmatprep.subr.mxu0 0.0
    %589 = vmatpush1.msra.mxu0 %v39
    %590 = vmatprep.subr.mxu0 0.0
    %591 = vmatpush1.msra.mxu0 %v40
    %592 = vmatprep.subr.mxu0 0.0
    %593 = vmatpush1.msra.mxu0 %v41
    %594 = vmatprep.subr.mxu0 0.0
    %595 = vmatpush1.msra.mxu0 %v42
    %596 = vmatprep.subr.mxu0 0.0
    %597 = vmatpush1.msra.mxu0 %v43
    %598 = vmatprep.subr.mxu0 0.0
    %599 = vmatpush1.msra.mxu0 %v44
    %600 = vmatprep.subr.mxu0 0.0
    %601 = vmatpush1.msra.mxu0 %v45
    %602 = vmatprep.subr.mxu0 0.0
    %603 = vmatpush1.msra.mxu0 %v46
    %604 = vmatprep.subr.mxu0 0.0
    %605 = vmatpush1.msra.mxu0 %v47
    %606 = vmatprep.subr.mxu0 0.0
    %607 = vmatpush1.msra.mxu0 %v48
    %608 = vmatprep.subr.mxu0 0.0
    %609 = vmatpush1.msra.mxu0 %v49
    %610 = vmatprep.subr.mxu0 0.0
    %611 = vmatpush1.msra.mxu0 %v50
    %612 = vmatprep.subr.mxu0 0.0
    %613 = vmatpush1.msra.mxu0 %v51
    %614 = vmatprep.subr.mxu0 0.0
    %615 = vmatpush1.msra.mxu0 %v52
    %616 = vmatprep.subr.mxu0 0.0
    %617 = vmatpush1.msra.mxu0 %v53
    %618 = vmatprep.subr.mxu0 0.0
    %619 = vmatpush1.msra.mxu0 %v54
    %620 = vmatprep.subr.mxu0 0.0
    %621 = vmatpush1.msra.mxu0 %v55
    %622 = vmatprep.subr.mxu0 0.0
    %623 = vmatpush1.msra.mxu0 %v56
    %624 = vmatprep.subr.mxu0 0.0
    %625 = vmatpush1.msra.mxu0 %v57
    %626 = vmatprep.subr.mxu0 0.0
    %627 = vmatpush1.msra.mxu0 %v58
    %628 = vmatprep.subr.mxu0 0.0
    %629 = vmatpush1.msra.mxu0 %v59
    %630 = vmatprep.subr.mxu0 0.0
    %631 = vmatpush1.msra.mxu0 %v60
    %632 = vmatprep.subr.mxu0 0.0
    %633 = vmatpush1.msra.mxu0 %v61
    %634 = vmatprep.subr.mxu0 0.0
    %635 = vmatpush1.msra.mxu0 %v62
    %636 = vmatprep.subr.mxu0 0.0
    %637 = vmatpush1.msra.mxu0 %v63
    %638 = vmatprep.mubr.f32.mxu0 %v453
    %639 = vmatmul.mubr.f32.gmra.mrb[0].mxu0 %v445
    %v640 = vpop.f32.mrb[0].mxu0
    %v641 = vadd.f32 %v429, %v640
    %v642 = vpop.f32.mrb[0].mxu0
    %643 = vdwg.mxu0
    %644 = vmatprep.subr.mxu0 0.0
    %645 = vmatpush1.msra.mxu0 %v64
    %646 = vmatprep.subr.mxu0 0.0
    %647 = vmatpush1.msra.mxu0 %v65
    %648 = vmatprep.subr.mxu0 0.0
    %649 = vmatpush1.msra.mxu0 %v66
    %650 = vmatprep.subr.mxu0 0.0
    %651 = vmatpush1.msra.mxu0 %v67
    %652 = vmatprep.subr.mxu0 0.0
    %653 = vmatpush1.msra.mxu0 %v68
    %654 = vmatprep.subr.mxu0 0.0
    %655 = vmatpush1.msra.mxu0 %v69
    %656 = vmatprep.subr.mxu0 0.0
    %657 = vmatpush1.msra.mxu0 %v70
    %658 = vmatprep.subr.mxu0 0.0
    %659 = vmatpush1.msra.mxu0 %v71
    %660 = vmatprep.subr.mxu0 0.0
    %661 = vmatpush1.msra.mxu0 %v72
    %662 = vmatprep.subr.mxu0 0.0
    %663 = vmatpush1.msra.mxu0 %v73
    %664 = vmatprep.subr.mxu0 0.0
    %665 = vmatpush1.msra.mxu0 %v74
    %666 = vmatprep.subr.mxu0 0.0
    %667 = vmatpush1.msra.mxu0 %v75
    %668 = vmatprep.subr.mxu0 0.0
    %669 = vmatpush1.msra.mxu0 %v76
    %670 = vmatprep.subr.mxu0 0.0
    %671 = vmatpush1.msra.mxu0 %v77
    %672 = vmatprep.subr.mxu0 0.0
    %673 = vmatpush1.msra.mxu0 %v78
    %674 = vmatprep.subr.mxu0 0.0
    %675 = vmatpush1.msra.mxu0 %v79
    %676 = vmatprep.subr.mxu0 0.0
    %677 = vmatpush1.msra.mxu0 %v80
    %678 = vmatprep.subr.mxu0 0.0
    %679 = vmatpush1.msra.mxu0 %v81
    %680 = vmatprep.subr.mxu0 0.0
    %681 = vmatpush1.msra.mxu0 %v82
    %682 = vmatprep.subr.mxu0 0.0
    %683 = vmatpush1.msra.mxu0 %v83
    %684 = vmatprep.subr.mxu0 0.0
    %685 = vmatpush1.msra.mxu0 %v84
    %686 = vmatprep.subr.mxu0 0.0
    %687 = vmatpush1.msra.mxu0 %v85
    %688 = vmatprep.subr.mxu0 0.0
    %689 = vmatpush1.msra.mxu0 %v86
    %690 = vmatprep.subr.mxu0 0.0
    %691 = vmatpush1.msra.mxu0 %v87
    %692 = vmatprep.subr.mxu0 0.0
    %693 = vmatpush1.msra.mxu0 %v88
    %694 = vmatprep.subr.mxu0 0.0
    %695 = vmatpush1.msra.mxu0 %v89
    %696 = vmatprep.subr.mxu0 0.0
    %697 = vmatpush1.msra.mxu0 %v90
    %698 = vmatprep.subr.mxu0 0.0
    %699 = vmatpush1.msra.mxu0 %v91
    %700 = vmatprep.subr.mxu0 0.0
    %701 = vmatpush1.msra.mxu0 %v92
    %702 = vmatprep.subr.mxu0 0.0
    %703 = vmatpush1.msra.mxu0 %v93
    %704 = vmatprep.subr.mxu0 0.0
    %705 = vmatpush1.msra.mxu0 %v94
    %706 = vmatprep.subr.mxu0 0.0
    %707 = vmatpush1.msra.mxu0 %v95
    %708 = vmatprep.mubr.f32.mxu0 %v454
    %709 = vmatmul.mubr.f32.gmra.mrb[0].mxu0 %v452
    %v710 = vpop.f32.mrb[0].mxu0
    %v711 = vadd.f32 %v641, %v710
    %v712 = vpop.f32.mrb[0].mxu0
    %713 = vdwg.mxu0
    %714 = vmatprep.subr.mxu0 0.0
    %715 = vmatpush1.msra.mxu0 %v96
    %716 = vmatprep.subr.mxu0 0.0
    %717 = vmatpush1.msra.mxu0 %v97
    %718 = vmatprep.subr.mxu0 0.0
    %719 = vmatpush1.msra.mxu0 %v98
    %720 = vmatprep.subr.mxu0 0.0
    %721 = vmatpush1.msra.mxu0 %v99
    %722 = vmatprep.subr.mxu0 0.0
    %723 = vmatpush1.msra.mxu0 %v100
    %724 = vmatprep.subr.mxu0 0.0
    %725 = vmatpush1.msra.mxu0 %v101
    %726 = vmatprep.subr.mxu0 0.0
    %727 = vmatpush1.msra.mxu0 %v102
    %728 = vmatprep.subr.mxu0 0.0
    %729 = vmatpush1.msra.mxu0 %v103
    %730 = vmatprep.subr.mxu0 0.0
    %731 = vmatpush1.msra.mxu0 %v104
    %732 = vmatprep.subr.mxu0 0.0
    %733 = vmatpush1.msra.mxu0 %v105
    %734 = vmatprep.subr.mxu0 0.0
    %735 = vmatpush1.msra.mxu0 %v106
    %736 = vmatprep.subr.mxu0 0.0
    %737 = vmatpush1.msra.mxu0 %v107
    %738 = vmatprep.subr.mxu0 0.0
    %739 = vmatpush1.msra.mxu0 %v108
    %740 = vmatprep.subr.mxu0 0.0
    %741 = vmatpush1.msra.mxu0 %v109
    %742 = vmatprep.subr.mxu0 0.0
    %743 = vmatpush1.msra.mxu0 %v110
    %744 = vmatprep.subr.mxu0 0.0
    %745 = vmatpush1.msra.mxu0 %v111
    %746 = vmatprep.subr.mxu0 0.0
    %747 = vmatpush1.msra.mxu0 %v112
    %748 = vmatprep.subr.mxu0 0.0
    %749 = vmatpush1.msra.mxu0 %v113
    %750 = vmatprep.subr.mxu0 0.0
    %751 = vmatpush1.msra.mxu0 %v114
    %752 = vmatprep.subr.mxu0 0.0
    %753 = vmatpush1.msra.mxu0 %v115
    %754 = vmatprep.subr.mxu0 0.0
    %755 = vmatpush1.msra.mxu0 %v116
    %756 = vmatprep.subr.mxu0 0.0
    %757 = vmatpush1.msra.mxu0 %v117
    %758 = vmatprep.subr.mxu0 0.0
    %759 = vmatpush1.msra.mxu0 %v118
    %760 = vmatprep.subr.mxu0 0.0
    %761 = vmatpush1.msra.mxu0 %v119
    %762 = vmatprep.subr.mxu0 0.0
    %763 = vmatpush1.msra.mxu0 %v120
    %764 = vmatprep.subr.mxu0 0.0
    %765 = vmatpush1.msra.mxu0 %v121
    %766 = vmatprep.subr.mxu0 0.0
    %767 = vmatpush1.msra.mxu0 %v122
    %768 = vmatprep.subr.mxu0 0.0
    %769 = vmatpush1.msra.mxu0 %v123
    %770 = vmatprep.subr.mxu0 0.0
    %771 = vmatpush1.msra.mxu0 %v124
    %772 = vmatprep.subr.mxu0 0.0
    %773 = vmatpush1.msra.mxu0 %v125
    %774 = vmatprep.subr.mxu0 0.0
    %775 = vmatpush1.msra.mxu0 %v126
    %776 = vmatprep.subr.mxu0 0.0
    %777 = vmatpush1.msra.mxu0 %v127
    %778 = vmatprep.mubr.f32.mxu0 %v470
    %779 = vmatmul.mubr.f32.gmra.mrb[0].mxu0 %v462
    %v780 = vpop.f32.mrb[0].mxu0
    %v781 = vadd.f32 %v711, %v780
    %v782 = vpop.f32.mrb[0].mxu0
    %783 = vdwg.mxu0
    %784 = vmatprep.subr.mxu0 0.0
    %785 = vmatpush1.msra.mxu0 %v128
    %786 = vmatprep.subr.mxu0 0.0
    %787 = vmatpush1.msra.mxu0 %v129
    %788 = vmatprep.subr.mxu0 0.0
    %789 = vmatpush1.msra.mxu0 %v130
    %790 = vmatprep.subr.mxu0 0.0
    %791 = vmatpush1.msra.mxu0 %v131
    %792 = vmatprep.subr.mxu0 0.0
    %793 = vmatpush1.msra.mxu0 %v132
    %794 = vmatprep.subr.mxu0 0.0
    %795 = vmatpush1.msra.mxu0 %v133
    %796 = vmatprep.subr.mxu0 0.0
    %797 = vmatpush1.msra.mxu0 %v134
    %798 = vmatprep.subr.mxu0 0.0
    %799 = vmatpush1.msra.mxu0 %v135
    %800 = vmatprep.subr.mxu0 0.0
    %801 = vmatpush1.msra.mxu0 %v136
    %802 = vmatprep.subr.mxu0 0.0
    %803 = vmatpush1.msra.mxu0 %v137
    %804 = vmatprep.subr.mxu0 0.0
    %805 = vmatpush1.msra.mxu0 %v138
    %806 = vmatprep.subr.mxu0 0.0
    %807 = vmatpush1.msra.mxu0 %v139
    %808 = vmatprep.subr.mxu0 0.0
    %809 = vmatpush1.msra.mxu0 %v140
    %810 = vmatprep.subr.mxu0 0.0
    %811 = vmatpush1.msra.mxu0 %v141
    %812 = vmatprep.subr.mxu0 0.0
    %813 = vmatpush1.msra.mxu0 %v142
    %814 = vmatprep.subr.mxu0 0.0
    %815 = vmatpush1.msra.mxu0 %v143
    %816 = vmatprep.subr.mxu0 0.0
    %817 = vmatpush1.msra.mxu0 %v144
    %818 = vmatprep.subr.mxu0 0.0
    %819 = vmatpush1.msra.mxu0 %v145
    %820 = vmatprep.subr.mxu0 0.0
    %821 = vmatpush1.msra.mxu0 %v146
    %822 = vmatprep.subr.mxu0 0.0
    %823 = vmatpush1.msra.mxu0 %v147
    %824 = vmatprep.subr.mxu0 0.0
    %825 = vmatpush1.msra.mxu0 %v148
    %826 = vmatprep.subr.mxu0 0.0
    %827 = vmatpush1.msra.mxu0 %v149
    %828 = vmatprep.subr.mxu0 0.0
    %829 = vmatpush1.msra.mxu0 %v150
    %830 = vmatprep.subr.mxu0 0.0
    %831 = vmatpush1.msra.mxu0 %v151
    %832 = vmatprep.subr.mxu0 0.0
    %833 = vmatpush1.msra.mxu0 %v152
    %834 = vmatprep.subr.mxu0 0.0
    %835 = vmatpush1.msra.mxu0 %v153
    %836 = vmatprep.subr.mxu0 0.0
    %837 = vmatpush1.msra.mxu0 %v154
    %838 = vmatprep.subr.mxu0 0.0
    %839 = vmatpush1.msra.mxu0 %v155
    %840 = vmatprep.subr.mxu0 0.0
    %841 = vmatpush1.msra.mxu0 %v156
    %842 = vmatprep.subr.mxu0 0.0
    %843 = vmatpush1.msra.mxu0 %v157
    %844 = vmatprep.subr.mxu0 0.0
    %845 = vmatpush1.msra.mxu0 %v158
    %846 = vmatprep.subr.mxu0 0.0
    %847 = vmatpush1.msra.mxu0 %v159
    %848 = vmatprep.mubr.f32.mxu0 %v471
    %849 = vmatmul.mubr.f32.gmra.mrb[0].mxu0 %v469
    %v850 = vpop.f32.mrb[0].mxu0
    %v851 = vadd.f32 %v781, %v850
    %v852 = vpop.f32.mrb[0].mxu0
    %853 = vdwg.mxu0
    %854 = vmatprep.subr.mxu0 0.0
    %855 = vmatpush1.msra.mxu0 %v160
    %856 = vmatprep.subr.mxu0 0.0
    %857 = vmatpush1.msra.mxu0 %v161
    %858 = vmatprep.subr.mxu0 0.0
    %859 = vmatpush1.msra.mxu0 %v162
    %860 = vmatprep.subr.mxu0 0.0
    %861 = vmatpush1.msra.mxu0 %v163
    %862 = vmatprep.subr.mxu0 0.0
    %863 = vmatpush1.msra.mxu0 %v164
    %864 = vmatprep.subr.mxu0 0.0
    %865 = vmatpush1.msra.mxu0 %v165
    %866 = vmatprep.subr.mxu0 0.0
    %867 = vmatpush1.msra.mxu0 %v166
    %868 = vmatprep.subr.mxu0 0.0
    %869 = vmatpush1.msra.mxu0 %v167
    %870 = vmatprep.subr.mxu0 0.0
    %871 = vmatpush1.msra.mxu0 %v168
    %872 = vmatprep.subr.mxu0 0.0
    %873 = vmatpush1.msra.mxu0 %v169
    %874 = vmatprep.subr.mxu0 0.0
    %875 = vmatpush1.msra.mxu0 %v170
    %876 = vmatprep.subr.mxu0 0.0
    %877 = vmatpush1.msra.mxu0 %v171
    %878 = vmatprep.subr.mxu0 0.0
    %879 = vmatpush1.msra.mxu0 %v172
    %880 = vmatprep.subr.mxu0 0.0
    %881 = vmatpush1.msra.mxu0 %v173
    %882 = vmatprep.subr.mxu0 0.0
    %883 = vmatpush1.msra.mxu0 %v174
    %884 = vmatprep.subr.mxu0 0.0
    %885 = vmatpush1.msra.mxu0 %v175
    %886 = vmatprep.subr.mxu0 0.0
    %887 = vmatpush1.msra.mxu0 %v176
    %888 = vmatprep.subr.mxu0 0.0
    %889 = vmatpush1.msra.mxu0 %v177
    %890 = vmatprep.subr.mxu0 0.0
    %891 = vmatpush1.msra.mxu0 %v178
    %892 = vmatprep.subr.mxu0 0.0
    %893 = vmatpush1.msra.mxu0 %v179
    %894 = vmatprep.subr.mxu0 0.0
    %895 = vmatpush1.msra.mxu0 %v180
    %896 = vmatprep.subr.mxu0 0.0
    %897 = vmatpush1.msra.mxu0 %v181
    %898 = vmatprep.subr.mxu0 0.0
    %899 = vmatpush1.msra.mxu0 %v182
    %900 = vmatprep.subr.mxu0 0.0
    %901 = vmatpush1.msra.mxu0 %v183
    %902 = vmatprep.subr.mxu0 0.0
    %903 = vmatpush1.msra.mxu0 %v184
    %904 = vmatprep.subr.mxu0 0.0
    %905 = vmatpush1.msra.mxu0 %v185
    %906 = vmatprep.subr.mxu0 0.0
    %907 = vmatpush1.msra.mxu0 %v186
    %908 = vmatprep.subr.mxu0 0.0
    %909 = vmatpush1.msra.mxu0 %v187
    %910 = vmatprep.subr.mxu0 0.0
    %911 = vmatpush1.msra.mxu0 %v188
    %912 = vmatprep.subr.mxu0 0.0
    %913 = vmatpush1.msra.mxu0 %v189
    %914 = vmatprep.subr.mxu0 0.0
    %915 = vmatpush1.msra.mxu0 %v190
    %916 = vmatprep.subr.mxu0 0.0
    %917 = vmatpush1.msra.mxu0 %v191
    %918 = vmatprep.mubr.f32.mxu0 %v487
    %919 = vmatmul.mubr.f32.gmra.mrb[0].mxu0 %v479
    %v920 = vpop.f32.mrb[0].mxu0
    %v921 = vadd.f32 %v851, %v920
    %v922 = vpop.f32.mrb[0].mxu0
    %923 = vdwg.mxu0
    %924 = vmatprep.subr.mxu0 0.0
    %925 = vmatpush1.msra.mxu0 %v192
    %926 = vmatprep.subr.mxu0 0.0
    %927 = vmatpush1.msra.mxu0 %v193
    %928 = vmatprep.subr.mxu0 0.0
    %929 = vmatpush1.msra.mxu0 %v194
    %930 = vmatprep.subr.mxu0 0.0
    %931 = vmatpush1.msra.mxu0 %v195
    %932 = vmatprep.subr.mxu0 0.0
    %933 = vmatpush1.msra.mxu0 %v196
    %934 = vmatprep.subr.mxu0 0.0
    %935 = vmatpush1.msra.mxu0 %v197
    %936 = vmatprep.subr.mxu0 0.0
    %937 = vmatpush1.msra.mxu0 %v198
    %938 = vmatprep.subr.mxu0 0.0
    %939 = vmatpush1.msra.mxu0 %v199
    %940 = vmatprep.subr.mxu0 0.0
    %941 = vmatpush1.msra.mxu0 %v200
    %942 = vmatprep.subr.mxu0 0.0
    %943 = vmatpush1.msra.mxu0 %v201
    %944 = vmatprep.subr.mxu0 0.0
    %945 = vmatpush1.msra.mxu0 %v202
    %946 = vmatprep.subr.mxu0 0.0
    %947 = vmatpush1.msra.mxu0 %v203
    %948 = vmatprep.subr.mxu0 0.0
    %949 = vmatpush1.msra.mxu0 %v204
    %950 = vmatprep.subr.mxu0 0.0
    %951 = vmatpush1.msra.mxu0 %v205
    %952 = vmatprep.subr.mxu0 0.0
    %953 = vmatpush1.msra.mxu0 %v206
    %954 = vmatprep.subr.mxu0 0.0
    %955 = vmatpush1.msra.mxu0 %v207
    %956 = vmatprep.subr.mxu0 0.0
    %957 = vmatpush1.msra.mxu0 %v208
    %958 = vmatprep.subr.mxu0 0.0
    %959 = vmatpush1.msra.mxu0 %v209
    %960 = vmatprep.subr.mxu0 0.0
    %961 = vmatpush1.msra.mxu0 %v210
    %962 = vmatprep.subr.mxu0 0.0
    %963 = vmatpush1.msra.mxu0 %v211
    %964 = vmatprep.subr.mxu0 0.0
    %965 = vmatpush1.msra.mxu0 %v212
    %966 = vmatprep.subr.mxu0 0.0
    %967 = vmatpush1.msra.mxu0 %v213
    %968 = vmatprep.subr.mxu0 0.0
    %969 = vmatpush1.msra.mxu0 %v214
    %970 = vmatprep.subr.mxu0 0.0
    %971 = vmatpush1.msra.mxu0 %v215
    %972 = vmatprep.subr.mxu0 0.0
    %973 = vmatpush1.msra.mxu0 %v216
    %974 = vmatprep.subr.mxu0 0.0
    %975 = vmatpush1.msra.mxu0 %v217
    %976 = vmatprep.subr.mxu0 0.0
    %977 = vmatpush1.msra.mxu0 %v218
    %978 = vmatprep.subr.mxu0 0.0
    %979 = vmatpush1.msra.mxu0 %v219
    %980 = vmatprep.subr.mxu0 0.0
    %981 = vmatpush1.msra.mxu0 %v220
    %982 = vmatprep.subr.mxu0 0.0
    %983 = vmatpush1.msra.mxu0 %v221
    %984 = vmatprep.subr.mxu0 0.0
    %985 = vmatpush1.msra.mxu0 %v222
    %986 = vmatprep.subr.mxu0 0.0
    %987 = vmatpush1.msra.mxu0 %v223
    %988 = vmatprep.mubr.f32.mxu0 %v488
    %989 = vmatmul.mubr.f32.gmra.mrb[0].mxu0 %v486
    %v990 = vpop.f32.mrb[0].mxu0
    %v991 = vadd.f32 %v921, %v990
    %v992 = vpop.f32.mrb[0].mxu0
    %993 = vdwg.mxu0
    %994 = vmatprep.subr.mxu0 0.0
    %995 = vmatpush1.msra.mxu0 %v224
    %996 = vmatprep.subr.mxu0 0.0
    %997 = vmatpush1.msra.mxu0 %v225
    %998 = vmatprep.subr.mxu0 0.0
    %999 = vmatpush1.msra.mxu0 %v226
    %1000 = vmatprep.subr.mxu0 0.0
    %1001 = vmatpush1.msra.mxu0 %v227
    %1002 = vmatprep.subr.mxu0 0.0
    %1003 = vmatpush1.msra.mxu0 %v228
    %1004 = vmatprep.subr.mxu0 0.0
    %1005 = vmatpush1.msra.mxu0 %v229
    %1006 = vmatprep.subr.mxu0 0.0
    %1007 = vmatpush1.msra.mxu0 %v230
    %1008 = vmatprep.subr.mxu0 0.0
    %1009 = vmatpush1.msra.mxu0 %v231
    %1010 = vmatprep.subr.mxu0 0.0
    %1011 = vmatpush1.msra.mxu0 %v232
    %1012 = vmatprep.subr.mxu0 0.0
    %1013 = vmatpush1.msra.mxu0 %v233
    %1014 = vmatprep.subr.mxu0 0.0
    %1015 = vmatpush1.msra.mxu0 %v234
    %1016 = vmatprep.subr.mxu0 0.0
    %1017 = vmatpush1.msra.mxu0 %v235
    %1018 = vmatprep.subr.mxu0 0.0
    %1019 = vmatpush1.msra.mxu0 %v236
    %1020 = vmatprep.subr.mxu0 0.0
    %1021 = vmatpush1.msra.mxu0 %v237
    %1022 = vmatprep.subr.mxu0 0.0
    %1023 = vmatpush1.msra.mxu0 %v238
    %1024 = vmatprep.subr.mxu0 0.0
    %1025 = vmatpush1.msra.mxu0 %v239
    %1026 = vmatprep.subr.mxu0 0.0
    %1027 = vmatpush1.msra.mxu0 %v240
    %1028 = vmatprep.subr.mxu0 0.0
    %1029 = vmatpush1.msra.mxu0 %v241
    %1030 = vmatprep.subr.mxu0 0.0
    %1031 = vmatpush1.msra.mxu0 %v242
    %1032 = vmatprep.subr.mxu0 0.0
    %1033 = vmatpush1.msra.mxu0 %v243
    %1034 = vmatprep.subr.mxu0 0.0
    %1035 = vmatpush1.msra.mxu0 %v244
    %1036 = vmatprep.subr.mxu0 0.0
    %1037 = vmatpush1.msra.mxu0 %v245
    %1038 = vmatprep.subr.mxu0 0.0
    %1039 = vmatpush1.msra.mxu0 %v246
    %1040 = vmatprep.subr.mxu0 0.0
    %1041 = vmatpush1.msra.mxu0 %v247
    %1042 = vmatprep.subr.mxu0 0.0
    %1043 = vmatpush1.msra.mxu0 %v248
    %1044 = vmatprep.subr.mxu0 0.0
    %1045 = vmatpush1.msra.mxu0 %v249
    %1046 = vmatprep.subr.mxu0 0.0
    %1047 = vmatpush1.msra.mxu0 %v250
    %1048 = vmatprep.subr.mxu0 0.0
    %1049 = vmatpush1.msra.mxu0 %v251
    %1050 = vmatprep.subr.mxu0 0.0
    %1051 = vmatpush1.msra.mxu0 %v252
    %1052 = vmatprep.subr.mxu0 0.0
    %1053 = vmatpush1.msra.mxu0 %v253
    %1054 = vmatprep.subr.mxu0 0.0
    %1055 = vmatpush1.msra.mxu0 %v254
    %1056 = vmatprep.subr.mxu0 0.0
    %1057 = vmatpush1.msra.mxu0 %v255
    %1058 = vmatprep.mubr.f32.mxu0 %v504
    %1059 = vmatmul.mubr.f32.gmra.mrb[0].mxu0 %v496
    %v1060 = vpop.f32.mrb[0].mxu0
    %v1061 = vadd.f32 %v991, %v1060
    %v1062 = vpop.f32.mrb[0].mxu0
    %1063 = vdwg.mxu0
    %1064 = vmatprep.subr.mxu0 0.0
    %1065 = vmatpush1.msra.mxu0 %v256
    %1066 = vmatprep.subr.mxu0 0.0
    %1067 = vmatpush1.msra.mxu0 %v257
    %1068 = vmatprep.subr.mxu0 0.0
    %1069 = vmatpush1.msra.mxu0 %v258
    %1070 = vmatprep.subr.mxu0 0.0
    %1071 = vmatpush1.msra.mxu0 %v259
    %1072 = vmatprep.subr.mxu0 0.0
    %1073 = vmatpush1.msra.mxu0 %v260
    %1074 = vmatprep.subr.mxu0 0.0
    %1075 = vmatpush1.msra.mxu0 %v261
    %1076 = vmatprep.subr.mxu0 0.0
    %1077 = vmatpush1.msra.mxu0 %v262
    %1078 = vmatprep.subr.mxu0 0.0
    %1079 = vmatpush1.msra.mxu0 %v263
    %1080 = vmatprep.subr.mxu0 0.0
    %1081 = vmatpush1.msra.mxu0 %v264
    %1082 = vmatprep.subr.mxu0 0.0
    %1083 = vmatpush1.msra.mxu0 %v265
    %1084 = vmatprep.subr.mxu0 0.0
    %1085 = vmatpush1.msra.mxu0 %v266
    %1086 = vmatprep.subr.mxu0 0.0
    %1087 = vmatpush1.msra.mxu0 %v267
    %1088 = vmatprep.subr.mxu0 0.0
    %1089 = vmatpush1.msra.mxu0 %v268
    %1090 = vmatprep.subr.mxu0 0.0
    %1091 = vmatpush1.msra.mxu0 %v269
    %1092 = vmatprep.subr.mxu0 0.0
    %1093 = vmatpush1.msra.mxu0 %v270
    %1094 = vmatprep.subr.mxu0 0.0
    %1095 = vmatpush1.msra.mxu0 %v271
    %1096 = vmatprep.subr.mxu0 0.0
    %1097 = vmatpush1.msra.mxu0 %v272
    %1098 = vmatprep.subr.mxu0 0.0
    %1099 = vmatpush1.msra.mxu0 %v273
    %1100 = vmatprep.subr.mxu0 0.0
    %1101 = vmatpush1.msra.mxu0 %v274
    %1102 = vmatprep.subr.mxu0 0.0
    %1103 = vmatpush1.msra.mxu0 %v275
    %1104 = vmatprep.subr.mxu0 0.0
    %1105 = vmatpush1.msra.mxu0 %v276
    %1106 = vmatprep.subr.mxu0 0.0
    %1107 = vmatpush1.msra.mxu0 %v277
    %1108 = vmatprep.subr.mxu0 0.0
    %1109 = vmatpush1.msra.mxu0 %v278
    %1110 = vmatprep.subr.mxu0 0.0
    %1111 = vmatpush1.msra.mxu0 %v279
    %1112 = vmatprep.subr.mxu0 0.0
    %1113 = vmatpush1.msra.mxu0 %v280
    %1114 = vmatprep.subr.mxu0 0.0
    %1115 = vmatpush1.msra.mxu0 %v281
    %1116 = vmatprep.subr.mxu0 0.0
    %1117 = vmatpush1.msra.mxu0 %v282
    %1118 = vmatprep.subr.mxu0 0.0
    %1119 = vmatpush1.msra.mxu0 %v283
    %1120 = vmatprep.subr.mxu0 0.0
    %1121 = vmatpush1.msra.mxu0 %v284
    %1122 = vmatprep.subr.mxu0 0.0
    %1123 = vmatpush1.msra.mxu0 %v285
    %1124 = vmatprep.subr.mxu0 0.0
    %1125 = vmatpush1.msra.mxu0 %v286
    %1126 = vmatprep.subr.mxu0 0.0
    %1127 = vmatpush1.msra.mxu0 %v287
    %1128 = vmatprep.mubr.f32.mxu0 %v505
    %1129 = vmatmul.mubr.f32.gmra.mrb[0].mxu0 %v503
    %v1130 = vpop.f32.mrb[0].mxu0
    %v1131 = vadd.f32 %v1061, %v1130
    %v1132 = vpop.f32.mrb[0].mxu0
    %1133 = vdwg.mxu0
    %1134 = vmatprep.subr.mxu0 0.0
    %1135 = vmatpush1.msra.mxu0 %v288
    %1136 = vmatprep.subr.mxu0 0.0
    %1137 = vmatpush1.msra.mxu0 %v289
    %1138 = vmatprep.subr.mxu0 0.0
    %1139 = vmatpush1.msra.mxu0 %v290
    %1140 = vmatprep.subr.mxu0 0.0
    %1141 = vmatpush1.msra.mxu0 %v291
    %1142 = vmatprep.subr.mxu0 0.0
    %1143 = vmatpush1.msra.mxu0 %v292
    %1144 = vmatprep.subr.mxu0 0.0
    %1145 = vmatpush1.msra.mxu0 %v293
    %1146 = vmatprep.subr.mxu0 0.0
    %1147 = vmatpush1.msra.mxu0 %v294
    %1148 = vmatprep.subr.mxu0 0.0
    %1149 = vmatpush1.msra.mxu0 %v295
    %1150 = vmatprep.subr.mxu0 0.0
    %1151 = vmatpush1.msra.mxu0 %v296
    %1152 = vmatprep.subr.mxu0 0.0
    %1153 = vmatpush1.msra.mxu0 %v297
    %1154 = vmatprep.subr.mxu0 0.0
    %1155 = vmatpush1.msra.mxu0 %v298
    %1156 = vmatprep.subr.mxu0 0.0
    %1157 = vmatpush1.msra.mxu0 %v299
    %1158 = vmatprep.subr.mxu0 0.0
    %1159 = vmatpush1.msra.mxu0 %v300
    %1160 = vmatprep.subr.mxu0 0.0
    %1161 = vmatpush1.msra.mxu0 %v301
    %1162 = vmatprep.subr.mxu0 0.0
    %1163 = vmatpush1.msra.mxu0 %v302
    %1164 = vmatprep.subr.mxu0 0.0
    %1165 = vmatpush1.msra.mxu0 %v303
    %1166 = vmatprep.subr.mxu0 0.0
    %1167 = vmatpush1.msra.mxu0 %v304
    %1168 = vmatprep.subr.mxu0 0.0
    %1169 = vmatpush1.msra.mxu0 %v305
    %1170 = vmatprep.subr.mxu0 0.0
    %1171 = vmatpush1.msra.mxu0 %v306
    %1172 = vmatprep.subr.mxu0 0.0
    %1173 = vmatpush1.msra.mxu0 %v307
    %1174 = vmatprep.subr.mxu0 0.0
    %1175 = vmatpush1.msra.mxu0 %v308
    %1176 = vmatprep.subr.mxu0 0.0
    %1177 = vmatpush1.msra.mxu0 %v309
    %1178 = vmatprep.subr.mxu0 0.0
    %1179 = vmatpush1.msra.mxu0 %v310
    %1180 = vmatprep.subr.mxu0 0.0
    %1181 = vmatpush1.msra.mxu0 %v311
    %1182 = vmatprep.subr.mxu0 0.0
    %1183 = vmatpush1.msra.mxu0 %v312
    %1184 = vmatprep.subr.mxu0 0.0
    %1185 = vmatpush1.msra.mxu0 %v313
    %1186 = vmatprep.subr.mxu0 0.0
    %1187 = vmatpush1.msra.mxu0 %v314
    %1188 = vmatprep.subr.mxu0 0.0
    %1189 = vmatpush1.msra.mxu0 %v315
    %1190 = vmatprep.subr.mxu0 0.0
    %1191 = vmatpush1.msra.mxu0 %v316
    %1192 = vmatprep.subr.mxu0 0.0
    %1193 = vmatpush1.msra.mxu0 %v317
    %1194 = vmatprep.subr.mxu0 0.0
    %1195 = vmatpush1.msra.mxu0 %v318
    %1196 = vmatprep.subr.mxu0 0.0
    %1197 = vmatpush1.msra.mxu0 %v319
    %1198 = vmatprep.mubr.f32.mxu0 %v521
    %1199 = vmatmul.mubr.f32.gmra.mrb[0].mxu0 %v513
    %v1200 = vpop.f32.mrb[0].mxu0
    %v1201 = vadd.f32 %v1131, %v1200
    %v1202 = vpop.f32.mrb[0].mxu0
    %1203 = vdwg.mxu0
    %1204 = vmatprep.subr.mxu0 0.0
    %1205 = vmatpush1.msra.mxu0 %v320
    %1206 = vmatprep.subr.mxu0 0.0
    %1207 = vmatpush1.msra.mxu0 %v321
    %1208 = vmatprep.subr.mxu0 0.0
    %1209 = vmatpush1.msra.mxu0 %v322
    %1210 = vmatprep.subr.mxu0 0.0
    %1211 = vmatpush1.msra.mxu0 %v323
    %1212 = vmatprep.subr.mxu0 0.0
    %1213 = vmatpush1.msra.mxu0 %v324
    %1214 = vmatprep.subr.mxu0 0.0
    %1215 = vmatpush1.msra.mxu0 %v325
    %1216 = vmatprep.subr.mxu0 0.0
    %1217 = vmatpush1.msra.mxu0 %v326
    %1218 = vmatprep.subr.mxu0 0.0
    %1219 = vmatpush1.msra.mxu0 %v327
    %1220 = vmatprep.subr.mxu0 0.0
    %1221 = vmatpush1.msra.mxu0 %v328
    %1222 = vmatprep.subr.mxu0 0.0
    %1223 = vmatpush1.msra.mxu0 %v329
    %1224 = vmatprep.subr.mxu0 0.0
    %1225 = vmatpush1.msra.mxu0 %v330
    %1226 = vmatprep.subr.mxu0 0.0
    %1227 = vmatpush1.msra.mxu0 %v331
    %1228 = vmatprep.subr.mxu0 0.0
    %1229 = vmatpush1.msra.mxu0 %v332
    %1230 = vmatprep.subr.mxu0 0.0
    %1231 = vmatpush1.msra.mxu0 %v333
    %1232 = vmatprep.subr.mxu0 0.0
    %1233 = vmatpush1.msra.mxu0 %v334
    %1234 = vmatprep.subr.mxu0 0.0
    %1235 = vmatpush1.msra.mxu0 %v335
    %1236 = vmatprep.subr.mxu0 0.0
    %1237 = vmatpush1.msra.mxu0 %v336
    %1238 = vmatprep.subr.mxu0 0.0
    %1239 = vmatpush1.msra.mxu0 %v337
    %1240 = vmatprep.subr.mxu0 0.0
    %1241 = vmatpush1.msra.mxu0 %v338
    %1242 = vmatprep.subr.mxu0 0.0
    %1243 = vmatpush1.msra.mxu0 %v339
    %1244 = vmatprep.subr.mxu0 0.0
    %1245 = vmatpush1.msra.mxu0 %v340
    %1246 = vmatprep.subr.mxu0 0.0
    %1247 = vmatpush1.msra.mxu0 %v341
    %1248 = vmatprep.subr.mxu0 0.0
    %1249 = vmatpush1.msra.mxu0 %v342
    %1250 = vmatprep.subr.mxu0 0.0
    %1251 = vmatpush1.msra.mxu0 %v343
    %1252 = vmatprep.subr.mxu0 0.0
    %1253 = vmatpush1.msra.mxu0 %v344
    %1254 = vmatprep.subr.mxu0 0.0
    %1255 = vmatpush1.msra.mxu0 %v345
    %1256 = vmatprep.subr.mxu0 0.0
    %1257 = vmatpush1.msra.mxu0 %v346
    %1258 = vmatprep.subr.mxu0 0.0
    %1259 = vmatpush1.msra.mxu0 %v347
    %1260 = vmatprep.subr.mxu0 0.0
    %1261 = vmatpush1.msra.mxu0 %v348
    %1262 = vmatprep.subr.mxu0 0.0
    %1263 = vmatpush1.msra.mxu0 %v349
    %1264 = vmatprep.subr.mxu0 0.0
    %1265 = vmatpush1.msra.mxu0 %v350
    %1266 = vmatprep.subr.mxu0 0.0
    %1267 = vmatpush1.msra.mxu0 %v351
    %1268 = vmatprep.mubr.f32.mxu0 %v522
    %1269 = vmatmul.mubr.f32.gmra.mrb[0].mxu0 %v520
    %v1270 = vpop.f32.mrb[0].mxu0
    %v1271 = vadd.f32 %v1201, %v1270
    %v1272 = vpop.f32.mrb[0].mxu0
    %1273 = vdwg.mxu0
    %1274 = vmatprep.subr.mxu0 0.0
    %1275 = vmatpush1.msra.mxu0 %v352
    %1276 = vmatprep.subr.mxu0 0.0
    %1277 = vmatpush1.msra.mxu0 %v353
    %1278 = vmatprep.subr.mxu0 0.0
    %1279 = vmatpush1.msra.mxu0 %v354
    %1280 = vmatprep.subr.mxu0 0.0
    %1281 = vmatpush1.msra.mxu0 %v355
    %1282 = vmatprep.subr.mxu0 0.0
    %1283 = vmatpush1.msra.mxu0 %v356
    %1284 = vmatprep.subr.mxu0 0.0
    %1285 = vmatpush1.msra.mxu0 %v357
    %1286 = vmatprep.subr.mxu0 0.0
    %1287 = vmatpush1.msra.mxu0 %v358
    %1288 = vmatprep.subr.mxu0 0.0
    %1289 = vmatpush1.msra.mxu0 %v359
    %1290 = vmatprep.subr.mxu0 0.0
    %1291 = vmatpush1.msra.mxu0 %v360
    %1292 = vmatprep.subr.mxu0 0.0
    %1293 = vmatpush1.msra.mxu0 %v361
    %1294 = vmatprep.subr.mxu0 0.0
    %1295 = vmatpush1.msra.mxu0 %v362
    %1296 = vmatprep.subr.mxu0 0.0
    %1297 = vmatpush1.msra.mxu0 %v363
    %1298 = vmatprep.subr.mxu0 0.0
    %1299 = vmatpush1.msra.mxu0 %v364
    %1300 = vmatprep.subr.mxu0 0.0
    %1301 = vmatpush1.msra.mxu0 %v365
    %1302 = vmatprep.subr.mxu0 0.0
    %1303 = vmatpush1.msra.mxu0 %v366
    %1304 = vmatprep.subr.mxu0 0.0
    %1305 = vmatpush1.msra.mxu0 %v367
    %1306 = vmatprep.subr.mxu0 0.0
    %1307 = vmatpush1.msra.mxu0 %v368
    %1308 = vmatprep.subr.mxu0 0.0
    %1309 = vmatpush1.msra.mxu0 %v369
    %1310 = vmatprep.subr.mxu0 0.0
    %1311 = vmatpush1.msra.mxu0 %v370
    %1312 = vmatprep.subr.mxu0 0.0
    %1313 = vmatpush1.msra.mxu0 %v371
    %1314 = vmatprep.subr.mxu0 0.0
    %1315 = vmatpush1.msra.mxu0 %v372
    %1316 = vmatprep.subr.mxu0 0.0
    %1317 = vmatpush1.msra.mxu0 %v373
    %1318 = vmatprep.subr.mxu0 0.0
    %1319 = vmatpush1.msra.mxu0 %v374
    %1320 = vmatprep.subr.mxu0 0.0
    %1321 = vmatpush1.msra.mxu0 %v375
    %1322 = vmatprep.subr.mxu0 0.0
    %1323 = vmatpush1.msra.mxu0 %v376
    %1324 = vmatprep.subr.mxu0 0.0
    %1325 = vmatpush1.msra.mxu0 %v377
    %1326 = vmatprep.subr.mxu0 0.0
    %1327 = vmatpush1.msra.mxu0 %v378
    %1328 = vmatprep.subr.mxu0 0.0
    %1329 = vmatpush1.msra.mxu0 %v379
    %1330 = vmatprep.subr.mxu0 0.0
    %1331 = vmatpush1.msra.mxu0 %v380
    %1332 = vmatprep.subr.mxu0 0.0
    %1333 = vmatpush1.msra.mxu0 %v381
    %1334 = vmatprep.subr.mxu0 0.0
    %1335 = vmatpush1.msra.mxu0 %v382
    %1336 = vmatprep.subr.mxu0 0.0
    %1337 = vmatpush1.msra.mxu0 %v383
    %1338 = vmatprep.mubr.f32.mxu0 %v538
    %1339 = vmatmul.mubr.f32.gmra.mrb[0].mxu0 %v530
    %v1340 = vpop.f32.mrb[0].mxu0
    %v1341 = vadd.f32 %v1271, %v1340
    %v1342 = vpop.f32.mrb[0].mxu0
    %1343 = vdwg.mxu0
    %1344 = vmatprep.subr.mxu0 0.0
    %1345 = vmatpush1.msra.mxu0 %v384
    %1346 = vmatprep.subr.mxu0 0.0
    %1347 = vmatpush1.msra.mxu0 %v385
    %1348 = vmatprep.subr.mxu0 0.0
    %1349 = vmatpush1.msra.mxu0 %v386
    %1350 = vmatprep.subr.mxu0 0.0
    %1351 = vmatpush1.msra.mxu0 %v387
    %1352 = vmatprep.subr.mxu0 0.0
    %1353 = vmatpush1.msra.mxu0 %v388
    %1354 = vmatprep.subr.mxu0 0.0
    %1355 = vmatpush1.msra.mxu0 %v389
    %1356 = vmatprep.subr.mxu0 0.0
    %1357 = vmatpush1.msra.mxu0 %v390
    %1358 = vmatprep.subr.mxu0 0.0
    %1359 = vmatpush1.msra.mxu0 %v391
    %1360 = vmatprep.subr.mxu0 0.0
    %1361 = vmatpush1.msra.mxu0 %v392
    %1362 = vmatprep.subr.mxu0 0.0
    %1363 = vmatpush1.msra.mxu0 %v393
    %1364 = vmatprep.subr.mxu0 0.0
    %1365 = vmatpush1.msra.mxu0 %v394
    %1366 = vmatprep.subr.mxu0 0.0
    %1367 = vmatpush1.msra.mxu0 %v395
    %1368 = vmatprep.subr.mxu0 0.0
    %1369 = vmatpush1.msra.mxu0 %v396
    %1370 = vmatprep.subr.mxu0 0.0
    %1371 = vmatpush1.msra.mxu0 %v397
    %1372 = vmatprep.subr.mxu0 0.0
    %1373 = vmatpush1.msra.mxu0 %v398
    %1374 = vmatprep.subr.mxu0 0.0
    %1375 = vmatpush1.msra.mxu0 %v399
    %1376 = vmatprep.subr.mxu0 0.0
    %1377 = vmatpush1.msra.mxu0 %v400
    %1378 = vmatprep.subr.mxu0 0.0
    %1379 = vmatpush1.msra.mxu0 %v401
    %1380 = vmatprep.subr.mxu0 0.0
    %1381 = vmatpush1.msra.mxu0 %v402
    %1382 = vmatprep.subr.mxu0 0.0
    %1383 = vmatpush1.msra.mxu0 %v403
    %1384 = vmatprep.subr.mxu0 0.0
    %1385 = vmatpush1.msra.mxu0 %v404
    %1386 = vmatprep.subr.mxu0 0.0
    %1387 = vmatpush1.msra.mxu0 %v405
    %1388 = vmatprep.subr.mxu0 0.0
    %1389 = vmatpush1.msra.mxu0 %v406
    %1390 = vmatprep.subr.mxu0 0.0
    %1391 = vmatpush1.msra.mxu0 %v407
    %1392 = vmatprep.subr.mxu0 0.0
    %1393 = vmatpush1.msra.mxu0 %v408
    %1394 = vmatprep.subr.mxu0 0.0
    %1395 = vmatpush1.msra.mxu0 %v409
    %1396 = vmatprep.subr.mxu0 0.0
    %1397 = vmatpush1.msra.mxu0 %v410
    %1398 = vmatprep.subr.mxu0 0.0
    %1399 = vmatpush1.msra.mxu0 %v411
    %1400 = vmatprep.subr.mxu0 0.0
    %1401 = vmatpush1.msra.mxu0 %v412
    %1402 = vmatprep.subr.mxu0 0.0
    %1403 = vmatpush1.msra.mxu0 %v413
    %1404 = vmatprep.subr.mxu0 0.0
    %1405 = vmatpush1.msra.mxu0 %v414
    %1406 = vmatprep.subr.mxu0 0.0
    %1407 = vmatpush1.msra.mxu0 %v415
    %1408 = vmatprep.mubr.f32.mxu0 %v539
    %1409 = vmatmul.mubr.f32.gmra.mrb[0].mxu0 %v537
    %v1410 = vpop.f32.mrb[0].mxu0
    %v1411 = vadd.f32 %v1341, %v1410
    %v1412 = vpop.f32.mrb[0].mxu0
    %1413 = vdwg.mxu0
    %1414 = vmatprep.subr.mxu0 0.0
    %1415 = vmatpush1.msra.mxu0 %v416
    %1416 = vmatprep.subr.mxu0 0.0
    %1417 = vmatpush1.msra.mxu0 %v417
    %1418 = vmatprep.subr.mxu0 0.0
    %1419 = vmatpush1.msra.mxu0 %v418
    %1420 = vmatprep.subr.mxu0 0.0
    %1421 = vmatpush1.msra.mxu0 %v419
    %1422 = vmatprep.subr.mxu0 0.0
    %1423 = vmatpush1.msra.mxu0 %v420
    %1424 = vmatprep.subr.mxu0 0.0
    %1425 = vmatpush1.msra.mxu0 %v421
    %1426 = vmatprep.subr.mxu0 0.0
    %1427 = vmatpush1.msra.mxu0 %v422
    %1428 = vmatprep.subr.mxu0 0.0
    %1429 = vmatpush1.msra.mxu0 %v423
    %1430 = vmatprep.subr.mxu0 0.0
    %1431 = vmatpush1.msra.mxu0 0.0
    %1432 = vmatprep.subr.mxu0 0.0
    %1433 = vmatpush1.msra.mxu0 0.0
    %1434 = vmatprep.subr.mxu0 0.0
    %1435 = vmatpush1.msra.mxu0 0.0
    %1436 = vmatprep.subr.mxu0 0.0
    %1437 = vmatpush1.msra.mxu0 0.0
    %1438 = vmatprep.subr.mxu0 0.0
    %1439 = vmatpush1.msra.mxu0 0.0
    %1440 = vmatprep.subr.mxu0 0.0
    %1441 = vmatpush1.msra.mxu0 0.0
    %1442 = vmatprep.subr.mxu0 0.0
    %1443 = vmatpush1.msra.mxu0 0.0
    %1444 = vmatprep.subr.mxu0 0.0
    %1445 = vmatpush1.msra.mxu0 0.0
    %1446 = vmatprep.subr.mxu0 0.0
    %1447 = vmatpush1.msra.mxu0 0.0
    %1448 = vmatprep.subr.mxu0 0.0
    %1449 = vmatpush1.msra.mxu0 0.0
    %1450 = vmatprep.subr.mxu0 0.0
    %1451 = vmatpush1.msra.mxu0 0.0
    %1452 = vmatprep.subr.mxu0 0.0
    %1453 = vmatpush1.msra.mxu0 0.0
    %1454 = vmatprep.subr.mxu0 0.0
    %1455 = vmatpush1.msra.mxu0 0.0
    %1456 = vmatprep.subr.mxu0 0.0
    %1457 = vmatpush1.msra.mxu0 0.0
    %1458 = vmatprep.subr.mxu0 0.0
    %1459 = vmatpush1.msra.mxu0 0.0
    %1460 = vmatprep.subr.mxu0 0.0
    %1461 = vmatpush1.msra.mxu0 0.0
    %1462 = vmatprep.subr.mxu0 0.0
    %1463 = vmatpush1.msra.mxu0 0.0
    %1464 = vmatprep.subr.mxu0 0.0
    %1465 = vmatpush1.msra.mxu0 0.0
    %1466 = vmatprep.subr.mxu0 0.0
    %1467 = vmatpush1.msra.mxu0 0.0
    %1468 = vmatprep.subr.mxu0 0.0
    %1469 = vmatpush1.msra.mxu0 0.0
    %1470 = vmatprep.subr.mxu0 0.0
    %1471 = vmatpush1.msra.mxu0 0.0
    %1472 = vmatprep.subr.mxu0 0.0
    %1473 = vmatpush1.msra.mxu0 0.0
    %1474 = vmatprep.subr.mxu0 0.0
    %1475 = vmatpush1.msra.mxu0 0.0
    %1476 = vmatprep.subr.mxu0 0.0
    %1477 = vmatpush1.msra.mxu0 0.0
    %1478 = vmatprep.mubr.f32.mxu0 0.0
    %1479 = vmatmul.mubr.f32.gmra.mrb[0].mxu0 %v572
    %v1480 = vpop.f32.mrb[0].mxu0
    %v1481 = vadd.f32 %v1411, %v1480
    %v1482 = vpop.f32.mrb[0].mxu0
    %1483 = vdwg.mxu0
    %v1484 = vmax.f32 %v1481, 0.0
    %v1485 = vld [vmem:[%s4] sm:$0xff]
    %v1486 = vld [vmem:[%s4 + $0x8] sm:$0xff]
    %v1487 = vld [vmem:[%s4 + $0x10] sm:$0xff]
    %v1488 = vld [vmem:[%s4 + $0x18] sm:$0xff]
    %v1489 = vld [vmem:[%s4 + $0x20] sm:$0xff]
    %v1490 = vld [vmem:[%s4 + $0x28] sm:$0xff]
    %v1491 = vld [vmem:[%s4 + $0x30] sm:$0xff]
    %v1492 = vld [vmem:[%s4 + $0x38] sm:$0xff]
    %v1493 = vld [vmem:[%s5] sm:$0x1]
    %v1495 = vlaneseq
    %v1496 = vshrl.u32 %v1495, 7
    %v1497 = vsub.s32 0, %v1496
    %v1498 = vrot.slane %v1493, %v1497
    %v1501 = vsel %vm571, %v1484, 0
    %1503 = vmatprep.subr.mxu0 0.0
    %1504 = vmatpush1.msra.mxu0 %v1485
    %1505 = vmatprep.subr.mxu0 0.0
    %1506 = vmatpush1.msra.mxu0 %v1486
    %1507 = vmatprep.subr.mxu0 0.0
    %1508 = vmatpush1.msra.mxu0 %v1487
    %1509 = vmatprep.subr.mxu0 0.0
    %1510 = vmatpush1.msra.mxu0 %v1488
    %1511 = vmatprep.subr.mxu0 0.0
    %1512 = vmatpush1.msra.mxu0 %v1489
    %1513 = vmatprep.subr.mxu0 0.0
    %1514 = vmatpush1.msra.mxu0 %v1490
    %1515 = vmatprep.subr.mxu0 0.0
    %1516 = vmatpush1.msra.mxu0 %v1491
    %1517 = vmatprep.subr.mxu0 0.0
    %1518 = vmatpush1.msra.mxu0 %v1492
    %1519 = vmatprep.subr.mxu0 0.0
    %1520 = vmatpush1.msra.mxu0 0.0
    %1521 = vmatprep.subr.mxu0 0.0
    %1522 = vmatpush1.msra.mxu0 0.0
    %1523 = vmatprep.subr.mxu0 0.0
    %1524 = vmatpush1.msra.mxu0 0.0
    %1525 = vmatprep.subr.mxu0 0.0
    %1526 = vmatpush1.msra.mxu0 0.0
    %1527 = vmatprep.subr.mxu0 0.0
    %1528 = vmatpush1.msra.mxu0 0.0
    %1529 = vmatprep.subr.mxu0 0.0
    %1530 = vmatpush1.msra.mxu0 0.0
    %1531 = vmatprep.subr.mxu0 0.0
    %1532 = vmatpush1.msra.mxu0 0.0
    %1533 = vmatprep.subr.mxu0 0.0
    %1534 = vmatpush1.msra.mxu0 0.0
    %1535 = vmatprep.subr.mxu0 0.0
    %1536 = vmatpush1.msra.mxu0 0.0
    %1537 = vmatprep.subr.mxu0 0.0
    %1538 = vmatpush1.msra.mxu0 0.0
    %1539 = vmatprep.subr.mxu0 0.0
    %1540 = vmatpush1.msra.mxu0 0.0
    %1541 = vmatprep.subr.mxu0 0.0
    %1542 = vmatpush1.msra.mxu0 0.0
    %1543 = vmatprep.subr.mxu0 0.0
    %1544 = vmatpush1.msra.mxu0 0.0
    %1545 = vmatprep.subr.mxu0 0.0
    %1546 = vmatpush1.msra.mxu0 0.0
    %1547 = vmatprep.subr.mxu0 0.0
    %1548 = vmatpush1.msra.mxu0 0.0
    %1549 = vmatprep.subr.mxu0 0.0
    %1550 = vmatpush1.msra.mxu0 0.0
    %1551 = vmatprep.subr.mxu0 0.0
    %1552 = vmatpush1.msra.mxu0 0.0
    %1553 = vmatprep.subr.mxu0 0.0
    %1554 = vmatpush1.msra.mxu0 0.0
    %1555 = vmatprep.subr.mxu0 0.0
    %1556 = vmatpush1.msra.mxu0 0.0
    %1557 = vmatprep.subr.mxu0 0.0
    %1558 = vmatpush1.msra.mxu0 0.0
    %1559 = vmatprep.subr.mxu0 0.0
    %1560 = vmatpush1.msra.mxu0 0.0
    %1561 = vmatprep.subr.mxu0 0.0
    %1562 = vmatpush1.msra.mxu0 0.0
    %1563 = vmatprep.subr.mxu0 0.0
    %1564 = vmatpush1.msra.mxu0 0.0
    %1565 = vmatprep.subr.mxu0 0.0
    %1566 = vmatpush1.msra.mxu0 0.0
    %1567 = vmatprep.mubr.f32.mxu0 0.0
    %1568 = vmatmul.mubr.f32.gmra.mrb[0].mxu0 %v1501
    %v1569 = vpop.f32.mrb[0].mxu0
    %v1570 = vadd.f32 %v1498, %v1569
    %v1571 = vpop.f32.mrb[0].mxu0
    %1572 = vdwg.mxu0
    %vm1573 = vcmask 74752
    %v1574 = vsel %vm1573, %v1570, -inf
    %1575 = vmax.xlane.f32.xlu0 %v1574
    %v1576 = vpop.xlane.xlu0 %1575
    %v1577 = vsub.f32 %v1570, %v1576
    %v1578 = vmul.f32 %v1577, 1.442695
    %v1579 = vpow.pop %v1578
    %v1580 = vsel %vm1573, %v1579, 0.0
    %1581 = vadd.xlane.f32.xlu0 %v1580
    %v1582 = vpop.xlane.xlu0 %1581
    %v1583 = vlog2.pop %v1582
    %v1584 = vmul.f32 %v1583, 0.6931472
    %v1585 = vsub.f32 %v1577, %v1584
    %1586 = vst.msk [vmem:[#allocation3] sm:$0x3] %vm1573, %v1585
    // Predicated region
    $region26: #{fwd.5} parent=1 // pred_check
      _
    $region27: #{fwd.5} parent=1 // pred_check_branch
      %1588 = sbr.rel (0) target = $region29
    $region28: #{fwd.5} parent=1 // pred_region
      %s1590 = ssub.s32 32, 32
      %1591 = vsyncadd [#allocation4], %s1590
      %s1593 = sshll.u32 [#allocation3], 4
      %s1594 = int_to_ptr.vmem [resolvable:$true] %s1593
      %1596 = dma.vmem_to_hbm [thread:$0]  %s1594, 32, %s6, [#allocation4]
    $region29: #{fwd.5} parent=1 // pred_fallthru
      _
    // Predicated region
    $region30: #{fwd.5} parent=1 // pred_check
      _
    $region31: #{fwd.5} parent=1 // pred_check_branch
      %1598 = sbr.rel (0) target = $region33
    $region32: #{fwd.5} parent=1 // pred_region
      %1599 = dma.done [#allocation4], 32
    $region33: #{fwd.5} parent=1 // pred_fallthru
      _
    %1600 = vsyncpa [#allocation4], 1

</llo_original>
